<compile_context>
chip_gen: v6e
topology: v6e:2x2x1
jax: 0.10.0
libtpu: 0.0.40
codegen_flags: <defaults>
</compile_context>

<pallas_src>
import functools
import math

import jax
import jax.numpy as jnp
from jax.experimental import pallas as pl
from jax.experimental.pallas import tpu as pltpu


# Fixed order in which fused parameters are passed to the kernel.
PARAM_ORDER = (
    "enc_embed", "dec_embed",
    "enc_qkv", "enc_o", "enc_ff1", "enc_ff2",
    "dec_sqkv", "dec_so", "dec_cq", "dec_ckv", "dec_co", "dec_ff1", "dec_ff2",
    "trend_proj", "out_proj",
)


# ----------------------------------------------------------------------------
# Fused forward kernel: one grid step per batch element, everything in VMEM.
# ----------------------------------------------------------------------------
def _forward_kernel(x_ref, *refs, window, label_len, pred_len):
    o_ref = refs[-1]
    rest = refs[:-1]
    p = {}
    for i, name in enumerate(PARAM_ORDER):
        p[name + "_w"] = rest[2 * i]
        p[name + "_b"] = rest[2 * i + 1]

    x = x_ref[0]                                  # (S, Din)
    S, Din = x.shape
    D = p["enc_embed_w"].shape[1]                 # d_model

    # ---- helpers (all operate on 2-D (rows, features) slabs in VMEM) ----
    def lin(h, name, relu=False):
        y = jnp.dot(h, p[name + "_w"][...], preferred_element_type=jnp.float32)
        y = y + p[name + "_b"][...]               # (T, N) + (1, N)
        if relu:
            y = jnp.maximum(y, 0.0)
        return y

    def attn(q, k, v):
        scale = 1.0 / float(q.shape[-1]) ** 0.5
        # contract last dims directly (no k.T relayout through the XLU)
        s = jax.lax.dot_general(q, k, (((1,), (1,)), ((), ())),
                                preferred_element_type=jnp.float32) * scale
        s = s - jnp.max(s, axis=-1, keepdims=True)
        e = jnp.exp(s)
        inv = pl.reciprocal(jnp.sum(e, axis=-1, keepdims=True), approx=True)
        return jnp.dot(e * inv, v, preferred_element_type=jnp.float32)

    def decomp(h):
        # moving-average trend (replicate padding, odd window) + seasonal residual
        T = h.shape[0]
        pad = (window - 1) // 2
        row = jax.lax.broadcasted_iota(jnp.int32, h.shape, 0)
        first = jnp.broadcast_to(h[0:1, :], h.shape)
        last = jnp.broadcast_to(h[T - 1:T, :], h.shape)
        acc = h
        for off in range(1, pad + 1):             # static, tiny unroll
            prev = pltpu.roll(h, shift=off, axis=0)       # row t <- h[t-off]
            nxt = pltpu.roll(h, shift=T - off, axis=0)    # row t <- h[t+off]
            acc = acc + jnp.where(row < off, first, prev)
            acc = acc + jnp.where(row >= T - off, last, nxt)
        trend = acc * (1.0 / window)
        return h - trend, trend

    # ---- mean scaling (AutoformerMeanScaler with all-ones observed mask) ----
    scale = jnp.maximum(jnp.mean(jnp.abs(x), axis=0, keepdims=True), 1e-10)   # (1, Din)
    xs = x / scale

    # ---- encoder layer ----
    enc = lin(xs, "enc_embed")                                  # (S, D)
    qkv = lin(enc, "enc_qkv")                                   # fused QKV, (S, 3D)
    q, k, v = qkv[:, 0:D], qkv[:, D:2 * D], qkv[:, 2 * D:3 * D]
    a = lin(attn(q, k, v), "enc_o")
    enc, _ = decomp(enc + a)
    ff = lin(lin(enc, "enc_ff1", relu=True), "enc_ff2")
    enc, _ = decomp(enc + ff)

    # ---- decoder seasonal / trend init ----
    seas_x, trend_x = decomp(xs)
    mean_x = jnp.mean(xs, axis=0, keepdims=True)                # (1, Din)
    seasonal_init = jnp.concatenate(
        [seas_x[S - label_len:, :], jnp.zeros((pred_len, Din), jnp.float32)], axis=0)
    trend_init = jnp.concatenate(
        [trend_x[S - label_len:, :], jnp.broadcast_to(mean_x, (pred_len, Din))], axis=0)
    Tdec = label_len + pred_len

    # ---- decoder layer ----
    dec = lin(seasonal_init, "dec_embed")                       # (Tdec, D)
    sqkv = lin(dec, "dec_sqkv")                                 # fused self-attn QKV
    sq, sk, sv = sqkv[:, 0:D], sqkv[:, D:2 * D], sqkv[:, 2 * D:3 * D]
    sa = lin(attn(sq, sk, sv), "dec_so")
    dec, t1 = decomp(dec + sa)

    cq = lin(dec, "dec_cq")
    ckv = lin(enc, "dec_ckv")                                   # fused cross-attn K/V
    ck, cv = ckv[:, 0:D], ckv[:, D:2 * D]
    ca = lin(attn(cq, ck, cv), "dec_co")
    dec, t2 = decomp(dec + ca)

    ff = lin(lin(dec, "dec_ff1", relu=True), "dec_ff2")
    dec, t3 = decomp(dec + ff)

    # trend accumulation (input_dim == output_dim so trend_init is already in output space)
    trend = trend_init + lin(t1 + t2 + t3, "trend_proj")
    seasonal_out = lin(dec, "out_proj")

    pred = (seasonal_out + trend)[Tdec - pred_len:, :] * scale  # descale
    o_ref[0] = pred.astype(o_ref.dtype)


# ----------------------------------------------------------------------------
# Parameters (deterministic synthetic init, Q/K/V already fused)
# ----------------------------------------------------------------------------
def init_params(key, input_dim, output_dim, d_model, d_ff):
    shapes = {
        "enc_embed": (input_dim, d_model),
        "dec_embed": (input_dim, d_model),
        "enc_qkv": (d_model, 3 * d_model),
        "enc_o": (d_model, d_model),
        "enc_ff1": (d_model, d_ff),
        "enc_ff2": (d_ff, d_model),
        "dec_sqkv": (d_model, 3 * d_model),
        "dec_so": (d_model, d_model),
        "dec_cq": (d_model, d_model),
        "dec_ckv": (d_model, 2 * d_model),
        "dec_co": (d_model, d_model),
        "dec_ff1": (d_model, d_ff),
        "dec_ff2": (d_ff, d_model),
        "trend_proj": (d_model, output_dim),
        "out_proj": (d_model, output_dim),
    }
    params = {}
    for name in PARAM_ORDER:
        fan_in, fan_out = shapes[name]
        key, sub = jax.random.split(key)
        params[name + "_w"] = (jax.random.normal(sub, (fan_in, fan_out), jnp.float32)
                               * (1.0 / float(fan_in) ** 0.5))
        params[name + "_b"] = jnp.zeros((1, fan_out), jnp.float32)  # lane-mapped bias
    return params


# ----------------------------------------------------------------------------
# Wrapper: one pallas_call for the whole forward pass
# ----------------------------------------------------------------------------
def autoformer_forward(params, x, *, pred_len, label_len, window=3):
    assert window % 2 == 1, "series decomposition requires an odd moving-average window"
    B, S, Din = x.shape
    out_dim = params["out_proj_w"].shape[1]
    assert Din == out_dim, "trend accumulation assumes input_dim == output_dim"

    args = [x]
    in_specs = [pl.BlockSpec((1, S, Din), lambda b: (b, 0, 0))]
    for name in PARAM_ORDER:
        for suffix in ("_w", "_b"):
            arr = params[name + suffix]
            args.append(arr)
            # full-array block, same tile every grid step -> loaded once, stays in VMEM
            in_specs.append(pl.BlockSpec(arr.shape, lambda b: (0, 0)))

    kernel = functools.partial(_forward_kernel, window=window,
                               label_len=label_len, pred_len=pred_len)
    return pl.pallas_call(
        kernel,
        out_shape=jax.ShapeDtypeStruct((B, pred_len, out_dim), jnp.float32),
        grid=(B,),
        in_specs=in_specs,
        out_specs=pl.BlockSpec((1, pred_len, out_dim), lambda b: (b, 0, 0)),
        compiler_params=pltpu.CompilerParams(
            dimension_semantics=("parallel",)),     # batch -> both TCs on v7x
    )(*args)


# ----------------------------------------------------------------------------
if __name__ == "__main__":
    B = 2
    seq_len, pred_len = 8, 4
    input_dim = output_dim = 4
    d_model, d_ff = 128, 128        # lane-dense feature dims (128-wide vregs / MXU)
    label_len = seq_len // 2

    x = jax.random.normal(jax.random.PRNGKey(0), (B, seq_len, input_dim), jnp.float32)
    params = init_params(jax.random.PRNGKey(42), input_dim, output_dim, d_model, d_ff)

    fwd = jax.jit(functools.partial(autoformer_forward,
                                    pred_len=pred_len, label_len=label_len))
    out = fwd(params, x)
    jax.block_until_ready(out)
    assert out.shape == (B, pred_len, output_dim), out.shape
    assert jnp.all(jnp.isfinite(out))
    print("KERNEL_OK")
</pallas_src>

<mosaic_0001>
module attributes {stable_mosaic.version = 11 : i64} {
  func.func @_forward_kernel(%arg0: i32, %arg1: memref<1x8x4xf32, #tpu.memory_space<vmem>>, %arg2: memref<4x128xf32, #tpu.memory_space<vmem>>, %arg3: memref<1x128xf32, #tpu.memory_space<vmem>>, %arg4: memref<4x128xf32, #tpu.memory_space<vmem>>, %arg5: memref<1x128xf32, #tpu.memory_space<vmem>>, %arg6: memref<128x384xf32, #tpu.memory_space<vmem>>, %arg7: memref<1x384xf32, #tpu.memory_space<vmem>>, %arg8: memref<128x128xf32, #tpu.memory_space<vmem>>, %arg9: memref<1x128xf32, #tpu.memory_space<vmem>>, %arg10: memref<128x128xf32, #tpu.memory_space<vmem>>, %arg11: memref<1x128xf32, #tpu.memory_space<vmem>>, %arg12: memref<128x128xf32, #tpu.memory_space<vmem>>, %arg13: memref<1x128xf32, #tpu.memory_space<vmem>>, %arg14: memref<128x384xf32, #tpu.memory_space<vmem>>, %arg15: memref<1x384xf32, #tpu.memory_space<vmem>>, %arg16: memref<128x128xf32, #tpu.memory_space<vmem>>, %arg17: memref<1x128xf32, #tpu.memory_space<vmem>>, %arg18: memref<128x128xf32, #tpu.memory_space<vmem>>, %arg19: memref<1x128xf32, #tpu.memory_space<vmem>>, %arg20: memref<128x256xf32, #tpu.memory_space<vmem>>, %arg21: memref<1x256xf32, #tpu.memory_space<vmem>>, %arg22: memref<128x128xf32, #tpu.memory_space<vmem>>, %arg23: memref<1x128xf32, #tpu.memory_space<vmem>>, %arg24: memref<128x128xf32, #tpu.memory_space<vmem>>, %arg25: memref<1x128xf32, #tpu.memory_space<vmem>>, %arg26: memref<128x128xf32, #tpu.memory_space<vmem>>, %arg27: memref<1x128xf32, #tpu.memory_space<vmem>>, %arg28: memref<128x4xf32, #tpu.memory_space<vmem>>, %arg29: memref<1x4xf32, #tpu.memory_space<vmem>>, %arg30: memref<128x4xf32, #tpu.memory_space<vmem>>, %arg31: memref<1x4xf32, #tpu.memory_space<vmem>>, %arg32: memref<1x4x4xf32, #tpu.memory_space<vmem>>) attributes {dimension_semantics = [#tpu.dimension_semantics<parallel>], iteration_bounds = array<i64: 2>, scalar_prefetch = 0 : i64, scratch_operands = 0 : i64, tpu.core_type = #tpu.core_type<tc>, window_params = [{transform_indices = @transform_0, window_bounds = array<i64: 1, 8, 4>}, {pipeline_mode = #tpu.pipeline_mode<synchronous>, transform_indices = @transform_1, window_bounds = array<i64: 4, 128>}, {pipeline_mode = #tpu.pipeline_mode<synchronous>, transform_indices = @transform_2, window_bounds = array<i64: 1, 128>}, {pipeline_mode = #tpu.pipeline_mode<synchronous>, transform_indices = @transform_3, window_bounds = array<i64: 4, 128>}, {pipeline_mode = #tpu.pipeline_mode<synchronous>, transform_indices = @transform_4, window_bounds = array<i64: 1, 128>}, {pipeline_mode = #tpu.pipeline_mode<synchronous>, transform_indices = @transform_5, window_bounds = array<i64: 128, 384>}, {pipeline_mode = #tpu.pipeline_mode<synchronous>, transform_indices = @transform_6, window_bounds = array<i64: 1, 384>}, {pipeline_mode = #tpu.pipeline_mode<synchronous>, transform_indices = @transform_7, window_bounds = array<i64: 128, 128>}, {pipeline_mode = #tpu.pipeline_mode<synchronous>, transform_indices = @transform_8, window_bounds = array<i64: 1, 128>}, {pipeline_mode = #tpu.pipeline_mode<synchronous>, transform_indices = @transform_9, window_bounds = array<i64: 128, 128>}, {pipeline_mode = #tpu.pipeline_mode<synchronous>, transform_indices = @transform_10, window_bounds = array<i64: 1, 128>}, {pipeline_mode = #tpu.pipeline_mode<synchronous>, transform_indices = @transform_11, window_bounds = array<i64: 128, 128>}, {pipeline_mode = #tpu.pipeline_mode<synchronous>, transform_indices = @transform_12, window_bounds = array<i64: 1, 128>}, {pipeline_mode = #tpu.pipeline_mode<synchronous>, transform_indices = @transform_13, window_bounds = array<i64: 128, 384>}, {pipeline_mode = #tpu.pipeline_mode<synchronous>, transform_indices = @transform_14, window_bounds = array<i64: 1, 384>}, {pipeline_mode = #tpu.pipeline_mode<synchronous>, transform_indices = @transform_15, window_bounds = array<i64: 128, 128>}, {pipeline_mode = #tpu.pipeline_mode<synchronous>, transform_indices = @transform_16, window_bounds = array<i64: 1, 128>}, {pipeline_mode = #tpu.pipeline_mode<synchronous>, transform_indices = @transform_17, window_bounds = array<i64: 128, 128>}, {pipeline_mode = #tpu.pipeline_mode<synchronous>, transform_indices = @transform_18, window_bounds = array<i64: 1, 128>}, {pipeline_mode = #tpu.pipeline_mode<synchronous>, transform_indices = @transform_19, window_bounds = array<i64: 128, 256>}, {pipeline_mode = #tpu.pipeline_mode<synchronous>, transform_indices = @transform_20, window_bounds = array<i64: 1, 256>}, {pipeline_mode = #tpu.pipeline_mode<synchronous>, transform_indices = @transform_21, window_bounds = array<i64: 128, 128>}, {pipeline_mode = #tpu.pipeline_mode<synchronous>, transform_indices = @transform_22, window_bounds = array<i64: 1, 128>}, {pipeline_mode = #tpu.pipeline_mode<synchronous>, transform_indices = @transform_23, window_bounds = array<i64: 128, 128>}, {pipeline_mode = #tpu.pipeline_mode<synchronous>, transform_indices = @transform_24, window_bounds = array<i64: 1, 128>}, {pipeline_mode = #tpu.pipeline_mode<synchronous>, transform_indices = @transform_25, window_bounds = array<i64: 128, 128>}, {pipeline_mode = #tpu.pipeline_mode<synchronous>, transform_indices = @transform_26, window_bounds = array<i64: 1, 128>}, {pipeline_mode = #tpu.pipeline_mode<synchronous>, transform_indices = @transform_27, window_bounds = array<i64: 128, 4>}, {pipeline_mode = #tpu.pipeline_mode<synchronous>, transform_indices = @transform_28, window_bounds = array<i64: 1, 4>}, {pipeline_mode = #tpu.pipeline_mode<synchronous>, transform_indices = @transform_29, window_bounds = array<i64: 128, 4>}, {pipeline_mode = #tpu.pipeline_mode<synchronous>, transform_indices = @transform_30, window_bounds = array<i64: 1, 4>}, {transform_indices = @transform_31, window_bounds = array<i64: 1, 4, 4>}]} {
    %c0 = arith.constant 0 : index
    %c0_0 = arith.constant 0 : index
    %c0_1 = arith.constant 0 : index
    %0 = vector.load %arg1[%c0, %c0_0, %c0_1] : memref<1x8x4xf32, #tpu.memory_space<vmem>>, vector<1x8x4xf32>
    %1 = vector.shape_cast %0 : vector<1x8x4xf32> to vector<8x4xf32>
    %2 = math.absf %1 : vector<8x4xf32>
    %cst = arith.constant dense<0.000000e+00> : vector<4xf32>
    %3 = vector.multi_reduction <add>, %2, %cst [0] : vector<8x4xf32> to vector<4xf32>
    %4 = vector.shape_cast %3 : vector<4xf32> to vector<1x4xf32>
    %cst_2 = arith.constant 8.000000e+00 : f32
    %5 = vector.broadcast %cst_2 : f32 to vector<1x4xf32>
    %6 = arith.divf %4, %5 : vector<1x4xf32>
    %cst_3 = arith.constant 1.000000e-10 : f32
    %7 = vector.broadcast %cst_3 : f32 to vector<1x4xf32>
    %8 = arith.maximumf %6, %7 : vector<1x4xf32>
    %9 = vector.broadcast %8 : vector<1x4xf32> to vector<8x4xf32>
    %10 = arith.divf %1, %9 : vector<8x4xf32>
    %c0_4 = arith.constant 0 : index
    %c0_5 = arith.constant 0 : index
    %11 = vector.load %arg2[%c0_4, %c0_5] : memref<4x128xf32, #tpu.memory_space<vmem>>, vector<4x128xf32>
    %cst_6 = arith.constant dense<0.000000e+00> : vector<8x128xf32>
    %12 = tpu.matmul %10, %11, %cst_6 {dimension_numbers = #tpu.dot_dimension_numbers<[1], [0], [0], [1], [0, 0, 1, 1], [], []>} : vector<8x4xf32>, vector<4x128xf32>, vector<8x128xf32> -> vector<8x128xf32>
    %c0_7 = arith.constant 0 : index
    %c0_8 = arith.constant 0 : index
    %13 = vector.load %arg3[%c0_7, %c0_8] : memref<1x128xf32, #tpu.memory_space<vmem>>, vector<1x128xf32>
    %14 = vector.broadcast %13 : vector<1x128xf32> to vector<8x128xf32>
    %15 = arith.addf %12, %14 : vector<8x128xf32>
    %c0_9 = arith.constant 0 : index
    %c0_10 = arith.constant 0 : index
    %16 = vector.load %arg6[%c0_9, %c0_10] : memref<128x384xf32, #tpu.memory_space<vmem>>, vector<128x384xf32>
    %cst_11 = arith.constant dense<0.000000e+00> : vector<8x384xf32>
    %17 = tpu.matmul %15, %16, %cst_11 {dimension_numbers = #tpu.dot_dimension_numbers<[1], [0], [0], [1], [0, 0, 1, 1], [], []>} : vector<8x128xf32>, vector<128x384xf32>, vector<8x384xf32> -> vector<8x384xf32>
    %c0_12 = arith.constant 0 : index
    %c0_13 = arith.constant 0 : index
    %18 = vector.load %arg7[%c0_12, %c0_13] : memref<1x384xf32, #tpu.memory_space<vmem>>, vector<1x384xf32>
    %19 = vector.broadcast %18 : vector<1x384xf32> to vector<8x384xf32>
    %20 = arith.addf %17, %19 : vector<8x384xf32>
    %21 = vector.extract_strided_slice %20 {offsets = [0, 0], sizes = [8, 128], strides = [1, 1]} : vector<8x384xf32> to vector<8x128xf32>
    %22 = vector.extract_strided_slice %20 {offsets = [0, 128], sizes = [8, 128], strides = [1, 1]} : vector<8x384xf32> to vector<8x128xf32>
    %23 = vector.extract_strided_slice %20 {offsets = [0, 256], sizes = [8, 128], strides = [1, 1]} : vector<8x384xf32> to vector<8x128xf32>
    %cst_14 = arith.constant dense<0.000000e+00> : vector<8x8xf32>
    %24 = tpu.matmul %21, %22, %cst_14 {dimension_numbers = #tpu.dot_dimension_numbers<[1], [1], [0], [0], [0, 0, 1, 0], [], []>} : vector<8x128xf32>, vector<8x128xf32>, vector<8x8xf32> -> vector<8x8xf32>
    %cst_15 = arith.constant 0.0883883461 : f32
    %25 = vector.broadcast %cst_15 : f32 to vector<8x8xf32>
    %26 = arith.mulf %24, %25 : vector<8x8xf32>
    %cst_16 = arith.constant dense<0xFF800000> : vector<8xf32>
    %27 = vector.multi_reduction <maximumf>, %26, %cst_16 [1] : vector<8x8xf32> to vector<8xf32>
    %28 = vector.shape_cast %27 : vector<8xf32> to vector<8x1xf32>
    %29 = vector.broadcast %28 : vector<8x1xf32> to vector<8x8xf32>
    %30 = arith.subf %26, %29 : vector<8x8xf32>
    %31 = math.exp %30 : vector<8x8xf32>
    %cst_17 = arith.constant dense<0.000000e+00> : vector<8xf32>
    %32 = vector.multi_reduction <add>, %31, %cst_17 [1] : vector<8x8xf32> to vector<8xf32>
    %33 = vector.shape_cast %32 : vector<8xf32> to vector<8x1xf32>
    %34 = tpu.reciprocal %33 {approx = true} : vector<8x1xf32> -> vector<8x1xf32>
    %35 = vector.broadcast %34 : vector<8x1xf32> to vector<8x8xf32>
    %36 = arith.mulf %31, %35 : vector<8x8xf32>
    %cst_18 = arith.constant dense<0.000000e+00> : vector<8x128xf32>
    %37 = tpu.matmul %36, %23, %cst_18 {dimension_numbers = #tpu.dot_dimension_numbers<[1], [0], [0], [1], [0, 0, 1, 1], [], []>} : vector<8x8xf32>, vector<8x128xf32>, vector<8x128xf32> -> vector<8x128xf32>
    %c0_19 = arith.constant 0 : index
    %c0_20 = arith.constant 0 : index
    %38 = vector.load %arg8[%c0_19, %c0_20] : memref<128x128xf32, #tpu.memory_space<vmem>>, vector<128x128xf32>
    %cst_21 = arith.constant dense<0.000000e+00> : vector<8x128xf32>
    %39 = tpu.matmul %37, %38, %cst_21 {dimension_numbers = #tpu.dot_dimension_numbers<[1], [0], [0], [1], [0, 0, 1, 1], [], []>} : vector<8x128xf32>, vector<128x128xf32>, vector<8x128xf32> -> vector<8x128xf32>
    %c0_22 = arith.constant 0 : index
    %c0_23 = arith.constant 0 : index
    %40 = vector.load %arg9[%c0_22, %c0_23] : memref<1x128xf32, #tpu.memory_space<vmem>>, vector<1x128xf32>
    %41 = vector.broadcast %40 : vector<1x128xf32> to vector<8x128xf32>
    %42 = arith.addf %39, %41 : vector<8x128xf32>
    %43 = arith.addf %15, %42 : vector<8x128xf32>
    %44 = tpu.iota {dimensions = array<i32: 0>} : vector<8x128xi32>
    %45 = vector.extract_strided_slice %43 {offsets = [0, 0], sizes = [1, 128], strides = [1, 1]} : vector<8x128xf32> to vector<1x128xf32>
    %46 = vector.shape_cast %45 : vector<1x128xf32> to vector<1x128xf32>
    %47 = vector.broadcast %46 : vector<1x128xf32> to vector<8x128xf32>
    %48 = vector.extract_strided_slice %43 {offsets = [7, 0], sizes = [1, 128], strides = [1, 1]} : vector<8x128xf32> to vector<1x128xf32>
    %49 = vector.shape_cast %48 : vector<1x128xf32> to vector<1x128xf32>
    %50 = vector.broadcast %49 : vector<1x128xf32> to vector<8x128xf32>
    %c1_i32 = arith.constant 1 : i32
    %51 = tpu.dynamic_rotate %43 by %c1_i32 dim 0 : vector<8x128xf32>, i32 -> vector<8x128xf32>
    %c7_i32 = arith.constant 7 : i32
    %52 = tpu.dynamic_rotate %43 by %c7_i32 dim 0 : vector<8x128xf32>, i32 -> vector<8x128xf32>
    %c1_i32_24 = arith.constant 1 : i32
    %53 = vector.broadcast %c1_i32_24 : i32 to vector<8x128xi32>
    %54 = arith.cmpi slt, %44, %53 : vector<8x128xi32>
    %55 = arith.select %54, %47, %51 : vector<8x128xi1>, vector<8x128xf32>
    %56 = arith.addf %43, %55 : vector<8x128xf32>
    %c7_i32_25 = arith.constant 7 : i32
    %57 = vector.broadcast %c7_i32_25 : i32 to vector<8x128xi32>
    %58 = arith.cmpi sge, %44, %57 : vector<8x128xi32>
    %59 = arith.select %58, %50, %52 : vector<8x128xi1>, vector<8x128xf32>
    %60 = arith.addf %56, %59 : vector<8x128xf32>
    %cst_26 = arith.constant 0.333333343 : f32
    %61 = vector.broadcast %cst_26 : f32 to vector<8x128xf32>
    %62 = arith.mulf %60, %61 : vector<8x128xf32>
    %63 = arith.subf %43, %62 : vector<8x128xf32>
    %c0_27 = arith.constant 0 : index
    %c0_28 = arith.constant 0 : index
    %64 = vector.load %arg10[%c0_27, %c0_28] : memref<128x128xf32, #tpu.memory_space<vmem>>, vector<128x128xf32>
    %cst_29 = arith.constant dense<0.000000e+00> : vector<8x128xf32>
    %65 = tpu.matmul %63, %64, %cst_29 {dimension_numbers = #tpu.dot_dimension_numbers<[1], [0], [0], [1], [0, 0, 1, 1], [], []>} : vector<8x128xf32>, vector<128x128xf32>, vector<8x128xf32> -> vector<8x128xf32>
    %c0_30 = arith.constant 0 : index
    %c0_31 = arith.constant 0 : index
    %66 = vector.load %arg11[%c0_30, %c0_31] : memref<1x128xf32, #tpu.memory_space<vmem>>, vector<1x128xf32>
    %67 = vector.broadcast %66 : vector<1x128xf32> to vector<8x128xf32>
    %68 = arith.addf %65, %67 : vector<8x128xf32>
    %cst_32 = arith.constant 0.000000e+00 : f32
    %69 = vector.broadcast %cst_32 : f32 to vector<8x128xf32>
    %70 = arith.maximumf %68, %69 : vector<8x128xf32>
    %c0_33 = arith.constant 0 : index
    %c0_34 = arith.constant 0 : index
    %71 = vector.load %arg12[%c0_33, %c0_34] : memref<128x128xf32, #tpu.memory_space<vmem>>, vector<128x128xf32>
    %cst_35 = arith.constant dense<0.000000e+00> : vector<8x128xf32>
    %72 = tpu.matmul %70, %71, %cst_35 {dimension_numbers = #tpu.dot_dimension_numbers<[1], [0], [0], [1], [0, 0, 1, 1], [], []>} : vector<8x128xf32>, vector<128x128xf32>, vector<8x128xf32> -> vector<8x128xf32>
    %c0_36 = arith.constant 0 : index
    %c0_37 = arith.constant 0 : index
    %73 = vector.load %arg13[%c0_36, %c0_37] : memref<1x128xf32, #tpu.memory_space<vmem>>, vector<1x128xf32>
    %74 = vector.broadcast %73 : vector<1x128xf32> to vector<8x128xf32>
    %75 = arith.addf %72, %74 : vector<8x128xf32>
    %76 = arith.addf %63, %75 : vector<8x128xf32>
    %77 = tpu.iota {dimensions = array<i32: 0>} : vector<8x128xi32>
    %78 = vector.extract_strided_slice %76 {offsets = [0, 0], sizes = [1, 128], strides = [1, 1]} : vector<8x128xf32> to vector<1x128xf32>
    %79 = vector.shape_cast %78 : vector<1x128xf32> to vector<1x128xf32>
    %80 = vector.broadcast %79 : vector<1x128xf32> to vector<8x128xf32>
    %81 = vector.extract_strided_slice %76 {offsets = [7, 0], sizes = [1, 128], strides = [1, 1]} : vector<8x128xf32> to vector<1x128xf32>
    %82 = vector.shape_cast %81 : vector<1x128xf32> to vector<1x128xf32>
    %83 = vector.broadcast %82 : vector<1x128xf32> to vector<8x128xf32>
    %c1_i32_38 = arith.constant 1 : i32
    %84 = tpu.dynamic_rotate %76 by %c1_i32_38 dim 0 : vector<8x128xf32>, i32 -> vector<8x128xf32>
    %c7_i32_39 = arith.constant 7 : i32
    %85 = tpu.dynamic_rotate %76 by %c7_i32_39 dim 0 : vector<8x128xf32>, i32 -> vector<8x128xf32>
    %c1_i32_40 = arith.constant 1 : i32
    %86 = vector.broadcast %c1_i32_40 : i32 to vector<8x128xi32>
    %87 = arith.cmpi slt, %77, %86 : vector<8x128xi32>
    %88 = arith.select %87, %80, %84 : vector<8x128xi1>, vector<8x128xf32>
    %89 = arith.addf %76, %88 : vector<8x128xf32>
    %c7_i32_41 = arith.constant 7 : i32
    %90 = vector.broadcast %c7_i32_41 : i32 to vector<8x128xi32>
    %91 = arith.cmpi sge, %77, %90 : vector<8x128xi32>
    %92 = arith.select %91, %83, %85 : vector<8x128xi1>, vector<8x128xf32>
    %93 = arith.addf %89, %92 : vector<8x128xf32>
    %cst_42 = arith.constant 0.333333343 : f32
    %94 = vector.broadcast %cst_42 : f32 to vector<8x128xf32>
    %95 = arith.mulf %93, %94 : vector<8x128xf32>
    %96 = arith.subf %76, %95 : vector<8x128xf32>
    %97 = tpu.iota {dimensions = array<i32: 0>} : vector<8x4xi32>
    %98 = vector.extract_strided_slice %10 {offsets = [0, 0], sizes = [1, 4], strides = [1, 1]} : vector<8x4xf32> to vector<1x4xf32>
    %99 = vector.shape_cast %98 : vector<1x4xf32> to vector<1x4xf32>
    %100 = vector.broadcast %99 : vector<1x4xf32> to vector<8x4xf32>
    %101 = vector.extract_strided_slice %10 {offsets = [7, 0], sizes = [1, 4], strides = [1, 1]} : vector<8x4xf32> to vector<1x4xf32>
    %102 = vector.shape_cast %101 : vector<1x4xf32> to vector<1x4xf32>
    %103 = vector.broadcast %102 : vector<1x4xf32> to vector<8x4xf32>
    %c1_i32_43 = arith.constant 1 : i32
    %104 = tpu.dynamic_rotate %10 by %c1_i32_43 dim 0 : vector<8x4xf32>, i32 -> vector<8x4xf32>
    %c7_i32_44 = arith.constant 7 : i32
    %105 = tpu.dynamic_rotate %10 by %c7_i32_44 dim 0 : vector<8x4xf32>, i32 -> vector<8x4xf32>
    %c1_i32_45 = arith.constant 1 : i32
    %106 = vector.broadcast %c1_i32_45 : i32 to vector<8x4xi32>
    %107 = arith.cmpi slt, %97, %106 : vector<8x4xi32>
    %108 = arith.select %107, %100, %104 : vector<8x4xi1>, vector<8x4xf32>
    %109 = arith.addf %10, %108 : vector<8x4xf32>
    %c7_i32_46 = arith.constant 7 : i32
    %110 = vector.broadcast %c7_i32_46 : i32 to vector<8x4xi32>
    %111 = arith.cmpi sge, %97, %110 : vector<8x4xi32>
    %112 = arith.select %111, %103, %105 : vector<8x4xi1>, vector<8x4xf32>
    %113 = arith.addf %109, %112 : vector<8x4xf32>
    %cst_47 = arith.constant 0.333333343 : f32
    %114 = vector.broadcast %cst_47 : f32 to vector<8x4xf32>
    %115 = arith.mulf %113, %114 : vector<8x4xf32>
    %116 = arith.subf %10, %115 : vector<8x4xf32>
    %cst_48 = arith.constant dense<0.000000e+00> : vector<4xf32>
    %117 = vector.multi_reduction <add>, %10, %cst_48 [0] : vector<8x4xf32> to vector<4xf32>
    %118 = vector.shape_cast %117 : vector<4xf32> to vector<1x4xf32>
    %cst_49 = arith.constant 8.000000e+00 : f32
    %119 = vector.broadcast %cst_49 : f32 to vector<1x4xf32>
    %120 = arith.divf %118, %119 : vector<1x4xf32>
    %121 = vector.extract_strided_slice %116 {offsets = [4, 0], sizes = [4, 4], strides = [1, 1]} : vector<8x4xf32> to vector<4x4xf32>
    %cst_50 = arith.constant 0.000000e+00 : f32
    %122 = vector.broadcast %cst_50 : f32 to vector<4x4xf32>
    %123 = tpu.concatenate %121, %122 in 0 : vector<4x4xf32>, vector<4x4xf32> -> vector<8x4xf32>
    %124 = vector.extract_strided_slice %115 {offsets = [4, 0], sizes = [4, 4], strides = [1, 1]} : vector<8x4xf32> to vector<4x4xf32>
    %125 = vector.shape_cast %120 : vector<1x4xf32> to vector<1x4xf32>
    %126 = vector.broadcast %125 : vector<1x4xf32> to vector<4x4xf32>
    %127 = tpu.concatenate %124, %126 in 0 : vector<4x4xf32>, vector<4x4xf32> -> vector<8x4xf32>
    %c0_51 = arith.constant 0 : index
    %c0_52 = arith.constant 0 : index
    %128 = vector.load %arg4[%c0_51, %c0_52] : memref<4x128xf32, #tpu.memory_space<vmem>>, vector<4x128xf32>
    %cst_53 = arith.constant dense<0.000000e+00> : vector<8x128xf32>
    %129 = tpu.matmul %123, %128, %cst_53 {dimension_numbers = #tpu.dot_dimension_numbers<[1], [0], [0], [1], [0, 0, 1, 1], [], []>} : vector<8x4xf32>, vector<4x128xf32>, vector<8x128xf32> -> vector<8x128xf32>
    %c0_54 = arith.constant 0 : index
    %c0_55 = arith.constant 0 : index
    %130 = vector.load %arg5[%c0_54, %c0_55] : memref<1x128xf32, #tpu.memory_space<vmem>>, vector<1x128xf32>
    %131 = vector.broadcast %130 : vector<1x128xf32> to vector<8x128xf32>
    %132 = arith.addf %129, %131 : vector<8x128xf32>
    %c0_56 = arith.constant 0 : index
    %c0_57 = arith.constant 0 : index
    %133 = vector.load %arg14[%c0_56, %c0_57] : memref<128x384xf32, #tpu.memory_space<vmem>>, vector<128x384xf32>
    %cst_58 = arith.constant dense<0.000000e+00> : vector<8x384xf32>
    %134 = tpu.matmul %132, %133, %cst_58 {dimension_numbers = #tpu.dot_dimension_numbers<[1], [0], [0], [1], [0, 0, 1, 1], [], []>} : vector<8x128xf32>, vector<128x384xf32>, vector<8x384xf32> -> vector<8x384xf32>
    %c0_59 = arith.constant 0 : index
    %c0_60 = arith.constant 0 : index
    %135 = vector.load %arg15[%c0_59, %c0_60] : memref<1x384xf32, #tpu.memory_space<vmem>>, vector<1x384xf32>
    %136 = vector.broadcast %135 : vector<1x384xf32> to vector<8x384xf32>
    %137 = arith.addf %134, %136 : vector<8x384xf32>
    %138 = vector.extract_strided_slice %137 {offsets = [0, 0], sizes = [8, 128], strides = [1, 1]} : vector<8x384xf32> to vector<8x128xf32>
    %139 = vector.extract_strided_slice %137 {offsets = [0, 128], sizes = [8, 128], strides = [1, 1]} : vector<8x384xf32> to vector<8x128xf32>
    %140 = vector.extract_strided_slice %137 {offsets = [0, 256], sizes = [8, 128], strides = [1, 1]} : vector<8x384xf32> to vector<8x128xf32>
    %cst_61 = arith.constant dense<0.000000e+00> : vector<8x8xf32>
    %141 = tpu.matmul %138, %139, %cst_61 {dimension_numbers = #tpu.dot_dimension_numbers<[1], [1], [0], [0], [0, 0, 1, 0], [], []>} : vector<8x128xf32>, vector<8x128xf32>, vector<8x8xf32> -> vector<8x8xf32>
    %cst_62 = arith.constant 0.0883883461 : f32
    %142 = vector.broadcast %cst_62 : f32 to vector<8x8xf32>
    %143 = arith.mulf %141, %142 : vector<8x8xf32>
    %cst_63 = arith.constant dense<0xFF800000> : vector<8xf32>
    %144 = vector.multi_reduction <maximumf>, %143, %cst_63 [1] : vector<8x8xf32> to vector<8xf32>
    %145 = vector.shape_cast %144 : vector<8xf32> to vector<8x1xf32>
    %146 = vector.broadcast %145 : vector<8x1xf32> to vector<8x8xf32>
    %147 = arith.subf %143, %146 : vector<8x8xf32>
    %148 = math.exp %147 : vector<8x8xf32>
    %cst_64 = arith.constant dense<0.000000e+00> : vector<8xf32>
    %149 = vector.multi_reduction <add>, %148, %cst_64 [1] : vector<8x8xf32> to vector<8xf32>
    %150 = vector.shape_cast %149 : vector<8xf32> to vector<8x1xf32>
    %151 = tpu.reciprocal %150 {approx = true} : vector<8x1xf32> -> vector<8x1xf32>
    %152 = vector.broadcast %151 : vector<8x1xf32> to vector<8x8xf32>
    %153 = arith.mulf %148, %152 : vector<8x8xf32>
    %cst_65 = arith.constant dense<0.000000e+00> : vector<8x128xf32>
    %154 = tpu.matmul %153, %140, %cst_65 {dimension_numbers = #tpu.dot_dimension_numbers<[1], [0], [0], [1], [0, 0, 1, 1], [], []>} : vector<8x8xf32>, vector<8x128xf32>, vector<8x128xf32> -> vector<8x128xf32>
    %c0_66 = arith.constant 0 : index
    %c0_67 = arith.constant 0 : index
    %155 = vector.load %arg16[%c0_66, %c0_67] : memref<128x128xf32, #tpu.memory_space<vmem>>, vector<128x128xf32>
    %cst_68 = arith.constant dense<0.000000e+00> : vector<8x128xf32>
    %156 = tpu.matmul %154, %155, %cst_68 {dimension_numbers = #tpu.dot_dimension_numbers<[1], [0], [0], [1], [0, 0, 1, 1], [], []>} : vector<8x128xf32>, vector<128x128xf32>, vector<8x128xf32> -> vector<8x128xf32>
    %c0_69 = arith.constant 0 : index
    %c0_70 = arith.constant 0 : index
    %157 = vector.load %arg17[%c0_69, %c0_70] : memref<1x128xf32, #tpu.memory_space<vmem>>, vector<1x128xf32>
    %158 = vector.broadcast %157 : vector<1x128xf32> to vector<8x128xf32>
    %159 = arith.addf %156, %158 : vector<8x128xf32>
    %160 = arith.addf %132, %159 : vector<8x128xf32>
    %161 = tpu.iota {dimensions = array<i32: 0>} : vector<8x128xi32>
    %162 = vector.extract_strided_slice %160 {offsets = [0, 0], sizes = [1, 128], strides = [1, 1]} : vector<8x128xf32> to vector<1x128xf32>
    %163 = vector.shape_cast %162 : vector<1x128xf32> to vector<1x128xf32>
    %164 = vector.broadcast %163 : vector<1x128xf32> to vector<8x128xf32>
    %165 = vector.extract_strided_slice %160 {offsets = [7, 0], sizes = [1, 128], strides = [1, 1]} : vector<8x128xf32> to vector<1x128xf32>
    %166 = vector.shape_cast %165 : vector<1x128xf32> to vector<1x128xf32>
    %167 = vector.broadcast %166 : vector<1x128xf32> to vector<8x128xf32>
    %c1_i32_71 = arith.constant 1 : i32
    %168 = tpu.dynamic_rotate %160 by %c1_i32_71 dim 0 : vector<8x128xf32>, i32 -> vector<8x128xf32>
    %c7_i32_72 = arith.constant 7 : i32
    %169 = tpu.dynamic_rotate %160 by %c7_i32_72 dim 0 : vector<8x128xf32>, i32 -> vector<8x128xf32>
    %c1_i32_73 = arith.constant 1 : i32
    %170 = vector.broadcast %c1_i32_73 : i32 to vector<8x128xi32>
    %171 = arith.cmpi slt, %161, %170 : vector<8x128xi32>
    %172 = arith.select %171, %164, %168 : vector<8x128xi1>, vector<8x128xf32>
    %173 = arith.addf %160, %172 : vector<8x128xf32>
    %c7_i32_74 = arith.constant 7 : i32
    %174 = vector.broadcast %c7_i32_74 : i32 to vector<8x128xi32>
    %175 = arith.cmpi sge, %161, %174 : vector<8x128xi32>
    %176 = arith.select %175, %167, %169 : vector<8x128xi1>, vector<8x128xf32>
    %177 = arith.addf %173, %176 : vector<8x128xf32>
    %cst_75 = arith.constant 0.333333343 : f32
    %178 = vector.broadcast %cst_75 : f32 to vector<8x128xf32>
    %179 = arith.mulf %177, %178 : vector<8x128xf32>
    %180 = arith.subf %160, %179 : vector<8x128xf32>
    %c0_76 = arith.constant 0 : index
    %c0_77 = arith.constant 0 : index
    %181 = vector.load %arg18[%c0_76, %c0_77] : memref<128x128xf32, #tpu.memory_space<vmem>>, vector<128x128xf32>
    %cst_78 = arith.constant dense<0.000000e+00> : vector<8x128xf32>
    %182 = tpu.matmul %180, %181, %cst_78 {dimension_numbers = #tpu.dot_dimension_numbers<[1], [0], [0], [1], [0, 0, 1, 1], [], []>} : vector<8x128xf32>, vector<128x128xf32>, vector<8x128xf32> -> vector<8x128xf32>
    %c0_79 = arith.constant 0 : index
    %c0_80 = arith.constant 0 : index
    %183 = vector.load %arg19[%c0_79, %c0_80] : memref<1x128xf32, #tpu.memory_space<vmem>>, vector<1x128xf32>
    %184 = vector.broadcast %183 : vector<1x128xf32> to vector<8x128xf32>
    %185 = arith.addf %182, %184 : vector<8x128xf32>
    %c0_81 = arith.constant 0 : index
    %c0_82 = arith.constant 0 : index
    %186 = vector.load %arg20[%c0_81, %c0_82] : memref<128x256xf32, #tpu.memory_space<vmem>>, vector<128x256xf32>
    %cst_83 = arith.constant dense<0.000000e+00> : vector<8x256xf32>
    %187 = tpu.matmul %96, %186, %cst_83 {dimension_numbers = #tpu.dot_dimension_numbers<[1], [0], [0], [1], [0, 0, 1, 1], [], []>} : vector<8x128xf32>, vector<128x256xf32>, vector<8x256xf32> -> vector<8x256xf32>
    %c0_84 = arith.constant 0 : index
    %c0_85 = arith.constant 0 : index
    %188 = vector.load %arg21[%c0_84, %c0_85] : memref<1x256xf32, #tpu.memory_space<vmem>>, vector<1x256xf32>
    %189 = vector.broadcast %188 : vector<1x256xf32> to vector<8x256xf32>
    %190 = arith.addf %187, %189 : vector<8x256xf32>
    %191 = vector.extract_strided_slice %190 {offsets = [0, 0], sizes = [8, 128], strides = [1, 1]} : vector<8x256xf32> to vector<8x128xf32>
    %192 = vector.extract_strided_slice %190 {offsets = [0, 128], sizes = [8, 128], strides = [1, 1]} : vector<8x256xf32> to vector<8x128xf32>
    %cst_86 = arith.constant dense<0.000000e+00> : vector<8x8xf32>
    %193 = tpu.matmul %185, %191, %cst_86 {dimension_numbers = #tpu.dot_dimension_numbers<[1], [1], [0], [0], [0, 0, 1, 0], [], []>} : vector<8x128xf32>, vector<8x128xf32>, vector<8x8xf32> -> vector<8x8xf32>
    %cst_87 = arith.constant 0.0883883461 : f32
    %194 = vector.broadcast %cst_87 : f32 to vector<8x8xf32>
    %195 = arith.mulf %193, %194 : vector<8x8xf32>
    %cst_88 = arith.constant dense<0xFF800000> : vector<8xf32>
    %196 = vector.multi_reduction <maximumf>, %195, %cst_88 [1] : vector<8x8xf32> to vector<8xf32>
    %197 = vector.shape_cast %196 : vector<8xf32> to vector<8x1xf32>
    %198 = vector.broadcast %197 : vector<8x1xf32> to vector<8x8xf32>
    %199 = arith.subf %195, %198 : vector<8x8xf32>
    %200 = math.exp %199 : vector<8x8xf32>
    %cst_89 = arith.constant dense<0.000000e+00> : vector<8xf32>
    %201 = vector.multi_reduction <add>, %200, %cst_89 [1] : vector<8x8xf32> to vector<8xf32>
    %202 = vector.shape_cast %201 : vector<8xf32> to vector<8x1xf32>
    %203 = tpu.reciprocal %202 {approx = true} : vector<8x1xf32> -> vector<8x1xf32>
    %204 = vector.broadcast %203 : vector<8x1xf32> to vector<8x8xf32>
    %205 = arith.mulf %200, %204 : vector<8x8xf32>
    %cst_90 = arith.constant dense<0.000000e+00> : vector<8x128xf32>
    %206 = tpu.matmul %205, %192, %cst_90 {dimension_numbers = #tpu.dot_dimension_numbers<[1], [0], [0], [1], [0, 0, 1, 1], [], []>} : vector<8x8xf32>, vector<8x128xf32>, vector<8x128xf32> -> vector<8x128xf32>
    %c0_91 = arith.constant 0 : index
    %c0_92 = arith.constant 0 : index
    %207 = vector.load %arg22[%c0_91, %c0_92] : memref<128x128xf32, #tpu.memory_space<vmem>>, vector<128x128xf32>
    %cst_93 = arith.constant dense<0.000000e+00> : vector<8x128xf32>
    %208 = tpu.matmul %206, %207, %cst_93 {dimension_numbers = #tpu.dot_dimension_numbers<[1], [0], [0], [1], [0, 0, 1, 1], [], []>} : vector<8x128xf32>, vector<128x128xf32>, vector<8x128xf32> -> vector<8x128xf32>
    %c0_94 = arith.constant 0 : index
    %c0_95 = arith.constant 0 : index
    %209 = vector.load %arg23[%c0_94, %c0_95] : memref<1x128xf32, #tpu.memory_space<vmem>>, vector<1x128xf32>
    %210 = vector.broadcast %209 : vector<1x128xf32> to vector<8x128xf32>
    %211 = arith.addf %208, %210 : vector<8x128xf32>
    %212 = arith.addf %180, %211 : vector<8x128xf32>
    %213 = tpu.iota {dimensions = array<i32: 0>} : vector<8x128xi32>
    %214 = vector.extract_strided_slice %212 {offsets = [0, 0], sizes = [1, 128], strides = [1, 1]} : vector<8x128xf32> to vector<1x128xf32>
    %215 = vector.shape_cast %214 : vector<1x128xf32> to vector<1x128xf32>
    %216 = vector.broadcast %215 : vector<1x128xf32> to vector<8x128xf32>
    %217 = vector.extract_strided_slice %212 {offsets = [7, 0], sizes = [1, 128], strides = [1, 1]} : vector<8x128xf32> to vector<1x128xf32>
    %218 = vector.shape_cast %217 : vector<1x128xf32> to vector<1x128xf32>
    %219 = vector.broadcast %218 : vector<1x128xf32> to vector<8x128xf32>
    %c1_i32_96 = arith.constant 1 : i32
    %220 = tpu.dynamic_rotate %212 by %c1_i32_96 dim 0 : vector<8x128xf32>, i32 -> vector<8x128xf32>
    %c7_i32_97 = arith.constant 7 : i32
    %221 = tpu.dynamic_rotate %212 by %c7_i32_97 dim 0 : vector<8x128xf32>, i32 -> vector<8x128xf32>
    %c1_i32_98 = arith.constant 1 : i32
    %222 = vector.broadcast %c1_i32_98 : i32 to vector<8x128xi32>
    %223 = arith.cmpi slt, %213, %222 : vector<8x128xi32>
    %224 = arith.select %223, %216, %220 : vector<8x128xi1>, vector<8x128xf32>
    %225 = arith.addf %212, %224 : vector<8x128xf32>
    %c7_i32_99 = arith.constant 7 : i32
    %226 = vector.broadcast %c7_i32_99 : i32 to vector<8x128xi32>
    %227 = arith.cmpi sge, %213, %226 : vector<8x128xi32>
    %228 = arith.select %227, %219, %221 : vector<8x128xi1>, vector<8x128xf32>
    %229 = arith.addf %225, %228 : vector<8x128xf32>
    %cst_100 = arith.constant 0.333333343 : f32
    %230 = vector.broadcast %cst_100 : f32 to vector<8x128xf32>
    %231 = arith.mulf %229, %230 : vector<8x128xf32>
    %232 = arith.subf %212, %231 : vector<8x128xf32>
    %c0_101 = arith.constant 0 : index
    %c0_102 = arith.constant 0 : index
    %233 = vector.load %arg24[%c0_101, %c0_102] : memref<128x128xf32, #tpu.memory_space<vmem>>, vector<128x128xf32>
    %cst_103 = arith.constant dense<0.000000e+00> : vector<8x128xf32>
    %234 = tpu.matmul %232, %233, %cst_103 {dimension_numbers = #tpu.dot_dimension_numbers<[1], [0], [0], [1], [0, 0, 1, 1], [], []>} : vector<8x128xf32>, vector<128x128xf32>, vector<8x128xf32> -> vector<8x128xf32>
    %c0_104 = arith.constant 0 : index
    %c0_105 = arith.constant 0 : index
    %235 = vector.load %arg25[%c0_104, %c0_105] : memref<1x128xf32, #tpu.memory_space<vmem>>, vector<1x128xf32>
    %236 = vector.broadcast %235 : vector<1x128xf32> to vector<8x128xf32>
    %237 = arith.addf %234, %236 : vector<8x128xf32>
    %cst_106 = arith.constant 0.000000e+00 : f32
    %238 = vector.broadcast %cst_106 : f32 to vector<8x128xf32>
    %239 = arith.maximumf %237, %238 : vector<8x128xf32>
    %c0_107 = arith.constant 0 : index
    %c0_108 = arith.constant 0 : index
    %240 = vector.load %arg26[%c0_107, %c0_108] : memref<128x128xf32, #tpu.memory_space<vmem>>, vector<128x128xf32>
    %cst_109 = arith.constant dense<0.000000e+00> : vector<8x128xf32>
    %241 = tpu.matmul %239, %240, %cst_109 {dimension_numbers = #tpu.dot_dimension_numbers<[1], [0], [0], [1], [0, 0, 1, 1], [], []>} : vector<8x128xf32>, vector<128x128xf32>, vector<8x128xf32> -> vector<8x128xf32>
    %c0_110 = arith.constant 0 : index
    %c0_111 = arith.constant 0 : index
    %242 = vector.load %arg27[%c0_110, %c0_111] : memref<1x128xf32, #tpu.memory_space<vmem>>, vector<1x128xf32>
    %243 = vector.broadcast %242 : vector<1x128xf32> to vector<8x128xf32>
    %244 = arith.addf %241, %243 : vector<8x128xf32>
    %245 = arith.addf %232, %244 : vector<8x128xf32>
    %246 = tpu.iota {dimensions = array<i32: 0>} : vector<8x128xi32>
    %247 = vector.extract_strided_slice %245 {offsets = [0, 0], sizes = [1, 128], strides = [1, 1]} : vector<8x128xf32> to vector<1x128xf32>
    %248 = vector.shape_cast %247 : vector<1x128xf32> to vector<1x128xf32>
    %249 = vector.broadcast %248 : vector<1x128xf32> to vector<8x128xf32>
    %250 = vector.extract_strided_slice %245 {offsets = [7, 0], sizes = [1, 128], strides = [1, 1]} : vector<8x128xf32> to vector<1x128xf32>
    %251 = vector.shape_cast %250 : vector<1x128xf32> to vector<1x128xf32>
    %252 = vector.broadcast %251 : vector<1x128xf32> to vector<8x128xf32>
    %c1_i32_112 = arith.constant 1 : i32
    %253 = tpu.dynamic_rotate %245 by %c1_i32_112 dim 0 : vector<8x128xf32>, i32 -> vector<8x128xf32>
    %c7_i32_113 = arith.constant 7 : i32
    %254 = tpu.dynamic_rotate %245 by %c7_i32_113 dim 0 : vector<8x128xf32>, i32 -> vector<8x128xf32>
    %c1_i32_114 = arith.constant 1 : i32
    %255 = vector.broadcast %c1_i32_114 : i32 to vector<8x128xi32>
    %256 = arith.cmpi slt, %246, %255 : vector<8x128xi32>
    %257 = arith.select %256, %249, %253 : vector<8x128xi1>, vector<8x128xf32>
    %258 = arith.addf %245, %257 : vector<8x128xf32>
    %c7_i32_115 = arith.constant 7 : i32
    %259 = vector.broadcast %c7_i32_115 : i32 to vector<8x128xi32>
    %260 = arith.cmpi sge, %246, %259 : vector<8x128xi32>
    %261 = arith.select %260, %252, %254 : vector<8x128xi1>, vector<8x128xf32>
    %262 = arith.addf %258, %261 : vector<8x128xf32>
    %cst_116 = arith.constant 0.333333343 : f32
    %263 = vector.broadcast %cst_116 : f32 to vector<8x128xf32>
    %264 = arith.mulf %262, %263 : vector<8x128xf32>
    %265 = arith.subf %245, %264 : vector<8x128xf32>
    %266 = arith.addf %179, %231 : vector<8x128xf32>
    %267 = arith.addf %266, %264 : vector<8x128xf32>
    %c0_117 = arith.constant 0 : index
    %c0_118 = arith.constant 0 : index
    %268 = vector.load %arg28[%c0_117, %c0_118] : memref<128x4xf32, #tpu.memory_space<vmem>>, vector<128x4xf32>
    %cst_119 = arith.constant dense<0.000000e+00> : vector<8x4xf32>
    %269 = tpu.matmul %267, %268, %cst_119 {dimension_numbers = #tpu.dot_dimension_numbers<[1], [0], [0], [1], [0, 0, 1, 1], [], []>} : vector<8x128xf32>, vector<128x4xf32>, vector<8x4xf32> -> vector<8x4xf32>
    %c0_120 = arith.constant 0 : index
    %c0_121 = arith.constant 0 : index
    %270 = vector.load %arg29[%c0_120, %c0_121] : memref<1x4xf32, #tpu.memory_space<vmem>>, vector<1x4xf32>
    %271 = vector.broadcast %270 : vector<1x4xf32> to vector<8x4xf32>
    %272 = arith.addf %269, %271 : vector<8x4xf32>
    %273 = arith.addf %127, %272 : vector<8x4xf32>
    %c0_122 = arith.constant 0 : index
    %c0_123 = arith.constant 0 : index
    %274 = vector.load %arg30[%c0_122, %c0_123] : memref<128x4xf32, #tpu.memory_space<vmem>>, vector<128x4xf32>
    %cst_124 = arith.constant dense<0.000000e+00> : vector<8x4xf32>
    %275 = tpu.matmul %265, %274, %cst_124 {dimension_numbers = #tpu.dot_dimension_numbers<[1], [0], [0], [1], [0, 0, 1, 1], [], []>} : vector<8x128xf32>, vector<128x4xf32>, vector<8x4xf32> -> vector<8x4xf32>
    %c0_125 = arith.constant 0 : index
    %c0_126 = arith.constant 0 : index
    %276 = vector.load %arg31[%c0_125, %c0_126] : memref<1x4xf32, #tpu.memory_space<vmem>>, vector<1x4xf32>
    %277 = vector.broadcast %276 : vector<1x4xf32> to vector<8x4xf32>
    %278 = arith.addf %275, %277 : vector<8x4xf32>
    %279 = arith.addf %278, %273 : vector<8x4xf32>
    %280 = vector.extract_strided_slice %279 {offsets = [4, 0], sizes = [4, 4], strides = [1, 1]} : vector<8x4xf32> to vector<4x4xf32>
    %281 = vector.broadcast %8 : vector<1x4xf32> to vector<4x4xf32>
    %282 = arith.mulf %280, %281 : vector<4x4xf32>
    %c0_127 = arith.constant 0 : index
    %c0_128 = arith.constant 0 : index
    %c0_129 = arith.constant 0 : index
    %283 = vector.load %arg32[%c0_127, %c0_128, %c0_129] : memref<1x4x4xf32, #tpu.memory_space<vmem>>, vector<1x4x4xf32>
    %284 = vector.shape_cast %283 : vector<1x4x4xf32> to vector<4x4xf32>
    %285 = vector.shape_cast %282 : vector<4x4xf32> to vector<1x4x4xf32>
    tpu.vector_store %arg32[%c0_127, %c0_128, %c0_129], %285 {strides = array<i32>} : memref<1x4x4xf32, #tpu.memory_space<vmem>>, vector<1x4x4xf32>,
    return
  }
  func.func @transform_0(%arg0: i32) -> (i32, i32, i32) {
    %c0_i32 = arith.constant 0 : i32
    %c0_i32_0 = arith.constant 0 : i32
    %c0_i32_1 = arith.constant 0 : i32
    return %arg0, %c0_i32, %c0_i32_0 : i32, i32, i32
  }
  func.func @transform_1(%arg0: i32) -> (i32, i32) {
    %c0_i32 = arith.constant 0 : i32
    %c0_i32_0 = arith.constant 0 : i32
    %c0_i32_1 = arith.constant 0 : i32
    return %c0_i32, %c0_i32_0 : i32, i32
  }
  func.func @transform_2(%arg0: i32) -> (i32, i32) {
    %c0_i32 = arith.constant 0 : i32
    %c0_i32_0 = arith.constant 0 : i32
    %c0_i32_1 = arith.constant 0 : i32
    return %c0_i32, %c0_i32_0 : i32, i32
  }
  func.func @transform_3(%arg0: i32) -> (i32, i32) {
    %c0_i32 = arith.constant 0 : i32
    %c0_i32_0 = arith.constant 0 : i32
    %c0_i32_1 = arith.constant 0 : i32
    return %c0_i32, %c0_i32_0 : i32, i32
  }
  func.func @transform_4(%arg0: i32) -> (i32, i32) {
    %c0_i32 = arith.constant 0 : i32
    %c0_i32_0 = arith.constant 0 : i32
    %c0_i32_1 = arith.constant 0 : i32
    return %c0_i32, %c0_i32_0 : i32, i32
  }
  func.func @transform_5(%arg0: i32) -> (i32, i32) {
    %c0_i32 = arith.constant 0 : i32
    %c0_i32_0 = arith.constant 0 : i32
    %c0_i32_1 = arith.constant 0 : i32
    return %c0_i32, %c0_i32_0 : i32, i32
  }
  func.func @transform_6(%arg0: i32) -> (i32, i32) {
    %c0_i32 = arith.constant 0 : i32
    %c0_i32_0 = arith.constant 0 : i32
    %c0_i32_1 = arith.constant 0 : i32
    return %c0_i32, %c0_i32_0 : i32, i32
  }
  func.func @transform_7(%arg0: i32) -> (i32, i32) {
    %c0_i32 = arith.constant 0 : i32
    %c0_i32_0 = arith.constant 0 : i32
    %c0_i32_1 = arith.constant 0 : i32
    return %c0_i32, %c0_i32_0 : i32, i32
  }
  func.func @transform_8(%arg0: i32) -> (i32, i32) {
    %c0_i32 = arith.constant 0 : i32
    %c0_i32_0 = arith.constant 0 : i32
    %c0_i32_1 = arith.constant 0 : i32
    return %c0_i32, %c0_i32_0 : i32, i32
  }
  func.func @transform_9(%arg0: i32) -> (i32, i32) {
    %c0_i32 = arith.constant 0 : i32
    %c0_i32_0 = arith.constant 0 : i32
    %c0_i32_1 = arith.constant 0 : i32
    return %c0_i32, %c0_i32_0 : i32, i32
  }
  func.func @transform_10(%arg0: i32) -> (i32, i32) {
    %c0_i32 = arith.constant 0 : i32
    %c0_i32_0 = arith.constant 0 : i32
    %c0_i32_1 = arith.constant 0 : i32
    return %c0_i32, %c0_i32_0 : i32, i32
  }
  func.func @transform_11(%arg0: i32) -> (i32, i32) {
    %c0_i32 = arith.constant 0 : i32
    %c0_i32_0 = arith.constant 0 : i32
    %c0_i32_1 = arith.constant 0 : i32
    return %c0_i32, %c0_i32_0 : i32, i32
  }
  func.func @transform_12(%arg0: i32) -> (i32, i32) {
    %c0_i32 = arith.constant 0 : i32
    %c0_i32_0 = arith.constant 0 : i32
    %c0_i32_1 = arith.constant 0 : i32
    return %c0_i32, %c0_i32_0 : i32, i32
  }
  func.func @transform_13(%arg0: i32) -> (i32, i32) {
    %c0_i32 = arith.constant 0 : i32
    %c0_i32_0 = arith.constant 0 : i32
    %c0_i32_1 = arith.constant 0 : i32
    return %c0_i32, %c0_i32_0 : i32, i32
  }
  func.func @transform_14(%arg0: i32) -> (i32, i32) {
    %c0_i32 = arith.constant 0 : i32
    %c0_i32_0 = arith.constant 0 : i32
    %c0_i32_1 = arith.constant 0 : i32
    return %c0_i32, %c0_i32_0 : i32, i32
  }
  func.func @transform_15(%arg0: i32) -> (i32, i32) {
    %c0_i32 = arith.constant 0 : i32
    %c0_i32_0 = arith.constant 0 : i32
    %c0_i32_1 = arith.constant 0 : i32
    return %c0_i32, %c0_i32_0 : i32, i32
  }
  func.func @transform_16(%arg0: i32) -> (i32, i32) {
    %c0_i32 = arith.constant 0 : i32
    %c0_i32_0 = arith.constant 0 : i32
    %c0_i32_1 = arith.constant 0 : i32
    return %c0_i32, %c0_i32_0 : i32, i32
  }
  func.func @transform_17(%arg0: i32) -> (i32, i32) {
    %c0_i32 = arith.constant 0 : i32
    %c0_i32_0 = arith.constant 0 : i32
    %c0_i32_1 = arith.constant 0 : i32
    return %c0_i32, %c0_i32_0 : i32, i32
  }
  func.func @transform_18(%arg0: i32) -> (i32, i32) {
    %c0_i32 = arith.constant 0 : i32
    %c0_i32_0 = arith.constant 0 : i32
    %c0_i32_1 = arith.constant 0 : i32
    return %c0_i32, %c0_i32_0 : i32, i32
  }
  func.func @transform_19(%arg0: i32) -> (i32, i32) {
    %c0_i32 = arith.constant 0 : i32
    %c0_i32_0 = arith.constant 0 : i32
    %c0_i32_1 = arith.constant 0 : i32
    return %c0_i32, %c0_i32_0 : i32, i32
  }
  func.func @transform_20(%arg0: i32) -> (i32, i32) {
    %c0_i32 = arith.constant 0 : i32
    %c0_i32_0 = arith.constant 0 : i32
    %c0_i32_1 = arith.constant 0 : i32
    return %c0_i32, %c0_i32_0 : i32, i32
  }
  func.func @transform_21(%arg0: i32) -> (i32, i32) {
    %c0_i32 = arith.constant 0 : i32
    %c0_i32_0 = arith.constant 0 : i32
    %c0_i32_1 = arith.constant 0 : i32
    return %c0_i32, %c0_i32_0 : i32, i32
  }
  func.func @transform_22(%arg0: i32) -> (i32, i32) {
    %c0_i32 = arith.constant 0 : i32
    %c0_i32_0 = arith.constant 0 : i32
    %c0_i32_1 = arith.constant 0 : i32
    return %c0_i32, %c0_i32_0 : i32, i32
  }
  func.func @transform_23(%arg0: i32) -> (i32, i32) {
    %c0_i32 = arith.constant 0 : i32
    %c0_i32_0 = arith.constant 0 : i32
    %c0_i32_1 = arith.constant 0 : i32
    return %c0_i32, %c0_i32_0 : i32, i32
  }
  func.func @transform_24(%arg0: i32) -> (i32, i32) {
    %c0_i32 = arith.constant 0 : i32
    %c0_i32_0 = arith.constant 0 : i32
    %c0_i32_1 = arith.constant 0 : i32
    return %c0_i32, %c0_i32_0 : i32, i32
  }
  func.func @transform_25(%arg0: i32) -> (i32, i32) {
    %c0_i32 = arith.constant 0 : i32
    %c0_i32_0 = arith.constant 0 : i32
    %c0_i32_1 = arith.constant 0 : i32
    return %c0_i32, %c0_i32_0 : i32, i32
  }
  func.func @transform_26(%arg0: i32) -> (i32, i32) {
    %c0_i32 = arith.constant 0 : i32
    %c0_i32_0 = arith.constant 0 : i32
    %c0_i32_1 = arith.constant 0 : i32
    return %c0_i32, %c0_i32_0 : i32, i32
  }
  func.func @transform_27(%arg0: i32) -> (i32, i32) {
    %c0_i32 = arith.constant 0 : i32
    %c0_i32_0 = arith.constant 0 : i32
    %c0_i32_1 = arith.constant 0 : i32
    return %c0_i32, %c0_i32_0 : i32, i32
  }
  func.func @transform_28(%arg0: i32) -> (i32, i32) {
    %c0_i32 = arith.constant 0 : i32
    %c0_i32_0 = arith.constant 0 : i32
    %c0_i32_1 = arith.constant 0 : i32
    return %c0_i32, %c0_i32_0 : i32, i32
  }
  func.func @transform_29(%arg0: i32) -> (i32, i32) {
    %c0_i32 = arith.constant 0 : i32
    %c0_i32_0 = arith.constant 0 : i32
    %c0_i32_1 = arith.constant 0 : i32
    return %c0_i32, %c0_i32_0 : i32, i32
  }
  func.func @transform_30(%arg0: i32) -> (i32, i32) {
    %c0_i32 = arith.constant 0 : i32
    %c0_i32_0 = arith.constant 0 : i32
    %c0_i32_1 = arith.constant 0 : i32
    return %c0_i32, %c0_i32_0 : i32, i32
  }
  func.func @transform_31(%arg0: i32) -> (i32, i32, i32) {
    %c0_i32 = arith.constant 0 : i32
    %c0_i32_0 = arith.constant 0 : i32
    %c0_i32_1 = arith.constant 0 : i32
    return %arg0, %c0_i32, %c0_i32_0 : i32, i32, i32
  }
}

</mosaic_0001>

<llo_original>
// kernel: autoformer_forward.1
$region0: #{autoformer_forward.1}
  #allocation0 [shape = 'u32[]', space=smem, size = 0x4, offset = 0x4, fixed_abs, tag = 'smem constant byte address 0x4 - core index']
  #allocation1 [shape = 'u32[144,128]{1,0:T(1,128)}', space=vmem, size = 0x12000, scoped, tag = 'internal scratch']
  %s0 = inlined_call_operand.smem [shape: u32[32], index: -1, kind: input, shape index: {}]
  %s1 = sld [smem:[%s0]]
  %s2 = scalar_lea.smem %s0, 1
  %s3 = sld [smem:[%s2]]
  %s4 = scalar_lea.smem %s0, 2
  %s5 = sld [smem:[%s4]]
  %s6 = scalar_lea.smem %s0, 3
  %s7 = sld [smem:[%s6]]
  %s8 = scalar_lea.smem %s0, 4
  %s9 = sld [smem:[%s8]]
  %s10 = scalar_lea.smem %s0, 5
  %s11 = sld [smem:[%s10]]
  %s12 = scalar_lea.smem %s0, 6
  %s13 = sld [smem:[%s12]]
  %s14 = scalar_lea.smem %s0, 7
  %s15 = sld [smem:[%s14]]
  %s16 = scalar_lea.smem %s0, 8
  %s17 = sld [smem:[%s16]]
  %s18 = scalar_lea.smem %s0, 9
  %s19 = sld [smem:[%s18]]
  %s20 = scalar_lea.smem %s0, 10
  %s21 = sld [smem:[%s20]]
  %s22 = scalar_lea.smem %s0, 11
  %s23 = sld [smem:[%s22]]
  %s24 = scalar_lea.smem %s0, 12
  %s25 = sld [smem:[%s24]]
  %s26 = scalar_lea.smem %s0, 13
  %s27 = sld [smem:[%s26]]
  %s28 = scalar_lea.smem %s0, 14
  %s29 = sld [smem:[%s28]]
  %s30 = scalar_lea.smem %s0, 15
  %s31 = sld [smem:[%s30]]
  %s32 = scalar_lea.smem %s0, 16
  %s33 = sld [smem:[%s32]]
  %s34 = scalar_lea.smem %s0, 17
  %s35 = sld [smem:[%s34]]
  %s36 = scalar_lea.smem %s0, 18
  %s37 = sld [smem:[%s36]]
  %s38 = scalar_lea.smem %s0, 19
  %s39 = sld [smem:[%s38]]
  %s40 = scalar_lea.smem %s0, 20
  %s41 = sld [smem:[%s40]]
  %s42 = scalar_lea.smem %s0, 21
  %s43 = sld [smem:[%s42]]
  %s44 = scalar_lea.smem %s0, 22
  %s45 = sld [smem:[%s44]]
  %s46 = scalar_lea.smem %s0, 23
  %s47 = sld [smem:[%s46]]
  %s48 = scalar_lea.smem %s0, 24
  %s49 = sld [smem:[%s48]]
  %s50 = scalar_lea.smem %s0, 25
  %s51 = sld [smem:[%s50]]
  %s52 = scalar_lea.smem %s0, 26
  %s53 = sld [smem:[%s52]]
  %s54 = scalar_lea.smem %s0, 27
  %s55 = sld [smem:[%s54]]
  %s56 = scalar_lea.smem %s0, 28
  %s57 = sld [smem:[%s56]]
  %s58 = scalar_lea.smem %s0, 29
  %s59 = sld [smem:[%s58]]
  %s60 = scalar_lea.smem %s0, 30
  %s61 = sld [smem:[%s60]]
  %s62 = scalar_lea.smem %s0, 31
  %s63 = sld [smem:[%s62]]
  %s64 = sld [smem:[#allocation0]]
  $region197: #{autoformer_forward.1} parent=0
    _
  %s66 = ssub.s32 1, %s64
  %s67 = scalar_select 0, %s66, %s64
  $region1: #{autoformer_forward.1} parent=0
    #allocation2 [shape = 'u8[196608]{0}', space=vmem, size = 0x30000, scoped, tag = 'input window, operand 5, single buffered']
    #allocation3 [shape = 's32[2]{0}', space=sflag, size = 0x8, scoped, tag = 'scoped memory for autoformer_forward.1']
    #allocation4 [shape = 's32[2]{0}', space=sflag, size = 0x8, scoped, tag = 'scoped memory for autoformer_forward.1']
    #allocation5 [shape = 'u8[65536]{0}', space=vmem, size = 0x10000, scoped, tag = 'input window, operand 7, single buffered']
    #allocation6 [shape = 's32[1]{0}', space=sflag, size = 0x4, scoped, tag = 'scoped memory for autoformer_forward.1']
    #allocation7 [shape = 'u8[65536]{0}', space=vmem, size = 0x10000, scoped, tag = 'input window, operand 9, single buffered']
    #allocation8 [shape = 'u8[65536]{0}', space=vmem, size = 0x10000, scoped, tag = 'input window, operand 11, single buffered']
    #allocation9 [shape = 's32[1]{0}', space=sflag, size = 0x4, scoped, tag = 'scoped memory for autoformer_forward.1']
    #allocation10 [shape = 'u8[196608]{0}', space=vmem, size = 0x30000, scoped, tag = 'input window, operand 13, single buffered']
    #allocation11 [shape = 'u8[65536]{0}', space=vmem, size = 0x10000, scoped, tag = 'input window, operand 15, single buffered']
    #allocation12 [shape = 's32[1]{0}', space=sflag, size = 0x4, scoped, tag = 'scoped memory for autoformer_forward.1']
    #allocation13 [shape = 'u8[65536]{0}', space=vmem, size = 0x10000, scoped, tag = 'input window, operand 17, single buffered']
    #allocation14 [shape = 'u8[65536]{0}', space=vmem, size = 0x10000, scoped, tag = 'input window, operand 21, single buffered']
    #allocation15 [shape = 's32[1]{0}', space=sflag, size = 0x4, scoped, tag = 'scoped memory for autoformer_forward.1']
    #allocation16 [shape = 'u8[65536]{0}', space=vmem, size = 0x10000, scoped, tag = 'input window, operand 23, single buffered']
    #allocation17 [shape = 'u8[65536]{0}', space=vmem, size = 0x10000, scoped, tag = 'input window, operand 25, single buffered']
    #allocation18 [shape = 's32[1]{0}', space=sflag, size = 0x4, scoped, tag = 'scoped memory for autoformer_forward.1']
    #allocation19 [shape = 'u8[4096]{0}', space=vmem, size = 0x1000, scoped, tag = 'output window, operand 0']
    %68 = vsyncpa [#allocation3], 0
    %69 = vsyncpa [#allocation6], 0
    %70 = vsyncpa [#allocation9], 0
    %71 = vsyncpa [#allocation12], 0
    %72 = vsyncpa [#allocation15], 0
    %73 = vsyncpa [#allocation18], 0
    %74 = vsyncpa [#allocation4], 0
    %s75 = scalar_lea.sflag [#allocation4], 1
    %76 = vsyncpa %s75, 0
    loop: start=0, step=1, limit=4
    $region2: #{autoformer_forward.1} parent=1 // loop_pre_header
      _
    $region3: #{autoformer_forward.1} parent=1 // loop_header
      %s78 = sphi 0, %s82
      %p79 = scmp.ge.s32.totalorder %s78, 4
      %s88 = sphi 0, %s90
      %s91 = sphi 0, %s88
      %s92 = sphi 0, %s91
      %s108 = sphi 0, %s92
      %s112 = sphi 0, %s112
      %s114 = sphi 0, %s112
      %s115 = sphi 0, %s114
      %s129 = sphi 0, %s115
      %s133 = sphi 0, %s133
      %s135 = sphi 0, %s133
      %s136 = sphi 0, %s135
      %s150 = sphi 0, %s136
      %s154 = sphi 0, %s154
      %s156 = sphi 0, %s154
      %s157 = sphi 0, %s156
      %s171 = sphi 0, %s157
      %s175 = sphi 0, %s175
      %s177 = sphi 0, %s175
      %s178 = sphi 0, %s177
      %s192 = sphi 0, %s178
      %s196 = sphi 0, %s196
      %s198 = sphi 0, %s196
      %s199 = sphi 0, %s198
      %s213 = sphi 0, %s199
      %s217 = sphi 0, %s217
      %s219 = sphi 0, %s217
      %s220 = sphi 0, %s219
      %s234 = sphi 0, %s220
      %s238 = sphi 0, %s238
      %s240 = sphi 0, %s238
      %s241 = sphi 0, %s240
      %s255 = sphi 0, %s241
      %s259 = sphi 0, %s259
      %s261 = sphi 0, %s259
      %s262 = sphi 0, %s261
      %s276 = sphi 0, %s262
      %s280 = sphi 0, %s280
      %s282 = sphi 0, %s280
      %s283 = sphi 0, %s282
      %s297 = sphi 0, %s283
      %s301 = sphi 0, %s301
      %s303 = sphi 0, %s301
      %s304 = sphi 0, %s303
      %s318 = sphi 0, %s304
      %s322 = sphi 0, %s322
      %s324 = sphi 0, %s322
      %s325 = sphi 0, %s324
      %s339 = sphi 0, %s325
      %s343 = sphi 0, %s343
      %s345 = sphi 0, %s343
      %s346 = sphi 0, %s345
      %s360 = sphi 0, %s346
      %s364 = sphi 0, %s364
      %s366 = sphi 0, %s364
      %s367 = sphi 0, %s366
      %s381 = sphi 0, %s367
      %s385 = sphi 0, %s385
      %s387 = sphi 0, %s385
      %s388 = sphi 0, %s387
      %s402 = sphi 0, %s388
      %s406 = sphi 0, %s406
      %s408 = sphi 0, %s406
      %s409 = sphi 0, %s408
      %s423 = sphi 0, %s409
      %s427 = sphi 0, %s427
      %s429 = sphi 0, %s427
      %s430 = sphi 0, %s429
      %s444 = sphi 0, %s430
      %s448 = sphi 0, %s448
      %s450 = sphi 0, %s448
      %s451 = sphi 0, %s450
      %s465 = sphi 0, %s451
      %s469 = sphi 0, %s469
      %s471 = sphi 0, %s469
      %s472 = sphi 0, %s471
      %s486 = sphi 0, %s472
      %s490 = sphi 0, %s490
      %s492 = sphi 0, %s490
      %s493 = sphi 0, %s492
      %s507 = sphi 0, %s493
      %s511 = sphi 0, %s511
      %s513 = sphi 0, %s511
      %s514 = sphi 0, %s513
      %s528 = sphi 0, %s514
      %s532 = sphi 0, %s532
      %s534 = sphi 0, %s532
      %s535 = sphi 0, %s534
      %s549 = sphi 0, %s535
      %s553 = sphi 0, %s553
      %s555 = sphi 0, %s553
      %s556 = sphi 0, %s555
      %s570 = sphi 0, %s556
      %s574 = sphi 0, %s574
      %s576 = sphi 0, %s574
      %s577 = sphi 0, %s576
      %s591 = sphi 0, %s577
      %s595 = sphi 0, %s595
      %s597 = sphi 0, %s595
      %s598 = sphi 0, %s597
      %s612 = sphi 0, %s598
      %s616 = sphi 0, %s616
      %s618 = sphi 0, %s616
      %s619 = sphi 0, %s618
      %s633 = sphi 0, %s619
      %s637 = sphi 0, %s637
      %s639 = sphi 0, %s637
      %s640 = sphi 0, %s639
      %s654 = sphi 0, %s640
      %s658 = sphi 0, %s658
      %s660 = sphi 0, %s658
      %s661 = sphi 0, %s660
      %s675 = sphi 0, %s661
      %s679 = sphi 0, %s679
      %s681 = sphi 0, %s679
      %s682 = sphi 0, %s681
      %s696 = sphi 0, %s682
      %s700 = sphi 0, %s700
      %s702 = sphi 0, %s700
      %s703 = sphi 0, %s702
      %s717 = sphi 0, %s703
      %s721 = sphi 0, %s721
      %s723 = sphi 0, %s721
      %s724 = sphi 0, %s723
      %s738 = sphi 0, %s724
      %s744 = sphi 0, %s746
      %s747 = sphi 0, %s744
      %s748 = sphi 0, %s747
      %s764 = sphi 0, %s748
    $region4: #{autoformer_forward.1} parent=1 // loop_header_branch
      %81 = sbr.rel (%p79) target = $region8
    $region5: #{autoformer_forward.1} parent=1 // loop_body
      %s83 = ssub.s32 %s78, 1
      %s84 = ssub.s32 %s78, 2
      %s85 = sadd.s32 %s78, 1
      %s86 = ssub.s32 %s78, %s85
      %p87 = scmp.eq.s32.totalorder %s86, 0
      %s89 = sadd.s32 %s88, 1
      %s90 = scalar_select %p87, %s88, %s89
      %p93 = pneg %p87
      %p94 = scmp.eq.s32.totalorder %s78, 1
      %p95 = por %p93, %p94
      %p96 = scmp.ne.s32.totalorder %s88, %s91
      %p97 = scmp.eq.s32.totalorder %s78, 0
      %p98 = por %p96, %p97
      %p99 = scmp.ne.s32.totalorder %s88, %s91
      %p100 = scmp.eq.s32.totalorder %s83, 1
      %p101 = por %p99, %p100
      %p102 = scmp.ne.s32.totalorder %s91, %s92
      %p103 = scmp.eq.s32.totalorder %s83, 0
      %p104 = por %p102, %p103
      %p105 = scmp.ne.s32.totalorder %s91, %s92
      %p106 = scmp.eq.s32.totalorder %s84, 1
      %p107 = por %p105, %p106
      %p109 = scmp.ne.s32.totalorder %s92, %s108
      %p110 = scmp.eq.s32.totalorder %s84, 0
      %p111 = por %p109, %p110
      %s113 = sadd.s32 %s112, 1
      %p116 = scmp.eq.s32.totalorder %s78, 1
      %p117 = scmp.ne.s32.totalorder %s112, %s114
      %p118 = scmp.eq.s32.totalorder %s78, 0
      %p119 = por %p117, %p118
      %p120 = scmp.ne.s32.totalorder %s112, %s114
      %p121 = scmp.eq.s32.totalorder %s83, 1
      %p122 = por %p120, %p121
      %p123 = scmp.ne.s32.totalorder %s114, %s115
      %p124 = scmp.eq.s32.totalorder %s83, 0
      %p125 = por %p123, %p124
      %p126 = scmp.ne.s32.totalorder %s114, %s115
      %p127 = scmp.eq.s32.totalorder %s84, 1
      %p128 = por %p126, %p127
      %p130 = scmp.ne.s32.totalorder %s115, %s129
      %p131 = scmp.eq.s32.totalorder %s84, 0
      %p132 = por %p130, %p131
      %s134 = sadd.s32 %s133, 1
      %p137 = scmp.eq.s32.totalorder %s78, 1
      %p138 = scmp.ne.s32.totalorder %s133, %s135
      %p139 = scmp.eq.s32.totalorder %s78, 0
      %p140 = por %p138, %p139
      %p141 = scmp.ne.s32.totalorder %s133, %s135
      %p142 = scmp.eq.s32.totalorder %s83, 1
      %p143 = por %p141, %p142
      %p144 = scmp.ne.s32.totalorder %s135, %s136
      %p145 = scmp.eq.s32.totalorder %s83, 0
      %p146 = por %p144, %p145
      %p147 = scmp.ne.s32.totalorder %s135, %s136
      %p148 = scmp.eq.s32.totalorder %s84, 1
      %p149 = por %p147, %p148
      %p151 = scmp.ne.s32.totalorder %s136, %s150
      %p152 = scmp.eq.s32.totalorder %s84, 0
      %p153 = por %p151, %p152
      %s155 = sadd.s32 %s154, 1
      %p158 = scmp.eq.s32.totalorder %s78, 1
      %p159 = scmp.ne.s32.totalorder %s154, %s156
      %p160 = scmp.eq.s32.totalorder %s78, 0
      %p161 = por %p159, %p160
      %p162 = scmp.ne.s32.totalorder %s154, %s156
      %p163 = scmp.eq.s32.totalorder %s83, 1
      %p164 = por %p162, %p163
      %p165 = scmp.ne.s32.totalorder %s156, %s157
      %p166 = scmp.eq.s32.totalorder %s83, 0
      %p167 = por %p165, %p166
      %p168 = scmp.ne.s32.totalorder %s156, %s157
      %p169 = scmp.eq.s32.totalorder %s84, 1
      %p170 = por %p168, %p169
      %p172 = scmp.ne.s32.totalorder %s157, %s171
      %p173 = scmp.eq.s32.totalorder %s84, 0
      %p174 = por %p172, %p173
      %s176 = sadd.s32 %s175, 1
      %p179 = scmp.eq.s32.totalorder %s78, 1
      %p180 = scmp.ne.s32.totalorder %s175, %s177
      %p181 = scmp.eq.s32.totalorder %s78, 0
      %p182 = por %p180, %p181
      %p183 = scmp.ne.s32.totalorder %s175, %s177
      %p184 = scmp.eq.s32.totalorder %s83, 1
      %p185 = por %p183, %p184
      %p186 = scmp.ne.s32.totalorder %s177, %s178
      %p187 = scmp.eq.s32.totalorder %s83, 0
      %p188 = por %p186, %p187
      %p189 = scmp.ne.s32.totalorder %s177, %s178
      %p190 = scmp.eq.s32.totalorder %s84, 1
      %p191 = por %p189, %p190
      %p193 = scmp.ne.s32.totalorder %s178, %s192
      %p194 = scmp.eq.s32.totalorder %s84, 0
      %p195 = por %p193, %p194
      %s197 = sadd.s32 %s196, 1
      %p200 = scmp.eq.s32.totalorder %s78, 1
      %p201 = scmp.ne.s32.totalorder %s196, %s198
      %p202 = scmp.eq.s32.totalorder %s78, 0
      %p203 = por %p201, %p202
      %p204 = scmp.ne.s32.totalorder %s196, %s198
      %p205 = scmp.eq.s32.totalorder %s83, 1
      %p206 = por %p204, %p205
      %p207 = scmp.ne.s32.totalorder %s198, %s199
      %p208 = scmp.eq.s32.totalorder %s83, 0
      %p209 = por %p207, %p208
      %p210 = scmp.ne.s32.totalorder %s198, %s199
      %p211 = scmp.eq.s32.totalorder %s84, 1
      %p212 = por %p210, %p211
      %p214 = scmp.ne.s32.totalorder %s199, %s213
      %p215 = scmp.eq.s32.totalorder %s84, 0
      %p216 = por %p214, %p215
      %s218 = sadd.s32 %s217, 1
      %p221 = scmp.eq.s32.totalorder %s78, 1
      %p222 = scmp.ne.s32.totalorder %s217, %s219
      %p223 = scmp.eq.s32.totalorder %s78, 0
      %p224 = por %p222, %p223
      %p225 = scmp.ne.s32.totalorder %s217, %s219
      %p226 = scmp.eq.s32.totalorder %s83, 1
      %p227 = por %p225, %p226
      %p228 = scmp.ne.s32.totalorder %s219, %s220
      %p229 = scmp.eq.s32.totalorder %s83, 0
      %p230 = por %p228, %p229
      %p231 = scmp.ne.s32.totalorder %s219, %s220
      %p232 = scmp.eq.s32.totalorder %s84, 1
      %p233 = por %p231, %p232
      %p235 = scmp.ne.s32.totalorder %s220, %s234
      %p236 = scmp.eq.s32.totalorder %s84, 0
      %p237 = por %p235, %p236
      %s239 = sadd.s32 %s238, 1
      %p242 = scmp.eq.s32.totalorder %s78, 1
      %p243 = scmp.ne.s32.totalorder %s238, %s240
      %p244 = scmp.eq.s32.totalorder %s78, 0
      %p245 = por %p243, %p244
      %p246 = scmp.ne.s32.totalorder %s238, %s240
      %p247 = scmp.eq.s32.totalorder %s83, 1
      %p248 = por %p246, %p247
      %p249 = scmp.ne.s32.totalorder %s240, %s241
      %p250 = scmp.eq.s32.totalorder %s83, 0
      %p251 = por %p249, %p250
      %p252 = scmp.ne.s32.totalorder %s240, %s241
      %p253 = scmp.eq.s32.totalorder %s84, 1
      %p254 = por %p252, %p253
      %p256 = scmp.ne.s32.totalorder %s241, %s255
      %p257 = scmp.eq.s32.totalorder %s84, 0
      %p258 = por %p256, %p257
      %s260 = sadd.s32 %s259, 1
      %p263 = scmp.eq.s32.totalorder %s78, 1
      %p264 = scmp.ne.s32.totalorder %s259, %s261
      %p265 = scmp.eq.s32.totalorder %s78, 0
      %p266 = por %p264, %p265
      %p267 = scmp.ne.s32.totalorder %s259, %s261
      %p268 = scmp.eq.s32.totalorder %s83, 1
      %p269 = por %p267, %p268
      %p270 = scmp.ne.s32.totalorder %s261, %s262
      %p271 = scmp.eq.s32.totalorder %s83, 0
      %p272 = por %p270, %p271
      %p273 = scmp.ne.s32.totalorder %s261, %s262
      %p274 = scmp.eq.s32.totalorder %s84, 1
      %p275 = por %p273, %p274
      %p277 = scmp.ne.s32.totalorder %s262, %s276
      %p278 = scmp.eq.s32.totalorder %s84, 0
      %p279 = por %p277, %p278
      %s281 = sadd.s32 %s280, 1
      %p284 = scmp.eq.s32.totalorder %s78, 1
      %p285 = scmp.ne.s32.totalorder %s280, %s282
      %p286 = scmp.eq.s32.totalorder %s78, 0
      %p287 = por %p285, %p286
      %p288 = scmp.ne.s32.totalorder %s280, %s282
      %p289 = scmp.eq.s32.totalorder %s83, 1
      %p290 = por %p288, %p289
      %p291 = scmp.ne.s32.totalorder %s282, %s283
      %p292 = scmp.eq.s32.totalorder %s83, 0
      %p293 = por %p291, %p292
      %p294 = scmp.ne.s32.totalorder %s282, %s283
      %p295 = scmp.eq.s32.totalorder %s84, 1
      %p296 = por %p294, %p295
      %p298 = scmp.ne.s32.totalorder %s283, %s297
      %p299 = scmp.eq.s32.totalorder %s84, 0
      %p300 = por %p298, %p299
      %s302 = sadd.s32 %s301, 1
      %p305 = scmp.eq.s32.totalorder %s78, 1
      %p306 = scmp.ne.s32.totalorder %s301, %s303
      %p307 = scmp.eq.s32.totalorder %s78, 0
      %p308 = por %p306, %p307
      %p309 = scmp.ne.s32.totalorder %s301, %s303
      %p310 = scmp.eq.s32.totalorder %s83, 1
      %p311 = por %p309, %p310
      %p312 = scmp.ne.s32.totalorder %s303, %s304
      %p313 = scmp.eq.s32.totalorder %s83, 0
      %p314 = por %p312, %p313
      %p315 = scmp.ne.s32.totalorder %s303, %s304
      %p316 = scmp.eq.s32.totalorder %s84, 1
      %p317 = por %p315, %p316
      %p319 = scmp.ne.s32.totalorder %s304, %s318
      %p320 = scmp.eq.s32.totalorder %s84, 0
      %p321 = por %p319, %p320
      %s323 = sadd.s32 %s322, 1
      %p326 = scmp.eq.s32.totalorder %s78, 1
      %p327 = scmp.ne.s32.totalorder %s322, %s324
      %p328 = scmp.eq.s32.totalorder %s78, 0
      %p329 = por %p327, %p328
      %p330 = scmp.ne.s32.totalorder %s322, %s324
      %p331 = scmp.eq.s32.totalorder %s83, 1
      %p332 = por %p330, %p331
      %p333 = scmp.ne.s32.totalorder %s324, %s325
      %p334 = scmp.eq.s32.totalorder %s83, 0
      %p335 = por %p333, %p334
      %p336 = scmp.ne.s32.totalorder %s324, %s325
      %p337 = scmp.eq.s32.totalorder %s84, 1
      %p338 = por %p336, %p337
      %p340 = scmp.ne.s32.totalorder %s325, %s339
      %p341 = scmp.eq.s32.totalorder %s84, 0
      %p342 = por %p340, %p341
      %s344 = sadd.s32 %s343, 1
      %p347 = scmp.eq.s32.totalorder %s78, 1
      %p348 = scmp.ne.s32.totalorder %s343, %s345
      %p349 = scmp.eq.s32.totalorder %s78, 0
      %p350 = por %p348, %p349
      %p351 = scmp.ne.s32.totalorder %s343, %s345
      %p352 = scmp.eq.s32.totalorder %s83, 1
      %p353 = por %p351, %p352
      %p354 = scmp.ne.s32.totalorder %s345, %s346
      %p355 = scmp.eq.s32.totalorder %s83, 0
      %p356 = por %p354, %p355
      %p357 = scmp.ne.s32.totalorder %s345, %s346
      %p358 = scmp.eq.s32.totalorder %s84, 1
      %p359 = por %p357, %p358
      %p361 = scmp.ne.s32.totalorder %s346, %s360
      %p362 = scmp.eq.s32.totalorder %s84, 0
      %p363 = por %p361, %p362
      %s365 = sadd.s32 %s364, 1
      %p368 = scmp.eq.s32.totalorder %s78, 1
      %p369 = scmp.ne.s32.totalorder %s364, %s366
      %p370 = scmp.eq.s32.totalorder %s78, 0
      %p371 = por %p369, %p370
      %p372 = scmp.ne.s32.totalorder %s364, %s366
      %p373 = scmp.eq.s32.totalorder %s83, 1
      %p374 = por %p372, %p373
      %p375 = scmp.ne.s32.totalorder %s366, %s367
      %p376 = scmp.eq.s32.totalorder %s83, 0
      %p377 = por %p375, %p376
      %p378 = scmp.ne.s32.totalorder %s366, %s367
      %p379 = scmp.eq.s32.totalorder %s84, 1
      %p380 = por %p378, %p379
      %p382 = scmp.ne.s32.totalorder %s367, %s381
      %p383 = scmp.eq.s32.totalorder %s84, 0
      %p384 = por %p382, %p383
      %s386 = sadd.s32 %s385, 1
      %p389 = scmp.eq.s32.totalorder %s78, 1
      %p390 = scmp.ne.s32.totalorder %s385, %s387
      %p391 = scmp.eq.s32.totalorder %s78, 0
      %p392 = por %p390, %p391
      %p393 = scmp.ne.s32.totalorder %s385, %s387
      %p394 = scmp.eq.s32.totalorder %s83, 1
      %p395 = por %p393, %p394
      %p396 = scmp.ne.s32.totalorder %s387, %s388
      %p397 = scmp.eq.s32.totalorder %s83, 0
      %p398 = por %p396, %p397
      %p399 = scmp.ne.s32.totalorder %s387, %s388
      %p400 = scmp.eq.s32.totalorder %s84, 1
      %p401 = por %p399, %p400
      %p403 = scmp.ne.s32.totalorder %s388, %s402
      %p404 = scmp.eq.s32.totalorder %s84, 0
      %p405 = por %p403, %p404
      %s407 = sadd.s32 %s406, 1
      %p410 = scmp.eq.s32.totalorder %s78, 1
      %p411 = scmp.ne.s32.totalorder %s406, %s408
      %p412 = scmp.eq.s32.totalorder %s78, 0
      %p413 = por %p411, %p412
      %p414 = scmp.ne.s32.totalorder %s406, %s408
      %p415 = scmp.eq.s32.totalorder %s83, 1
      %p416 = por %p414, %p415
      %p417 = scmp.ne.s32.totalorder %s408, %s409
      %p418 = scmp.eq.s32.totalorder %s83, 0
      %p419 = por %p417, %p418
      %p420 = scmp.ne.s32.totalorder %s408, %s409
      %p421 = scmp.eq.s32.totalorder %s84, 1
      %p422 = por %p420, %p421
      %p424 = scmp.ne.s32.totalorder %s409, %s423
      %p425 = scmp.eq.s32.totalorder %s84, 0
      %p426 = por %p424, %p425
      %s428 = sadd.s32 %s427, 1
      %p431 = scmp.eq.s32.totalorder %s78, 1
      %p432 = scmp.ne.s32.totalorder %s427, %s429
      %p433 = scmp.eq.s32.totalorder %s78, 0
      %p434 = por %p432, %p433
      %p435 = scmp.ne.s32.totalorder %s427, %s429
      %p436 = scmp.eq.s32.totalorder %s83, 1
      %p437 = por %p435, %p436
      %p438 = scmp.ne.s32.totalorder %s429, %s430
      %p439 = scmp.eq.s32.totalorder %s83, 0
      %p440 = por %p438, %p439
      %p441 = scmp.ne.s32.totalorder %s429, %s430
      %p442 = scmp.eq.s32.totalorder %s84, 1
      %p443 = por %p441, %p442
      %p445 = scmp.ne.s32.totalorder %s430, %s444
      %p446 = scmp.eq.s32.totalorder %s84, 0
      %p447 = por %p445, %p446
      %s449 = sadd.s32 %s448, 1
      %p452 = scmp.eq.s32.totalorder %s78, 1
      %p453 = scmp.ne.s32.totalorder %s448, %s450
      %p454 = scmp.eq.s32.totalorder %s78, 0
      %p455 = por %p453, %p454
      %p456 = scmp.ne.s32.totalorder %s448, %s450
      %p457 = scmp.eq.s32.totalorder %s83, 1
      %p458 = por %p456, %p457
      %p459 = scmp.ne.s32.totalorder %s450, %s451
      %p460 = scmp.eq.s32.totalorder %s83, 0
      %p461 = por %p459, %p460
      %p462 = scmp.ne.s32.totalorder %s450, %s451
      %p463 = scmp.eq.s32.totalorder %s84, 1
      %p464 = por %p462, %p463
      %p466 = scmp.ne.s32.totalorder %s451, %s465
      %p467 = scmp.eq.s32.totalorder %s84, 0
      %p468 = por %p466, %p467
      %s470 = sadd.s32 %s469, 1
      %p473 = scmp.eq.s32.totalorder %s78, 1
      %p474 = scmp.ne.s32.totalorder %s469, %s471
      %p475 = scmp.eq.s32.totalorder %s78, 0
      %p476 = por %p474, %p475
      %p477 = scmp.ne.s32.totalorder %s469, %s471
      %p478 = scmp.eq.s32.totalorder %s83, 1
      %p479 = por %p477, %p478
      %p480 = scmp.ne.s32.totalorder %s471, %s472
      %p481 = scmp.eq.s32.totalorder %s83, 0
      %p482 = por %p480, %p481
      %p483 = scmp.ne.s32.totalorder %s471, %s472
      %p484 = scmp.eq.s32.totalorder %s84, 1
      %p485 = por %p483, %p484
      %p487 = scmp.ne.s32.totalorder %s472, %s486
      %p488 = scmp.eq.s32.totalorder %s84, 0
      %p489 = por %p487, %p488
      %s491 = sadd.s32 %s490, 1
      %p494 = scmp.eq.s32.totalorder %s78, 1
      %p495 = scmp.ne.s32.totalorder %s490, %s492
      %p496 = scmp.eq.s32.totalorder %s78, 0
      %p497 = por %p495, %p496
      %p498 = scmp.ne.s32.totalorder %s490, %s492
      %p499 = scmp.eq.s32.totalorder %s83, 1
      %p500 = por %p498, %p499
      %p501 = scmp.ne.s32.totalorder %s492, %s493
      %p502 = scmp.eq.s32.totalorder %s83, 0
      %p503 = por %p501, %p502
      %p504 = scmp.ne.s32.totalorder %s492, %s493
      %p505 = scmp.eq.s32.totalorder %s84, 1
      %p506 = por %p504, %p505
      %p508 = scmp.ne.s32.totalorder %s493, %s507
      %p509 = scmp.eq.s32.totalorder %s84, 0
      %p510 = por %p508, %p509
      %s512 = sadd.s32 %s511, 1
      %p515 = scmp.eq.s32.totalorder %s78, 1
      %p516 = scmp.ne.s32.totalorder %s511, %s513
      %p517 = scmp.eq.s32.totalorder %s78, 0
      %p518 = por %p516, %p517
      %p519 = scmp.ne.s32.totalorder %s511, %s513
      %p520 = scmp.eq.s32.totalorder %s83, 1
      %p521 = por %p519, %p520
      %p522 = scmp.ne.s32.totalorder %s513, %s514
      %p523 = scmp.eq.s32.totalorder %s83, 0
      %p524 = por %p522, %p523
      %p525 = scmp.ne.s32.totalorder %s513, %s514
      %p526 = scmp.eq.s32.totalorder %s84, 1
      %p527 = por %p525, %p526
      %p529 = scmp.ne.s32.totalorder %s514, %s528
      %p530 = scmp.eq.s32.totalorder %s84, 0
      %p531 = por %p529, %p530
      %s533 = sadd.s32 %s532, 1
      %p536 = scmp.eq.s32.totalorder %s78, 1
      %p537 = scmp.ne.s32.totalorder %s532, %s534
      %p538 = scmp.eq.s32.totalorder %s78, 0
      %p539 = por %p537, %p538
      %p540 = scmp.ne.s32.totalorder %s532, %s534
      %p541 = scmp.eq.s32.totalorder %s83, 1
      %p542 = por %p540, %p541
      %p543 = scmp.ne.s32.totalorder %s534, %s535
      %p544 = scmp.eq.s32.totalorder %s83, 0
      %p545 = por %p543, %p544
      %p546 = scmp.ne.s32.totalorder %s534, %s535
      %p547 = scmp.eq.s32.totalorder %s84, 1
      %p548 = por %p546, %p547
      %p550 = scmp.ne.s32.totalorder %s535, %s549
      %p551 = scmp.eq.s32.totalorder %s84, 0
      %p552 = por %p550, %p551
      %s554 = sadd.s32 %s553, 1
      %p557 = scmp.eq.s32.totalorder %s78, 1
      %p558 = scmp.ne.s32.totalorder %s553, %s555
      %p559 = scmp.eq.s32.totalorder %s78, 0
      %p560 = por %p558, %p559
      %p561 = scmp.ne.s32.totalorder %s553, %s555
      %p562 = scmp.eq.s32.totalorder %s83, 1
      %p563 = por %p561, %p562
      %p564 = scmp.ne.s32.totalorder %s555, %s556
      %p565 = scmp.eq.s32.totalorder %s83, 0
      %p566 = por %p564, %p565
      %p567 = scmp.ne.s32.totalorder %s555, %s556
      %p568 = scmp.eq.s32.totalorder %s84, 1
      %p569 = por %p567, %p568
      %p571 = scmp.ne.s32.totalorder %s556, %s570
      %p572 = scmp.eq.s32.totalorder %s84, 0
      %p573 = por %p571, %p572
      %s575 = sadd.s32 %s574, 1
      %p578 = scmp.eq.s32.totalorder %s78, 1
      %p579 = scmp.ne.s32.totalorder %s574, %s576
      %p580 = scmp.eq.s32.totalorder %s78, 0
      %p581 = por %p579, %p580
      %p582 = scmp.ne.s32.totalorder %s574, %s576
      %p583 = scmp.eq.s32.totalorder %s83, 1
      %p584 = por %p582, %p583
      %p585 = scmp.ne.s32.totalorder %s576, %s577
      %p586 = scmp.eq.s32.totalorder %s83, 0
      %p587 = por %p585, %p586
      %p588 = scmp.ne.s32.totalorder %s576, %s577
      %p589 = scmp.eq.s32.totalorder %s84, 1
      %p590 = por %p588, %p589
      %p592 = scmp.ne.s32.totalorder %s577, %s591
      %p593 = scmp.eq.s32.totalorder %s84, 0
      %p594 = por %p592, %p593
      %s596 = sadd.s32 %s595, 1
      %p599 = scmp.eq.s32.totalorder %s78, 1
      %p600 = scmp.ne.s32.totalorder %s595, %s597
      %p601 = scmp.eq.s32.totalorder %s78, 0
      %p602 = por %p600, %p601
      %p603 = scmp.ne.s32.totalorder %s595, %s597
      %p604 = scmp.eq.s32.totalorder %s83, 1
      %p605 = por %p603, %p604
      %p606 = scmp.ne.s32.totalorder %s597, %s598
      %p607 = scmp.eq.s32.totalorder %s83, 0
      %p608 = por %p606, %p607
      %p609 = scmp.ne.s32.totalorder %s597, %s598
      %p610 = scmp.eq.s32.totalorder %s84, 1
      %p611 = por %p609, %p610
      %p613 = scmp.ne.s32.totalorder %s598, %s612
      %p614 = scmp.eq.s32.totalorder %s84, 0
      %p615 = por %p613, %p614
      %s617 = sadd.s32 %s616, 1
      %p620 = scmp.eq.s32.totalorder %s78, 1
      %p621 = scmp.ne.s32.totalorder %s616, %s618
      %p622 = scmp.eq.s32.totalorder %s78, 0
      %p623 = por %p621, %p622
      %p624 = scmp.ne.s32.totalorder %s616, %s618
      %p625 = scmp.eq.s32.totalorder %s83, 1
      %p626 = por %p624, %p625
      %p627 = scmp.ne.s32.totalorder %s618, %s619
      %p628 = scmp.eq.s32.totalorder %s83, 0
      %p629 = por %p627, %p628
      %p630 = scmp.ne.s32.totalorder %s618, %s619
      %p631 = scmp.eq.s32.totalorder %s84, 1
      %p632 = por %p630, %p631
      %p634 = scmp.ne.s32.totalorder %s619, %s633
      %p635 = scmp.eq.s32.totalorder %s84, 0
      %p636 = por %p634, %p635
      %s638 = sadd.s32 %s637, 1
      %p641 = scmp.eq.s32.totalorder %s78, 1
      %p642 = scmp.ne.s32.totalorder %s637, %s639
      %p643 = scmp.eq.s32.totalorder %s78, 0
      %p644 = por %p642, %p643
      %p645 = scmp.ne.s32.totalorder %s637, %s639
      %p646 = scmp.eq.s32.totalorder %s83, 1
      %p647 = por %p645, %p646
      %p648 = scmp.ne.s32.totalorder %s639, %s640
      %p649 = scmp.eq.s32.totalorder %s83, 0
      %p650 = por %p648, %p649
      %p651 = scmp.ne.s32.totalorder %s639, %s640
      %p652 = scmp.eq.s32.totalorder %s84, 1
      %p653 = por %p651, %p652
      %p655 = scmp.ne.s32.totalorder %s640, %s654
      %p656 = scmp.eq.s32.totalorder %s84, 0
      %p657 = por %p655, %p656
      %s659 = sadd.s32 %s658, 1
      %p662 = scmp.eq.s32.totalorder %s78, 1
      %p663 = scmp.ne.s32.totalorder %s658, %s660
      %p664 = scmp.eq.s32.totalorder %s78, 0
      %p665 = por %p663, %p664
      %p666 = scmp.ne.s32.totalorder %s658, %s660
      %p667 = scmp.eq.s32.totalorder %s83, 1
      %p668 = por %p666, %p667
      %p669 = scmp.ne.s32.totalorder %s660, %s661
      %p670 = scmp.eq.s32.totalorder %s83, 0
      %p671 = por %p669, %p670
      %p672 = scmp.ne.s32.totalorder %s660, %s661
      %p673 = scmp.eq.s32.totalorder %s84, 1
      %p674 = por %p672, %p673
      %p676 = scmp.ne.s32.totalorder %s661, %s675
      %p677 = scmp.eq.s32.totalorder %s84, 0
      %p678 = por %p676, %p677
      %s680 = sadd.s32 %s679, 1
      %p683 = scmp.eq.s32.totalorder %s78, 1
      %p684 = scmp.ne.s32.totalorder %s679, %s681
      %p685 = scmp.eq.s32.totalorder %s78, 0
      %p686 = por %p684, %p685
      %p687 = scmp.ne.s32.totalorder %s679, %s681
      %p688 = scmp.eq.s32.totalorder %s83, 1
      %p689 = por %p687, %p688
      %p690 = scmp.ne.s32.totalorder %s681, %s682
      %p691 = scmp.eq.s32.totalorder %s83, 0
      %p692 = por %p690, %p691
      %p693 = scmp.ne.s32.totalorder %s681, %s682
      %p694 = scmp.eq.s32.totalorder %s84, 1
      %p695 = por %p693, %p694
      %p697 = scmp.ne.s32.totalorder %s682, %s696
      %p698 = scmp.eq.s32.totalorder %s84, 0
      %p699 = por %p697, %p698
      %s701 = sadd.s32 %s700, 1
      %p704 = scmp.eq.s32.totalorder %s78, 1
      %p705 = scmp.ne.s32.totalorder %s700, %s702
      %p706 = scmp.eq.s32.totalorder %s78, 0
      %p707 = por %p705, %p706
      %p708 = scmp.ne.s32.totalorder %s700, %s702
      %p709 = scmp.eq.s32.totalorder %s83, 1
      %p710 = por %p708, %p709
      %p711 = scmp.ne.s32.totalorder %s702, %s703
      %p712 = scmp.eq.s32.totalorder %s83, 0
      %p713 = por %p711, %p712
      %p714 = scmp.ne.s32.totalorder %s702, %s703
      %p715 = scmp.eq.s32.totalorder %s84, 1
      %p716 = por %p714, %p715
      %p718 = scmp.ne.s32.totalorder %s703, %s717
      %p719 = scmp.eq.s32.totalorder %s84, 0
      %p720 = por %p718, %p719
      %s722 = sadd.s32 %s721, 1
      %p725 = scmp.eq.s32.totalorder %s78, 1
      %p726 = scmp.ne.s32.totalorder %s721, %s723
      %p727 = scmp.eq.s32.totalorder %s78, 0
      %p728 = por %p726, %p727
      %p729 = scmp.ne.s32.totalorder %s721, %s723
      %p730 = scmp.eq.s32.totalorder %s83, 1
      %p731 = por %p729, %p730
      %p732 = scmp.ne.s32.totalorder %s723, %s724
      %p733 = scmp.eq.s32.totalorder %s83, 0
      %p734 = por %p732, %p733
      %p735 = scmp.ne.s32.totalorder %s723, %s724
      %p736 = scmp.eq.s32.totalorder %s84, 1
      %p737 = por %p735, %p736
      %p739 = scmp.ne.s32.totalorder %s724, %s738
      %p740 = scmp.eq.s32.totalorder %s84, 0
      %p741 = por %p739, %p740
      %s742 = ssub.s32 %s78, %s85
      %p743 = scmp.eq.s32.totalorder %s742, 0
      %s745 = sadd.s32 %s744, 1
      %s746 = scalar_select %p743, %s744, %s745
      %p749 = pneg %p743
      %p750 = scmp.eq.s32.totalorder %s78, 1
      %p751 = por %p749, %p750
      %p752 = scmp.ne.s32.totalorder %s744, %s747
      %p753 = scmp.eq.s32.totalorder %s78, 0
      %p754 = por %p752, %p753
      %p755 = scmp.ne.s32.totalorder %s744, %s747
      %p756 = scmp.eq.s32.totalorder %s83, 1
      %p757 = por %p755, %p756
      %p758 = scmp.ne.s32.totalorder %s747, %s748
      %p759 = scmp.eq.s32.totalorder %s83, 0
      %p760 = por %p758, %p759
      %p761 = scmp.ne.s32.totalorder %s747, %s748
      %p762 = scmp.eq.s32.totalorder %s84, 1
      %p763 = por %p761, %p762
      %p765 = scmp.ne.s32.totalorder %s748, %s764
      %p766 = scmp.eq.s32.totalorder %s84, 0
      %p767 = por %p765, %p766
      %p768 = scmp.le.s32.totalorder 1, %s78
      %p769 = scmp.lt.s32.totalorder %s78, 3
      %p770 = pnand %p768, %p769
      %p771 = pneg %p770
      // Predicated region
      $region9: #{autoformer_forward.1} parent=5 // pred_check
        _
      $region10: #{autoformer_forward.1} parent=5 // pred_check_branch
        %773 = sbr.rel (%p770) target = $region12
      $region11: #{autoformer_forward.1} parent=5 // pred_region
        %s774 = ssub.s32 %s78, 1
        // Predicated region
        $region13: #{autoformer_forward.1} parent=11 // pred_check
          %p775 = pneg %p125
        $region14: #{autoformer_forward.1} parent=11 // pred_check_branch
          %777 = sbr.rel (%p775) target = $region16
        $region15: #{autoformer_forward.1} parent=11 // pred_region
          _
        $region16: #{autoformer_forward.1} parent=11 // pred_fallthru
          _
        // Predicated region
        $region17: #{autoformer_forward.1} parent=11 // pred_check
          %p778 = pneg %p146
        $region18: #{autoformer_forward.1} parent=11 // pred_check_branch
          %780 = sbr.rel (%p778) target = $region20
        $region19: #{autoformer_forward.1} parent=11 // pred_region
          _
        $region20: #{autoformer_forward.1} parent=11 // pred_fallthru
          _
        // Predicated region
        $region21: #{autoformer_forward.1} parent=11 // pred_check
          %p781 = pneg %p167
        $region22: #{autoformer_forward.1} parent=11 // pred_check_branch
          %783 = sbr.rel (%p781) target = $region24
        $region23: #{autoformer_forward.1} parent=11 // pred_region
          _
        $region24: #{autoformer_forward.1} parent=11 // pred_fallthru
          _
        // Predicated region
        $region25: #{autoformer_forward.1} parent=11 // pred_check
          %p784 = pneg %p188
        $region26: #{autoformer_forward.1} parent=11 // pred_check_branch
          %786 = sbr.rel (%p784) target = $region28
        $region27: #{autoformer_forward.1} parent=11 // pred_region
          _
        $region28: #{autoformer_forward.1} parent=11 // pred_fallthru
          _
        // Predicated region
        $region29: #{autoformer_forward.1} parent=11 // pred_check
          %p787 = pneg %p209
        $region30: #{autoformer_forward.1} parent=11 // pred_check_branch
          %789 = sbr.rel (%p787) target = $region32
        $region31: #{autoformer_forward.1} parent=11 // pred_region
          %s791 = ssub.s32 6144, 6144
          %792 = vsyncadd [#allocation3], %s791
          %s793 = sshll.u32 [#allocation2], 4
          %s794 = int_to_ptr.vmem [resolvable:$true] %s793
          %799 = dma.hbm_to_vmem [thread:$0]  %s11, 6144, %s794, [#allocation3], 384, 384, 24
        $region32: #{autoformer_forward.1} parent=11 // pred_fallthru
          _
        // Predicated region
        $region33: #{autoformer_forward.1} parent=11 // pred_check
          %p800 = pneg %p230
        $region34: #{autoformer_forward.1} parent=11 // pred_check_branch
          %802 = sbr.rel (%p800) target = $region36
        $region35: #{autoformer_forward.1} parent=11 // pred_region
          _
        $region36: #{autoformer_forward.1} parent=11 // pred_fallthru
          _
        // Predicated region
        $region37: #{autoformer_forward.1} parent=11 // pred_check
          %p803 = pneg %p251
        $region38: #{autoformer_forward.1} parent=11 // pred_check_branch
          %805 = sbr.rel (%p803) target = $region40
        $region39: #{autoformer_forward.1} parent=11 // pred_region
          %s807 = ssub.s32 2048, 2048
          %808 = vsyncadd [#allocation6], %s807
          %s809 = sshll.u32 [#allocation5], 4
          %s810 = int_to_ptr.vmem [resolvable:$true] %s809
          %815 = dma.hbm_to_vmem [thread:$0]  %s15, 2048, %s810, [#allocation6], 128, 128, 8
        $region40: #{autoformer_forward.1} parent=11 // pred_fallthru
          _
        // Predicated region
        $region41: #{autoformer_forward.1} parent=11 // pred_check
          %p816 = pneg %p272
        $region42: #{autoformer_forward.1} parent=11 // pred_check_branch
          %818 = sbr.rel (%p816) target = $region44
        $region43: #{autoformer_forward.1} parent=11 // pred_region
          _
        $region44: #{autoformer_forward.1} parent=11 // pred_fallthru
          _
        // Predicated region
        $region45: #{autoformer_forward.1} parent=11 // pred_check
          %p819 = pneg %p293
        $region46: #{autoformer_forward.1} parent=11 // pred_check_branch
          %821 = sbr.rel (%p819) target = $region48
        $region47: #{autoformer_forward.1} parent=11 // pred_region
          %s823 = ssub.s32 2048, 2048
          %824 = vsyncadd [#allocation6], %s823
          %s825 = sshll.u32 [#allocation7], 4
          %s826 = int_to_ptr.vmem [resolvable:$true] %s825
          %831 = dma.hbm_to_vmem [thread:$0]  %s19, 2048, %s826, [#allocation6], 128, 128, 8
        $region48: #{autoformer_forward.1} parent=11 // pred_fallthru
          _
        // Predicated region
        $region49: #{autoformer_forward.1} parent=11 // pred_check
          %p832 = pneg %p314
        $region50: #{autoformer_forward.1} parent=11 // pred_check_branch
          %834 = sbr.rel (%p832) target = $region52
        $region51: #{autoformer_forward.1} parent=11 // pred_region
          _
        $region52: #{autoformer_forward.1} parent=11 // pred_fallthru
          _
        // Predicated region
        $region53: #{autoformer_forward.1} parent=11 // pred_check
          %p835 = pneg %p335
        $region54: #{autoformer_forward.1} parent=11 // pred_check_branch
          %837 = sbr.rel (%p835) target = $region56
        $region55: #{autoformer_forward.1} parent=11 // pred_region
          %s839 = ssub.s32 2048, 2048
          %840 = vsyncadd [#allocation9], %s839
          %s841 = sshll.u32 [#allocation8], 4
          %s842 = int_to_ptr.vmem [resolvable:$true] %s841
          %847 = dma.hbm_to_vmem [thread:$0]  %s23, 2048, %s842, [#allocation9], 128, 128, 8
        $region56: #{autoformer_forward.1} parent=11 // pred_fallthru
          _
        // Predicated region
        $region57: #{autoformer_forward.1} parent=11 // pred_check
          %p848 = pneg %p356
        $region58: #{autoformer_forward.1} parent=11 // pred_check_branch
          %850 = sbr.rel (%p848) target = $region60
        $region59: #{autoformer_forward.1} parent=11 // pred_region
          _
        $region60: #{autoformer_forward.1} parent=11 // pred_fallthru
          _
        // Predicated region
        $region61: #{autoformer_forward.1} parent=11 // pred_check
          %p851 = pneg %p377
        $region62: #{autoformer_forward.1} parent=11 // pred_check_branch
          %853 = sbr.rel (%p851) target = $region64
        $region63: #{autoformer_forward.1} parent=11 // pred_region
          %s855 = ssub.s32 6144, 6144
          %856 = vsyncadd [#allocation9], %s855
          %s857 = sshll.u32 [#allocation10], 4
          %s858 = int_to_ptr.vmem [resolvable:$true] %s857
          %863 = dma.hbm_to_vmem [thread:$0]  %s27, 6144, %s858, [#allocation9], 384, 384, 24
        $region64: #{autoformer_forward.1} parent=11 // pred_fallthru
          _
        // Predicated region
        $region65: #{autoformer_forward.1} parent=11 // pred_check
          %p864 = pneg %p398
        $region66: #{autoformer_forward.1} parent=11 // pred_check_branch
          %866 = sbr.rel (%p864) target = $region68
        $region67: #{autoformer_forward.1} parent=11 // pred_region
          _
        $region68: #{autoformer_forward.1} parent=11 // pred_fallthru
          _
        // Predicated region
        $region69: #{autoformer_forward.1} parent=11 // pred_check
          %p867 = pneg %p419
        $region70: #{autoformer_forward.1} parent=11 // pred_check_branch
          %869 = sbr.rel (%p867) target = $region72
        $region71: #{autoformer_forward.1} parent=11 // pred_region
          %s871 = ssub.s32 2048, 2048
          %872 = vsyncadd [#allocation12], %s871
          %s873 = sshll.u32 [#allocation11], 4
          %s874 = int_to_ptr.vmem [resolvable:$true] %s873
          %879 = dma.hbm_to_vmem [thread:$0]  %s31, 2048, %s874, [#allocation12], 128, 128, 8
        $region72: #{autoformer_forward.1} parent=11 // pred_fallthru
          _
        // Predicated region
        $region73: #{autoformer_forward.1} parent=11 // pred_check
          %p880 = pneg %p440
        $region74: #{autoformer_forward.1} parent=11 // pred_check_branch
          %882 = sbr.rel (%p880) target = $region76
        $region75: #{autoformer_forward.1} parent=11 // pred_region
          _
        $region76: #{autoformer_forward.1} parent=11 // pred_fallthru
          _
        // Predicated region
        $region77: #{autoformer_forward.1} parent=11 // pred_check
          %p883 = pneg %p461
        $region78: #{autoformer_forward.1} parent=11 // pred_check_branch
          %885 = sbr.rel (%p883) target = $region80
        $region79: #{autoformer_forward.1} parent=11 // pred_region
          %s887 = ssub.s32 2048, 2048
          %888 = vsyncadd [#allocation12], %s887
          %s889 = sshll.u32 [#allocation13], 4
          %s890 = int_to_ptr.vmem [resolvable:$true] %s889
          %895 = dma.hbm_to_vmem [thread:$0]  %s35, 2048, %s890, [#allocation12], 128, 128, 8
        $region80: #{autoformer_forward.1} parent=11 // pred_fallthru
          _
        // Predicated region
        $region81: #{autoformer_forward.1} parent=11 // pred_check
          %p896 = pneg %p482
        $region82: #{autoformer_forward.1} parent=11 // pred_check_branch
          %898 = sbr.rel (%p896) target = $region84
        $region83: #{autoformer_forward.1} parent=11 // pred_region
          _
        $region84: #{autoformer_forward.1} parent=11 // pred_fallthru
          _
        // Predicated region
        $region85: #{autoformer_forward.1} parent=11 // pred_check
          %p899 = pneg %p503
        $region86: #{autoformer_forward.1} parent=11 // pred_check_branch
          %901 = sbr.rel (%p899) target = $region88
        $region87: #{autoformer_forward.1} parent=11 // pred_region
          _
        $region88: #{autoformer_forward.1} parent=11 // pred_fallthru
          _
        // Predicated region
        $region89: #{autoformer_forward.1} parent=11 // pred_check
          %p902 = pneg %p524
        $region90: #{autoformer_forward.1} parent=11 // pred_check_branch
          %904 = sbr.rel (%p902) target = $region92
        $region91: #{autoformer_forward.1} parent=11 // pred_region
          _
        $region92: #{autoformer_forward.1} parent=11 // pred_fallthru
          _
        // Predicated region
        $region93: #{autoformer_forward.1} parent=11 // pred_check
          %p905 = pneg %p545
        $region94: #{autoformer_forward.1} parent=11 // pred_check_branch
          %907 = sbr.rel (%p905) target = $region96
        $region95: #{autoformer_forward.1} parent=11 // pred_region
          %s909 = ssub.s32 2048, 2048
          %910 = vsyncadd [#allocation15], %s909
          %s911 = sshll.u32 [#allocation14], 4
          %s912 = int_to_ptr.vmem [resolvable:$true] %s911
          %917 = dma.hbm_to_vmem [thread:$0]  %s43, 2048, %s912, [#allocation15], 128, 128, 8
        $region96: #{autoformer_forward.1} parent=11 // pred_fallthru
          _
        // Predicated region
        $region97: #{autoformer_forward.1} parent=11 // pred_check
          %p918 = pneg %p566
        $region98: #{autoformer_forward.1} parent=11 // pred_check_branch
          %920 = sbr.rel (%p918) target = $region100
        $region99: #{autoformer_forward.1} parent=11 // pred_region
          _
        $region100: #{autoformer_forward.1} parent=11 // pred_fallthru
          _
        // Predicated region
        $region101: #{autoformer_forward.1} parent=11 // pred_check
          %p921 = pneg %p587
        $region102: #{autoformer_forward.1} parent=11 // pred_check_branch
          %923 = sbr.rel (%p921) target = $region104
        $region103: #{autoformer_forward.1} parent=11 // pred_region
          %s925 = ssub.s32 2048, 2048
          %926 = vsyncadd [#allocation15], %s925
          %s927 = sshll.u32 [#allocation16], 4
          %s928 = int_to_ptr.vmem [resolvable:$true] %s927
          %933 = dma.hbm_to_vmem [thread:$0]  %s47, 2048, %s928, [#allocation15], 128, 128, 8
        $region104: #{autoformer_forward.1} parent=11 // pred_fallthru
          _
        // Predicated region
        $region105: #{autoformer_forward.1} parent=11 // pred_check
          %p934 = pneg %p608
        $region106: #{autoformer_forward.1} parent=11 // pred_check_branch
          %936 = sbr.rel (%p934) target = $region108
        $region107: #{autoformer_forward.1} parent=11 // pred_region
          _
        $region108: #{autoformer_forward.1} parent=11 // pred_fallthru
          _
        // Predicated region
        $region109: #{autoformer_forward.1} parent=11 // pred_check
          %p937 = pneg %p629
        $region110: #{autoformer_forward.1} parent=11 // pred_check_branch
          %939 = sbr.rel (%p937) target = $region112
        $region111: #{autoformer_forward.1} parent=11 // pred_region
          %s941 = ssub.s32 2048, 2048
          %942 = vsyncadd [#allocation18], %s941
          %s943 = sshll.u32 [#allocation17], 4
          %s944 = int_to_ptr.vmem [resolvable:$true] %s943
          %949 = dma.hbm_to_vmem [thread:$0]  %s51, 2048, %s944, [#allocation18], 128, 128, 8
        $region112: #{autoformer_forward.1} parent=11 // pred_fallthru
          _
        // Predicated region
        $region113: #{autoformer_forward.1} parent=11 // pred_check
          %p950 = pneg %p650
        $region114: #{autoformer_forward.1} parent=11 // pred_check_branch
          %952 = sbr.rel (%p950) target = $region116
        $region115: #{autoformer_forward.1} parent=11 // pred_region
          _
        $region116: #{autoformer_forward.1} parent=11 // pred_fallthru
          _
        // Predicated region
        $region117: #{autoformer_forward.1} parent=11 // pred_check
          %p953 = pneg %p671
        $region118: #{autoformer_forward.1} parent=11 // pred_check_branch
          %955 = sbr.rel (%p953) target = $region120
        $region119: #{autoformer_forward.1} parent=11 // pred_region
          _
        $region120: #{autoformer_forward.1} parent=11 // pred_fallthru
          _
        // Predicated region
        $region121: #{autoformer_forward.1} parent=11 // pred_check
          %p956 = pneg %p692
        $region122: #{autoformer_forward.1} parent=11 // pred_check_branch
          %958 = sbr.rel (%p956) target = $region124
        $region123: #{autoformer_forward.1} parent=11 // pred_region
          _
        $region124: #{autoformer_forward.1} parent=11 // pred_fallthru
          _
        // Predicated region
        $region125: #{autoformer_forward.1} parent=11 // pred_check
          %p959 = pneg %p713
        $region126: #{autoformer_forward.1} parent=11 // pred_check_branch
          %961 = sbr.rel (%p959) target = $region128
        $region127: #{autoformer_forward.1} parent=11 // pred_region
          _
        $region128: #{autoformer_forward.1} parent=11 // pred_fallthru
          _
        // Predicated region
        $region129: #{autoformer_forward.1} parent=11 // pred_check
          %p962 = pneg %p734
        $region130: #{autoformer_forward.1} parent=11 // pred_check_branch
          %964 = sbr.rel (%p962) target = $region132
        $region131: #{autoformer_forward.1} parent=11 // pred_region
          _
        $region132: #{autoformer_forward.1} parent=11 // pred_fallthru
          _
      $region12: #{autoformer_forward.1} parent=5 // pred_fallthru
        _
      %p965 = scmp.lt.s32.totalorder %s78, 2
      // Predicated region
      $region133: #{autoformer_forward.1} parent=5 // pred_check
        %p966 = pneg %p965
      $region134: #{autoformer_forward.1} parent=5 // pred_check_branch
        %968 = sbr.rel (%p966) target = $region136
      $region135: #{autoformer_forward.1} parent=5 // pred_region
        // Predicated region
        $region137: #{autoformer_forward.1} parent=135 // pred_check
          %p969 = pneg %p98
        $region138: #{autoformer_forward.1} parent=135 // pred_check_branch
          %971 = sbr.rel (%p969) target = $region140
        $region139: #{autoformer_forward.1} parent=135 // pred_region
          %p972 = scmp.lt.s32.totalorder %s78, 1
          %s973 = scalar_select %p972, %s78, 1
          %s974 = smul.addr %s973, 8
          %s975 = scalar_lea.vmem %s1, %s974
        $region140: #{autoformer_forward.1} parent=135 // pred_fallthru
          _
      $region136: #{autoformer_forward.1} parent=5 // pred_fallthru
        _
      %p976 = scmp.le.s32.totalorder 1, %s78
      %p977 = scmp.lt.s32.totalorder %s78, 3
      %p978 = pnand %p976, %p977
      %p979 = pneg %p978
      // Predicated region
      $region141: #{autoformer_forward.1} parent=5 // pred_check
        _
      $region142: #{autoformer_forward.1} parent=5 // pred_check_branch
        %981 = sbr.rel (%p978) target = $region144
      $region143: #{autoformer_forward.1} parent=5 // pred_region
        %s982 = ssub.s32 %s78, 1
        // Predicated region
        $region145: #{autoformer_forward.1} parent=143 // pred_check
          %p983 = pneg %p209
        $region146: #{autoformer_forward.1} parent=143 // pred_check_branch
          %985 = sbr.rel (%p983) target = $region148
        $region147: #{autoformer_forward.1} parent=143 // pred_region
          %986 = dma.done [#allocation3], 6144
        $region148: #{autoformer_forward.1} parent=143 // pred_fallthru
          _
        // Predicated region
        $region149: #{autoformer_forward.1} parent=143 // pred_check
          %p987 = pneg %p251
        $region150: #{autoformer_forward.1} parent=143 // pred_check_branch
          %989 = sbr.rel (%p987) target = $region152
        $region151: #{autoformer_forward.1} parent=143 // pred_region
          %990 = dma.done [#allocation6], 2048
        $region152: #{autoformer_forward.1} parent=143 // pred_fallthru
          _
        // Predicated region
        $region153: #{autoformer_forward.1} parent=143 // pred_check
          %p991 = pneg %p293
        $region154: #{autoformer_forward.1} parent=143 // pred_check_branch
          %993 = sbr.rel (%p991) target = $region156
        $region155: #{autoformer_forward.1} parent=143 // pred_region
          %994 = dma.done [#allocation6], 2048
        $region156: #{autoformer_forward.1} parent=143 // pred_fallthru
          _
        // Predicated region
        $region157: #{autoformer_forward.1} parent=143 // pred_check
          %p995 = pneg %p335
        $region158: #{autoformer_forward.1} parent=143 // pred_check_branch
          %997 = sbr.rel (%p995) target = $region160
        $region159: #{autoformer_forward.1} parent=143 // pred_region
          %998 = dma.done [#allocation9], 2048
        $region160: #{autoformer_forward.1} parent=143 // pred_fallthru
          _
        // Predicated region
        $region161: #{autoformer_forward.1} parent=143 // pred_check
          %p999 = pneg %p377
        $region162: #{autoformer_forward.1} parent=143 // pred_check_branch
          %1001 = sbr.rel (%p999) target = $region164
        $region163: #{autoformer_forward.1} parent=143 // pred_region
          %1002 = dma.done [#allocation9], 6144
        $region164: #{autoformer_forward.1} parent=143 // pred_fallthru
          _
        // Predicated region
        $region165: #{autoformer_forward.1} parent=143 // pred_check
          %p1003 = pneg %p419
        $region166: #{autoformer_forward.1} parent=143 // pred_check_branch
          %1005 = sbr.rel (%p1003) target = $region168
        $region167: #{autoformer_forward.1} parent=143 // pred_region
          %1006 = dma.done [#allocation12], 2048
        $region168: #{autoformer_forward.1} parent=143 // pred_fallthru
          _
        // Predicated region
        $region169: #{autoformer_forward.1} parent=143 // pred_check
          %p1007 = pneg %p461
        $region170: #{autoformer_forward.1} parent=143 // pred_check_branch
          %1009 = sbr.rel (%p1007) target = $region172
        $region171: #{autoformer_forward.1} parent=143 // pred_region
          %1010 = dma.done [#allocation12], 2048
        $region172: #{autoformer_forward.1} parent=143 // pred_fallthru
          _
        // Predicated region
        $region173: #{autoformer_forward.1} parent=143 // pred_check
          %p1011 = pneg %p545
        $region174: #{autoformer_forward.1} parent=143 // pred_check_branch
          %1013 = sbr.rel (%p1011) target = $region176
        $region175: #{autoformer_forward.1} parent=143 // pred_region
          %1014 = dma.done [#allocation15], 2048
        $region176: #{autoformer_forward.1} parent=143 // pred_fallthru
          _
        // Predicated region
        $region177: #{autoformer_forward.1} parent=143 // pred_check
          %p1015 = pneg %p587
        $region178: #{autoformer_forward.1} parent=143 // pred_check_branch
          %1017 = sbr.rel (%p1015) target = $region180
        $region179: #{autoformer_forward.1} parent=143 // pred_region
          %1018 = dma.done [#allocation15], 2048
        $region180: #{autoformer_forward.1} parent=143 // pred_fallthru
          _
        // Predicated region
        $region181: #{autoformer_forward.1} parent=143 // pred_check
          %p1019 = pneg %p629
        $region182: #{autoformer_forward.1} parent=143 // pred_check_branch
          %1021 = sbr.rel (%p1019) target = $region184
        $region183: #{autoformer_forward.1} parent=143 // pred_region
          %1022 = dma.done [#allocation18], 2048
        $region184: #{autoformer_forward.1} parent=143 // pred_fallthru
          _
        %p1023 = scmp.lt.s32.totalorder %s83, 1
        %s1024 = scalar_select %p1023, %s83, 1
        %s1025 = smul.addr %s1024, 8
        %s1026 = scalar_lea.vmem %s1, %s1025
        %p1027 = pneg %p104
        %p1028 = pneg %p101
        %p1029 = pneg %p125
        %p1030 = pneg %p122
        %p1031 = pneg %p146
        %p1032 = pneg %p143
        %p1033 = pneg %p167
        %p1034 = pneg %p164
        %p1035 = pneg %p188
        %p1036 = pneg %p185
        %p1037 = pneg %p209
        %p1038 = pneg %p206
        %p1039 = pneg %p230
        %p1040 = pneg %p227
        %p1041 = pneg %p251
        %p1042 = pneg %p248
        %p1043 = pneg %p272
        %p1044 = pneg %p269
        %p1045 = pneg %p293
        %p1046 = pneg %p290
        %p1047 = pneg %p314
        %p1048 = pneg %p311
        %p1049 = pneg %p335
        %p1050 = pneg %p332
        %p1051 = pneg %p356
        %p1052 = pneg %p353
        %p1053 = pneg %p377
        %p1054 = pneg %p374
        %p1055 = pneg %p398
        %p1056 = pneg %p395
        %p1057 = pneg %p419
        %p1058 = pneg %p416
        %p1059 = pneg %p440
        %p1060 = pneg %p437
        %p1061 = pneg %p461
        %p1062 = pneg %p458
        %p1063 = pneg %p482
        %p1064 = pneg %p479
        %p1065 = pneg %p503
        %p1066 = pneg %p500
        %p1067 = pneg %p524
        %p1068 = pneg %p521
        %p1069 = pneg %p545
        %p1070 = pneg %p542
        %p1071 = pneg %p566
        %p1072 = pneg %p563
        %p1073 = pneg %p587
        %p1074 = pneg %p584
        %p1075 = pneg %p608
        %p1076 = pneg %p605
        %p1077 = pneg %p629
        %p1078 = pneg %p626
        %p1079 = pneg %p650
        %p1080 = pneg %p647
        %p1081 = pneg %p671
        %p1082 = pneg %p668
        %p1083 = pneg %p692
        %p1084 = pneg %p689
        %p1085 = pneg %p713
        %p1086 = pneg %p710
        %p1087 = pneg %p734
        %p1088 = pneg %p731
        %p1089 = pneg %p760
        %p1090 = pneg %p757
        %s1091 = sand.u32 %s747, 1
        %s1092 = scalar_lea.sflag [#allocation4], %s1091
        %s1093 = sand.u32 %s747, 1
        %s1094 = smul.addr %s1093, 4
        %s1095 = scalar_lea.vmem [#allocation19], %s1094
        %p1096 = scmp.lt.s32.totalorder %s83, 1
        %s1097 = scalar_select %p1096, %s83, 1
        %s1098 = smul.addr %s1097, 8
        %s1099 = scalar_lea.vmem %s1, %s1098
        %v1100 = vld [vmem:[%s1099] sm:$0xff]
        %v1101 = vand.u32 2147483647, %v1100
        %vm1102 = vcmask 31744
        %v1103 = vsel %vm1102, %v1101, 0.0
        %v1104 = vrot.slane %v1103, 4
        %v1105 = vadd.f32 %v1103, %v1104
        %v1106 = vrot.slane %v1105, 2
        %v1107 = vadd.f32 %v1105, %v1106
        %v1108 = vrot.slane %v1107, 1
        %v1109 = vadd.f32 %v1107, %v1108
        %v1110 = vrcp.pop 8.0
        %v1111 = vmul.f32 %v1109, %v1110
        %v1112 = vmax.f32 %v1111, 1e-10
        %v1113 = vrcp.pop %v1112
        %v1114 = vmul.f32 %v1100, %v1113
        %v1115 = vld [vmem:[%s3] sm:$0xf]
        %v1116 = vld [vmem:[%s5] sm:$0x1]
        %v1118 = vlaneseq
        %v1119 = vshrl.u32 %v1118, 7
        %v1120 = vsub.s32 0, %v1119
        %v1121 = vrot.slane %v1116, %v1120
        %v1124 = vsel %vm1102, %v1114, 0
        %vm1126 = vcmask 1043456
        %v1128 = vsel %vm1126, %v1115, 0
        %1130 = vmatprep.subr.mxu0 0.0
        %1131 = vmatpush1.msra.mxu0 0.0
        %1132 = vmatprep.subr.mxu0 0.0
        %1133 = vmatpush1.msra.mxu0 0.0
        %1134 = vmatprep.subr.mxu0 0.0
        %1135 = vmatpush1.msra.mxu0 0.0
        %1136 = vmatprep.subr.mxu0 0.0
        %1137 = vmatpush1.msra.mxu0 0.0
        %1138 = vmatprep.subr.mxu0 0.0
        %1139 = vmatpush1.msra.mxu0 0.0
        %1140 = vmatprep.subr.mxu0 0.0
        %1141 = vmatpush1.msra.mxu0 0.0
        %1142 = vmatprep.subr.mxu0 0.0
        %1143 = vmatpush1.msra.mxu0 0.0
        %1144 = vmatprep.subr.mxu0 0.0
        %1145 = vmatpush1.msra.mxu0 0.0
        %1146 = vmatprep.subr.mxu0 0.0
        %1147 = vmatpush1.msra.mxu0 0.0
        %1148 = vmatprep.subr.mxu0 0.0
        %1149 = vmatpush1.msra.mxu0 0.0
        %1150 = vmatprep.subr.mxu0 0.0
        %1151 = vmatpush1.msra.mxu0 0.0
        %1152 = vmatprep.subr.mxu0 0.0
        %1153 = vmatpush1.msra.mxu0 0.0
        %1154 = vmatprep.subr.mxu0 0.0
        %1155 = vmatpush1.msra.mxu0 0.0
        %1156 = vmatprep.subr.mxu0 0.0
        %1157 = vmatpush1.msra.mxu0 0.0
        %1158 = vmatprep.subr.mxu0 0.0
        %1159 = vmatpush1.msra.mxu0 0.0
        %1160 = vmatprep.subr.mxu0 0.0
        %1161 = vmatpush1.msra.mxu0 %v1128
        %1162 = vmatprep.subr.mxu0 0.0
        %1163 = vmatpush2.msra.mxu0 0.0
        %1164 = vmatprep.subr.mxu0 0.0
        %1165 = vmatpush2.msra.mxu0 0.0
        %1166 = vmatprep.subr.mxu0 0.0
        %1167 = vmatpush2.msra.mxu0 0.0
        %1168 = vmatprep.subr.mxu0 0.0
        %1169 = vmatpush2.msra.mxu0 0.0
        %1170 = vmatprep.subr.mxu0 0.0
        %1171 = vmatpush2.msra.mxu0 0.0
        %1172 = vmatprep.subr.mxu0 0.0
        %1173 = vmatpush2.msra.mxu0 0.0
        %1174 = vmatprep.subr.mxu0 0.0
        %1175 = vmatpush2.msra.mxu0 0.0
        %1176 = vmatprep.subr.mxu0 0.0
        %1177 = vmatpush2.msra.mxu0 0.0
        %1178 = vmatprep.subr.mxu0 0.0
        %1179 = vmatpush2.msra.mxu0 0.0
        %1180 = vmatprep.subr.mxu0 0.0
        %1181 = vmatpush2.msra.mxu0 0.0
        %1182 = vmatprep.subr.mxu0 0.0
        %1183 = vmatpush2.msra.mxu0 0.0
        %1184 = vmatprep.subr.mxu0 0.0
        %1185 = vmatpush2.msra.mxu0 0.0
        %1186 = vmatprep.subr.mxu0 0.0
        %1187 = vmatpush2.msra.mxu0 0.0
        %1188 = vmatprep.subr.mxu0 0.0
        %1189 = vmatpush2.msra.mxu0 0.0
        %1190 = vmatprep.subr.mxu0 0.0
        %1191 = vmatpush2.msra.mxu0 0.0
        %1192 = vmatprep.subr.mxu0 0.0
        %1193 = vmatpush2.msra.mxu0 0.0
        %1194 = vmatprep.mubr.f32.mxu0 0.0
        %1195 = vmatmul.mubr.f32.gmra.mxu0 %v1124
        %v1196 = vpop.f32.mrf.mxu0
        %v1197 = vadd.f32 %v1121, %v1196
        %v1198 = vpop.f32.mrf.mxu0
        %1199 = vdwg.mxu0
        %v1200 = vld [vmem:[#allocation2] sm:$0xff]
        %v1201 = vld [vmem:[#allocation2 + $0x8] sm:$0xff]
        %v1202 = vld [vmem:[#allocation2 + $0x10] sm:$0xff]
        %v1203 = vld [vmem:[#allocation2 + $0x18] sm:$0xff]
        %v1204 = vld [vmem:[#allocation2 + $0x20] sm:$0xff]
        %v1205 = vld [vmem:[#allocation2 + $0x28] sm:$0xff]
        %v1206 = vld [vmem:[#allocation2 + $0x30] sm:$0xff]
        %v1207 = vld [vmem:[#allocation2 + $0x38] sm:$0xff]
        %v1208 = vld [vmem:[#allocation2 + $0x40] sm:$0xff]
        %v1209 = vld [vmem:[#allocation2 + $0x48] sm:$0xff]
        %v1210 = vld [vmem:[#allocation2 + $0x50] sm:$0xff]
        %v1211 = vld [vmem:[#allocation2 + $0x58] sm:$0xff]
        %v1212 = vld [vmem:[#allocation2 + $0x60] sm:$0xff]
        %v1213 = vld [vmem:[#allocation2 + $0x68] sm:$0xff]
        %v1214 = vld [vmem:[#allocation2 + $0x70] sm:$0xff]
        %v1215 = vld [vmem:[#allocation2 + $0x78] sm:$0xff]
        %v1216 = vld [vmem:[#allocation2 + $0x80] sm:$0xff]
        %v1217 = vld [vmem:[#allocation2 + $0x88] sm:$0xff]
        %v1218 = vld [vmem:[#allocation2 + $0x90] sm:$0xff]
        %v1219 = vld [vmem:[#allocation2 + $0x98] sm:$0xff]
        %v1220 = vld [vmem:[#allocation2 + $0xa0] sm:$0xff]
        %v1221 = vld [vmem:[#allocation2 + $0xa8] sm:$0xff]
        %v1222 = vld [vmem:[#allocation2 + $0xb0] sm:$0xff]
        %v1223 = vld [vmem:[#allocation2 + $0xb8] sm:$0xff]
        %v1224 = vld [vmem:[#allocation2 + $0xc0] sm:$0xff]
        %v1225 = vld [vmem:[#allocation2 + $0xc8] sm:$0xff]
        %v1226 = vld [vmem:[#allocation2 + $0xd0] sm:$0xff]
        %v1227 = vld [vmem:[#allocation2 + $0xd8] sm:$0xff]
        %v1228 = vld [vmem:[#allocation2 + $0xe0] sm:$0xff]
        %v1229 = vld [vmem:[#allocation2 + $0xe8] sm:$0xff]
        %v1230 = vld [vmem:[#allocation2 + $0xf0] sm:$0xff]
        %v1231 = vld [vmem:[#allocation2 + $0xf8] sm:$0xff]
        %v1232 = vld [vmem:[#allocation2 + $0x100] sm:$0xff]
        %v1233 = vld [vmem:[#allocation2 + $0x108] sm:$0xff]
        %v1234 = vld [vmem:[#allocation2 + $0x110] sm:$0xff]
        %v1235 = vld [vmem:[#allocation2 + $0x118] sm:$0xff]
        %v1236 = vld [vmem:[#allocation2 + $0x120] sm:$0xff]
        %v1237 = vld [vmem:[#allocation2 + $0x128] sm:$0xff]
        %v1238 = vld [vmem:[#allocation2 + $0x130] sm:$0xff]
        %v1239 = vld [vmem:[#allocation2 + $0x138] sm:$0xff]
        %v1240 = vld [vmem:[#allocation2 + $0x140] sm:$0xff]
        %v1241 = vld [vmem:[#allocation2 + $0x148] sm:$0xff]
        %v1242 = vld [vmem:[#allocation2 + $0x150] sm:$0xff]
        %v1243 = vld [vmem:[#allocation2 + $0x158] sm:$0xff]
        %v1244 = vld [vmem:[#allocation2 + $0x160] sm:$0xff]
        %v1245 = vld [vmem:[#allocation2 + $0x168] sm:$0xff]
        %v1246 = vld [vmem:[#allocation2 + $0x170] sm:$0xff]
        %v1247 = vld [vmem:[#allocation2 + $0x178] sm:$0xff]
        %v1248 = vld [vmem:[%s13] sm:$0x7]
        %v1250 = vlaneseq
        %v1251 = vshrl.u32 %v1250, 7
        %v1252 = vsub.s32 0, %v1251
        %v1253 = vrot.slane %v1248, %v1252
        %v1254 = vlaneseq
        %v1255 = vshrl.u32 %v1254, 7
        %v1256 = vsub.s32 1, %v1255
        %v1257 = vrot.slane %v1248, %v1256
        %v1258 = vlaneseq
        %v1259 = vshrl.u32 %v1258, 7
        %v1260 = vsub.s32 2, %v1259
        %v1261 = vrot.slane %v1248, %v1260
        %1265 = vmatprep.subr.mxu0 %v1246
        %1266 = vmatpush1.msra.mxu0 %v1245
        %1267 = vmatprep.subr.mxu0 %v1243
        %1268 = vmatpush1.msra.mxu0 %v1242
        %1269 = vmatprep.subr.mxu0 %v1240
        %1270 = vmatpush1.msra.mxu0 %v1239
        %1271 = vmatprep.subr.mxu0 %v1237
        %1272 = vmatpush1.msra.mxu0 %v1236
        %1273 = vmatprep.subr.mxu0 %v1234
        %1274 = vmatpush1.msra.mxu0 %v1233
        %1275 = vmatprep.subr.mxu0 %v1231
        %1276 = vmatpush1.msra.mxu0 %v1230
        %1277 = vmatprep.subr.mxu0 %v1228
        %1278 = vmatpush1.msra.mxu0 %v1227
        %1279 = vmatprep.subr.mxu0 %v1225
        %1280 = vmatpush1.msra.mxu0 %v1224
        %1281 = vmatprep.subr.mxu0 %v1222
        %1282 = vmatpush1.msra.mxu0 %v1221
        %1283 = vmatprep.subr.mxu0 %v1219
        %1284 = vmatpush1.msra.mxu0 %v1218
        %1285 = vmatprep.subr.mxu0 %v1216
        %1286 = vmatpush1.msra.mxu0 %v1215
        %1287 = vmatprep.subr.mxu0 %v1213
        %1288 = vmatpush1.msra.mxu0 %v1212
        %1289 = vmatprep.subr.mxu0 %v1210
        %1290 = vmatpush1.msra.mxu0 %v1209
        %1291 = vmatprep.subr.mxu0 %v1207
        %1292 = vmatpush1.msra.mxu0 %v1206
        %1293 = vmatprep.subr.mxu0 %v1204
        %1294 = vmatpush1.msra.mxu0 %v1203
        %1295 = vmatprep.subr.mxu0 %v1201
        %1296 = vmatpush1.msra.mxu0 %v1200
        %1297 = vmatprep.subr.mxu0 0.0
        %1298 = vmatpush2.msra.mxu0 0.0
        %1299 = vmatprep.subr.mxu0 0.0
        %1300 = vmatpush2.msra.mxu0 0.0
        %1301 = vmatprep.subr.mxu0 0.0
        %1302 = vmatpush2.msra.mxu0 0.0
        %1303 = vmatprep.subr.mxu0 0.0
        %1304 = vmatpush2.msra.mxu0 0.0
        %1305 = vmatprep.subr.mxu0 0.0
        %1306 = vmatpush2.msra.mxu0 0.0
        %1307 = vmatprep.subr.mxu0 0.0
        %1308 = vmatpush2.msra.mxu0 0.0
        %1309 = vmatprep.subr.mxu0 0.0
        %1310 = vmatpush2.msra.mxu0 0.0
        %1311 = vmatprep.subr.mxu0 0.0
        %1312 = vmatpush2.msra.mxu0 0.0
        %1313 = vmatprep.subr.mxu0 0.0
        %1314 = vmatpush2.msra.mxu0 0.0
        %1315 = vmatprep.subr.mxu0 0.0
        %1316 = vmatpush2.msra.mxu0 0.0
        %1317 = vmatprep.subr.mxu0 0.0
        %1318 = vmatpush2.msra.mxu0 0.0
        %1319 = vmatprep.subr.mxu0 0.0
        %1320 = vmatpush2.msra.mxu0 0.0
        %1321 = vmatprep.subr.mxu0 0.0
        %1322 = vmatpush2.msra.mxu0 0.0
        %1323 = vmatprep.subr.mxu0 0.0
        %1324 = vmatpush2.msra.mxu0 0.0
        %1325 = vmatprep.subr.mxu0 0.0
        %1326 = vmatpush2.msra.mxu0 0.0
        %1327 = vmatprep.subr.mxu0 0.0
        %1328 = vmatpush2.msra.mxu0 0.0
        %1329 = vmatprep.mubr.f32.mxu0 0.0
        %1330 = vmatmul.mubr.f32.gmra.mxu0 %v1197
        %v1331 = vpop.f32.mrf.mxu0
        %v1332 = vadd.f32 %v1253, %v1331
        %v1333 = vpop.f32.mrf.mxu0
        %v1334 = vadd.f32 %v1257, %v1333
        %1335 = vdwg.mxu0
        %1336 = vmatprep.subr.mxu0 0.0
        %1337 = vmatpush1.msra.mxu0 %v1247
        %1338 = vmatprep.subr.mxu0 0.0
        %1339 = vmatpush1.msra.mxu0 %v1244
        %1340 = vmatprep.subr.mxu0 0.0
        %1341 = vmatpush1.msra.mxu0 %v1241
        %1342 = vmatprep.subr.mxu0 0.0
        %1343 = vmatpush1.msra.mxu0 %v1238
        %1344 = vmatprep.subr.mxu0 0.0
        %1345 = vmatpush1.msra.mxu0 %v1235
        %1346 = vmatprep.subr.mxu0 0.0
        %1347 = vmatpush1.msra.mxu0 %v1232
        %1348 = vmatprep.subr.mxu0 0.0
        %1349 = vmatpush1.msra.mxu0 %v1229
        %1350 = vmatprep.subr.mxu0 0.0
        %1351 = vmatpush1.msra.mxu0 %v1226
        %1352 = vmatprep.subr.mxu0 0.0
        %1353 = vmatpush1.msra.mxu0 %v1223
        %1354 = vmatprep.subr.mxu0 0.0
        %1355 = vmatpush1.msra.mxu0 %v1220
        %1356 = vmatprep.subr.mxu0 0.0
        %1357 = vmatpush1.msra.mxu0 %v1217
        %1358 = vmatprep.subr.mxu0 0.0
        %1359 = vmatpush1.msra.mxu0 %v1214
        %1360 = vmatprep.subr.mxu0 0.0
        %1361 = vmatpush1.msra.mxu0 %v1211
        %1362 = vmatprep.subr.mxu0 0.0
        %1363 = vmatpush1.msra.mxu0 %v1208
        %1364 = vmatprep.subr.mxu0 0.0
        %1365 = vmatpush1.msra.mxu0 %v1205
        %1366 = vmatprep.subr.mxu0 0.0
        %1367 = vmatpush1.msra.mxu0 %v1202
        %1368 = vmatprep.subr.mxu0 0.0
        %1369 = vmatpush2.msra.mxu0 0.0
        %1370 = vmatprep.subr.mxu0 0.0
        %1371 = vmatpush2.msra.mxu0 0.0
        %1372 = vmatprep.subr.mxu0 0.0
        %1373 = vmatpush2.msra.mxu0 0.0
        %1374 = vmatprep.subr.mxu0 0.0
        %1375 = vmatpush2.msra.mxu0 0.0
        %1376 = vmatprep.subr.mxu0 0.0
        %1377 = vmatpush2.msra.mxu0 0.0
        %1378 = vmatprep.subr.mxu0 0.0
        %1379 = vmatpush2.msra.mxu0 0.0
        %1380 = vmatprep.subr.mxu0 0.0
        %1381 = vmatpush2.msra.mxu0 0.0
        %1382 = vmatprep.subr.mxu0 0.0
        %1383 = vmatpush2.msra.mxu0 0.0
        %1384 = vmatprep.subr.mxu0 0.0
        %1385 = vmatpush2.msra.mxu0 0.0
        %1386 = vmatprep.subr.mxu0 0.0
        %1387 = vmatpush2.msra.mxu0 0.0
        %1388 = vmatprep.subr.mxu0 0.0
        %1389 = vmatpush2.msra.mxu0 0.0
        %1390 = vmatprep.subr.mxu0 0.0
        %1391 = vmatpush2.msra.mxu0 0.0
        %1392 = vmatprep.subr.mxu0 0.0
        %1393 = vmatpush2.msra.mxu0 0.0
        %1394 = vmatprep.subr.mxu0 0.0
        %1395 = vmatpush2.msra.mxu0 0.0
        %1396 = vmatprep.subr.mxu0 0.0
        %1397 = vmatpush2.msra.mxu0 0.0
        %1398 = vmatprep.subr.mxu0 0.0
        %1399 = vmatpush2.msra.mxu0 0.0
        %1400 = vmatprep.mubr.f32.mxu0 0.0
        %1401 = vmatmul.mubr.f32.gmra.mxu0 %v1197
        %v1402 = vpop.f32.mrf.mxu0
        %v1403 = vadd.f32 %v1261, %v1402
        %v1404 = vpop.f32.mrf.mxu0
        %1405 = vdwg.mxu0
        %1406 = vmatprep.subr.mxu0 0.0
        %1407 = vmatpush1.xpose.msra.mxu0 0.0
        %1408 = vmatprep.subr.mxu0 0.0
        %1409 = vmatpush1.xpose.msra.mxu0 0.0
        %1410 = vmatprep.subr.mxu0 0.0
        %1411 = vmatpush1.xpose.msra.mxu0 0.0
        %1412 = vmatprep.subr.mxu0 0.0
        %1413 = vmatpush1.xpose.msra.mxu0 0.0
        %1414 = vmatprep.subr.mxu0 0.0
        %1415 = vmatpush1.xpose.msra.mxu0 0.0
        %1416 = vmatprep.subr.mxu0 0.0
        %1417 = vmatpush1.xpose.msra.mxu0 0.0
        %1418 = vmatprep.subr.mxu0 0.0
        %1419 = vmatpush1.xpose.msra.mxu0 0.0
        %1420 = vmatprep.subr.mxu0 0.0
        %1421 = vmatpush1.xpose.msra.mxu0 0.0
        %1422 = vmatprep.subr.mxu0 0.0
        %1423 = vmatpush1.xpose.msra.mxu0 0.0
        %1424 = vmatprep.subr.mxu0 0.0
        %1425 = vmatpush1.xpose.msra.mxu0 0.0
        %1426 = vmatprep.subr.mxu0 0.0
        %1427 = vmatpush1.xpose.msra.mxu0 0.0
        %1428 = vmatprep.subr.mxu0 0.0
        %1429 = vmatpush1.xpose.msra.mxu0 0.0
        %1430 = vmatprep.subr.mxu0 0.0
        %1431 = vmatpush1.xpose.msra.mxu0 0.0
        %1432 = vmatprep.subr.mxu0 0.0
        %1433 = vmatpush1.xpose.msra.mxu0 0.0
        %1434 = vmatprep.subr.mxu0 0.0
        %1435 = vmatpush1.xpose.msra.mxu0 0.0
        %1436 = vmatprep.subr.mxu0 0.0
        %1437 = vmatpush1.xpose.msra.mxu0 %v1334
        %1438 = vmatprep.subr.mxu0 0.0
        %1439 = vmatpush2.xpose.msra.mxu0 0.0
        %1440 = vmatprep.subr.mxu0 0.0
        %1441 = vmatpush2.xpose.msra.mxu0 0.0
        %1442 = vmatprep.subr.mxu0 0.0
        %1443 = vmatpush2.xpose.msra.mxu0 0.0
        %1444 = vmatprep.subr.mxu0 0.0
        %1445 = vmatpush2.xpose.msra.mxu0 0.0
        %1446 = vmatprep.subr.mxu0 0.0
        %1447 = vmatpush2.xpose.msra.mxu0 0.0
        %1448 = vmatprep.subr.mxu0 0.0
        %1449 = vmatpush2.xpose.msra.mxu0 0.0
        %1450 = vmatprep.subr.mxu0 0.0
        %1451 = vmatpush2.xpose.msra.mxu0 0.0
        %1452 = vmatprep.subr.mxu0 0.0
        %1453 = vmatpush2.xpose.msra.mxu0 0.0
        %1454 = vmatprep.subr.mxu0 0.0
        %1455 = vmatpush2.xpose.msra.mxu0 0.0
        %1456 = vmatprep.subr.mxu0 0.0
        %1457 = vmatpush2.xpose.msra.mxu0 0.0
        %1458 = vmatprep.subr.mxu0 0.0
        %1459 = vmatpush2.xpose.msra.mxu0 0.0
        %1460 = vmatprep.subr.mxu0 0.0
        %1461 = vmatpush2.xpose.msra.mxu0 0.0
        %1462 = vmatprep.subr.mxu0 0.0
        %1463 = vmatpush2.xpose.msra.mxu0 0.0
        %1464 = vmatprep.subr.mxu0 0.0
        %1465 = vmatpush2.xpose.msra.mxu0 0.0
        %1466 = vmatprep.subr.mxu0 0.0
        %1467 = vmatpush2.xpose.msra.mxu0 0.0
        %1468 = vmatprep.subr.mxu0 0.0
        %1469 = vmatpush2.xpose.msra.mxu0 0.0
        %1470 = vmatprep.mubr.f32.mxu0 0.0
        %1471 = vmatmul.mubr.f32.gmra.mxu0 %v1332
        %v1472 = vpop.f32.mrf.mxu0
        %v1473 = vadd.f32 0.0, %v1472
        %v1474 = vpop.f32.mrf.mxu0
        %1475 = vdwg.mxu0
        %v1476 = vmul.f32 %v1473, 0.088388346
        %vm1477 = vcmask 64512
        %v1478 = vsel %vm1477, %v1476, -inf
        %1479 = vmax.xlane.f32.xlu0 %v1478
        %v1480 = vpop.xlane.xlu0 %1479
        %v1481 = vsub.f32 %v1476, %v1480
        %v1482 = vmul.f32 %v1481, 1.442695
        %v1483 = vpow.pop %v1482
        %v1484 = vsel %vm1477, %v1483, 0.0
        %1485 = vadd.xlane.f32.xlu0 %v1484
        %v1486 = vpop.xlane.xlu0 %1485
        %v1487 = vrcp.pop %v1486
        %v1488 = vmul.f32 %v1483, %v1487
        %v1490 = vsel %vm1477, %v1488, 0
        %1492 = vmatprep.subr.mxu0 0.0
        %1493 = vmatpush1.msra.mxu0 0.0
        %1494 = vmatprep.subr.mxu0 0.0
        %1495 = vmatpush1.msra.mxu0 0.0
        %1496 = vmatprep.subr.mxu0 0.0
        %1497 = vmatpush1.msra.mxu0 0.0
        %1498 = vmatprep.subr.mxu0 0.0
        %1499 = vmatpush1.msra.mxu0 0.0
        %1500 = vmatprep.subr.mxu0 0.0
        %1501 = vmatpush1.msra.mxu0 0.0
        %1502 = vmatprep.subr.mxu0 0.0
        %1503 = vmatpush1.msra.mxu0 0.0
        %1504 = vmatprep.subr.mxu0 0.0
        %1505 = vmatpush1.msra.mxu0 0.0
        %1506 = vmatprep.subr.mxu0 0.0
        %1507 = vmatpush1.msra.mxu0 0.0
        %1508 = vmatprep.subr.mxu0 0.0
        %1509 = vmatpush1.msra.mxu0 0.0
        %1510 = vmatprep.subr.mxu0 0.0
        %1511 = vmatpush1.msra.mxu0 0.0
        %1512 = vmatprep.subr.mxu0 0.0
        %1513 = vmatpush1.msra.mxu0 0.0
        %1514 = vmatprep.subr.mxu0 0.0
        %1515 = vmatpush1.msra.mxu0 0.0
        %1516 = vmatprep.subr.mxu0 0.0
        %1517 = vmatpush1.msra.mxu0 0.0
        %1518 = vmatprep.subr.mxu0 0.0
        %1519 = vmatpush1.msra.mxu0 0.0
        %1520 = vmatprep.subr.mxu0 0.0
        %1521 = vmatpush1.msra.mxu0 0.0
        %1522 = vmatprep.subr.mxu0 0.0
        %1523 = vmatpush1.msra.mxu0 %v1403
        %1524 = vmatprep.subr.mxu0 0.0
        %1525 = vmatpush2.msra.mxu0 0.0
        %1526 = vmatprep.subr.mxu0 0.0
        %1527 = vmatpush2.msra.mxu0 0.0
        %1528 = vmatprep.subr.mxu0 0.0
        %1529 = vmatpush2.msra.mxu0 0.0
        %1530 = vmatprep.subr.mxu0 0.0
        %1531 = vmatpush2.msra.mxu0 0.0
        %1532 = vmatprep.subr.mxu0 0.0
        %1533 = vmatpush2.msra.mxu0 0.0
        %1534 = vmatprep.subr.mxu0 0.0
        %1535 = vmatpush2.msra.mxu0 0.0
        %1536 = vmatprep.subr.mxu0 0.0
        %1537 = vmatpush2.msra.mxu0 0.0
        %1538 = vmatprep.subr.mxu0 0.0
        %1539 = vmatpush2.msra.mxu0 0.0
        %1540 = vmatprep.subr.mxu0 0.0
        %1541 = vmatpush2.msra.mxu0 0.0
        %1542 = vmatprep.subr.mxu0 0.0
        %1543 = vmatpush2.msra.mxu0 0.0
        %1544 = vmatprep.subr.mxu0 0.0
        %1545 = vmatpush2.msra.mxu0 0.0
        %1546 = vmatprep.subr.mxu0 0.0
        %1547 = vmatpush2.msra.mxu0 0.0
        %1548 = vmatprep.subr.mxu0 0.0
        %1549 = vmatpush2.msra.mxu0 0.0
        %1550 = vmatprep.subr.mxu0 0.0
        %1551 = vmatpush2.msra.mxu0 0.0
        %1552 = vmatprep.subr.mxu0 0.0
        %1553 = vmatpush2.msra.mxu0 0.0
        %1554 = vmatprep.subr.mxu0 0.0
        %1555 = vmatpush2.msra.mxu0 0.0
        %1556 = vmatprep.mubr.f32.mxu0 0.0
        %1557 = vmatmul.mubr.f32.gmra.mxu0 %v1490
        %v1558 = vpop.f32.mrf.mxu0
        %v1559 = vadd.f32 0.0, %v1558
        %v1560 = vpop.f32.mrf.mxu0
        %1561 = vdwg.mxu0
        %v1562 = vld [vmem:[#allocation5] sm:$0xff]
        %v1563 = vld [vmem:[#allocation5 + $0x8] sm:$0xff]
        %v1564 = vld [vmem:[#allocation5 + $0x10] sm:$0xff]
        %v1565 = vld [vmem:[#allocation5 + $0x18] sm:$0xff]
        %v1566 = vld [vmem:[#allocation5 + $0x20] sm:$0xff]
        %v1567 = vld [vmem:[#allocation5 + $0x28] sm:$0xff]
        %v1568 = vld [vmem:[#allocation5 + $0x30] sm:$0xff]
        %v1569 = vld [vmem:[#allocation5 + $0x38] sm:$0xff]
        %v1570 = vld [vmem:[#allocation5 + $0x40] sm:$0xff]
        %v1571 = vld [vmem:[#allocation5 + $0x48] sm:$0xff]
        %v1572 = vld [vmem:[#allocation5 + $0x50] sm:$0xff]
        %v1573 = vld [vmem:[#allocation5 + $0x58] sm:$0xff]
        %v1574 = vld [vmem:[#allocation5 + $0x60] sm:$0xff]
        %v1575 = vld [vmem:[#allocation5 + $0x68] sm:$0xff]
        %v1576 = vld [vmem:[#allocation5 + $0x70] sm:$0xff]
        %v1577 = vld [vmem:[#allocation5 + $0x78] sm:$0xff]
        %v1578 = vld [vmem:[%s17] sm:$0x1]
        %v1580 = vlaneseq
        %v1581 = vshrl.u32 %v1580, 7
        %v1582 = vsub.s32 0, %v1581
        %v1583 = vrot.slane %v1578, %v1582
        %1585 = vmatprep.subr.mxu0 0.0
        %1586 = vmatpush1.msra.mxu0 %v1577
        %1587 = vmatprep.subr.mxu0 0.0
        %1588 = vmatpush1.msra.mxu0 %v1576
        %1589 = vmatprep.subr.mxu0 0.0
        %1590 = vmatpush1.msra.mxu0 %v1575
        %1591 = vmatprep.subr.mxu0 0.0
        %1592 = vmatpush1.msra.mxu0 %v1574
        %1593 = vmatprep.subr.mxu0 0.0
        %1594 = vmatpush1.msra.mxu0 %v1573
        %1595 = vmatprep.subr.mxu0 0.0
        %1596 = vmatpush1.msra.mxu0 %v1572
        %1597 = vmatprep.subr.mxu0 0.0
        %1598 = vmatpush1.msra.mxu0 %v1571
        %1599 = vmatprep.subr.mxu0 0.0
        %1600 = vmatpush1.msra.mxu0 %v1570
        %1601 = vmatprep.subr.mxu0 0.0
        %1602 = vmatpush1.msra.mxu0 %v1569
        %1603 = vmatprep.subr.mxu0 0.0
        %1604 = vmatpush1.msra.mxu0 %v1568
        %1605 = vmatprep.subr.mxu0 0.0
        %1606 = vmatpush1.msra.mxu0 %v1567
        %1607 = vmatprep.subr.mxu0 0.0
        %1608 = vmatpush1.msra.mxu0 %v1566
        %1609 = vmatprep.subr.mxu0 0.0
        %1610 = vmatpush1.msra.mxu0 %v1565
        %1611 = vmatprep.subr.mxu0 0.0
        %1612 = vmatpush1.msra.mxu0 %v1564
        %1613 = vmatprep.subr.mxu0 0.0
        %1614 = vmatpush1.msra.mxu0 %v1563
        %1615 = vmatprep.subr.mxu0 0.0
        %1616 = vmatpush1.msra.mxu0 %v1562
        %1617 = vmatprep.subr.mxu0 0.0
        %1618 = vmatpush2.msra.mxu0 0.0
        %1619 = vmatprep.subr.mxu0 0.0
        %1620 = vmatpush2.msra.mxu0 0.0
        %1621 = vmatprep.subr.mxu0 0.0
        %1622 = vmatpush2.msra.mxu0 0.0
        %1623 = vmatprep.subr.mxu0 0.0
        %1624 = vmatpush2.msra.mxu0 0.0
        %1625 = vmatprep.subr.mxu0 0.0
        %1626 = vmatpush2.msra.mxu0 0.0
        %1627 = vmatprep.subr.mxu0 0.0
        %1628 = vmatpush2.msra.mxu0 0.0
        %1629 = vmatprep.subr.mxu0 0.0
        %1630 = vmatpush2.msra.mxu0 0.0
        %1631 = vmatprep.subr.mxu0 0.0
        %1632 = vmatpush2.msra.mxu0 0.0
        %1633 = vmatprep.subr.mxu0 0.0
        %1634 = vmatpush2.msra.mxu0 0.0
        %1635 = vmatprep.subr.mxu0 0.0
        %1636 = vmatpush2.msra.mxu0 0.0
        %1637 = vmatprep.subr.mxu0 0.0
        %1638 = vmatpush2.msra.mxu0 0.0
        %1639 = vmatprep.subr.mxu0 0.0
        %1640 = vmatpush2.msra.mxu0 0.0
        %1641 = vmatprep.subr.mxu0 0.0
        %1642 = vmatpush2.msra.mxu0 0.0
        %1643 = vmatprep.subr.mxu0 0.0
        %1644 = vmatpush2.msra.mxu0 0.0
        %1645 = vmatprep.subr.mxu0 0.0
        %1646 = vmatpush2.msra.mxu0 0.0
        %1647 = vmatprep.subr.mxu0 0.0
        %1648 = vmatpush2.msra.mxu0 0.0
        %1649 = vmatprep.mubr.f32.mxu0 0.0
        %1650 = vmatmul.mubr.f32.gmra.mxu0 %v1559
        %v1651 = vpop.f32.mrf.mxu0
        %v1652 = vadd.f32 %v1583, %v1651
        %v1653 = vpop.f32.mrf.mxu0
        %1654 = vdwg.mxu0
        %v1655 = vadd.f32 %v1197, %v1652
        %v1656 = vlaneseq
        %v1657 = vshrl.u32 %v1656, 7
        %v1658 = vlaneseq
        %v1659 = vshrl.u32 %v1658, 7
        %v1660 = vsub.s32 0, %v1659
        %v1661 = vrot.slane %v1655, %v1660
        %v1662 = vlaneseq
        %v1663 = vshrl.u32 %v1662, 7
        %v1664 = vsub.s32 7, %v1663
        %v1665 = vrot.slane %v1655, %v1664
        %v1666 = vrot.slane %v1655, 7
        %v1667 = vrot.slane %v1655, 1
        %vm1668 = vcmp.lt.s32.totalorder %v1657, 1
        %v1669 = vsel %vm1668, %v1661, %v1666
        %v1670 = vadd.f32 %v1655, %v1669
        %vm1671 = vcmp.ge.s32.totalorder %v1657, 7
        %v1672 = vsel %vm1671, %v1665, %v1667
        %v1673 = vadd.f32 %v1670, %v1672
        %v1674 = vmul.f32 %v1673, 0.33333334
        %v1675 = vsub.f32 %v1655, %v1674
        %v1676 = vld [vmem:[#allocation7] sm:$0xff]
        %v1677 = vld [vmem:[#allocation7 + $0x8] sm:$0xff]
        %v1678 = vld [vmem:[#allocation7 + $0x10] sm:$0xff]
        %v1679 = vld [vmem:[#allocation7 + $0x18] sm:$0xff]
        %v1680 = vld [vmem:[#allocation7 + $0x20] sm:$0xff]
        %v1681 = vld [vmem:[#allocation7 + $0x28] sm:$0xff]
        %v1682 = vld [vmem:[#allocation7 + $0x30] sm:$0xff]
        %v1683 = vld [vmem:[#allocation7 + $0x38] sm:$0xff]
        %v1684 = vld [vmem:[#allocation7 + $0x40] sm:$0xff]
        %v1685 = vld [vmem:[#allocation7 + $0x48] sm:$0xff]
        %v1686 = vld [vmem:[#allocation7 + $0x50] sm:$0xff]
        %v1687 = vld [vmem:[#allocation7 + $0x58] sm:$0xff]
        %v1688 = vld [vmem:[#allocation7 + $0x60] sm:$0xff]
        %v1689 = vld [vmem:[#allocation7 + $0x68] sm:$0xff]
        %v1690 = vld [vmem:[#allocation7 + $0x70] sm:$0xff]
        %v1691 = vld [vmem:[#allocation7 + $0x78] sm:$0xff]
        %v1692 = vld [vmem:[%s21] sm:$0x1]
        %v1694 = vlaneseq
        %v1695 = vshrl.u32 %v1694, 7
        %v1696 = vsub.s32 0, %v1695
        %v1697 = vrot.slane %v1692, %v1696
        %1699 = vmatprep.subr.mxu0 0.0
        %1700 = vmatpush1.msra.mxu0 %v1691
        %1701 = vmatprep.subr.mxu0 0.0
        %1702 = vmatpush1.msra.mxu0 %v1690
        %1703 = vmatprep.subr.mxu0 0.0
        %1704 = vmatpush1.msra.mxu0 %v1689
        %1705 = vmatprep.subr.mxu0 0.0
        %1706 = vmatpush1.msra.mxu0 %v1688
        %1707 = vmatprep.subr.mxu0 0.0
        %1708 = vmatpush1.msra.mxu0 %v1687
        %1709 = vmatprep.subr.mxu0 0.0
        %1710 = vmatpush1.msra.mxu0 %v1686
        %1711 = vmatprep.subr.mxu0 0.0
        %1712 = vmatpush1.msra.mxu0 %v1685
        %1713 = vmatprep.subr.mxu0 0.0
        %1714 = vmatpush1.msra.mxu0 %v1684
        %1715 = vmatprep.subr.mxu0 0.0
        %1716 = vmatpush1.msra.mxu0 %v1683
        %1717 = vmatprep.subr.mxu0 0.0
        %1718 = vmatpush1.msra.mxu0 %v1682
        %1719 = vmatprep.subr.mxu0 0.0
        %1720 = vmatpush1.msra.mxu0 %v1681
        %1721 = vmatprep.subr.mxu0 0.0
        %1722 = vmatpush1.msra.mxu0 %v1680
        %1723 = vmatprep.subr.mxu0 0.0
        %1724 = vmatpush1.msra.mxu0 %v1679
        %1725 = vmatprep.subr.mxu0 0.0
        %1726 = vmatpush1.msra.mxu0 %v1678
        %1727 = vmatprep.subr.mxu0 0.0
        %1728 = vmatpush1.msra.mxu0 %v1677
        %1729 = vmatprep.subr.mxu0 0.0
        %1730 = vmatpush1.msra.mxu0 %v1676
        %1731 = vmatprep.subr.mxu0 0.0
        %1732 = vmatpush2.msra.mxu0 0.0
        %1733 = vmatprep.subr.mxu0 0.0
        %1734 = vmatpush2.msra.mxu0 0.0
        %1735 = vmatprep.subr.mxu0 0.0
        %1736 = vmatpush2.msra.mxu0 0.0
        %1737 = vmatprep.subr.mxu0 0.0
        %1738 = vmatpush2.msra.mxu0 0.0
        %1739 = vmatprep.subr.mxu0 0.0
        %1740 = vmatpush2.msra.mxu0 0.0
        %1741 = vmatprep.subr.mxu0 0.0
        %1742 = vmatpush2.msra.mxu0 0.0
        %1743 = vmatprep.subr.mxu0 0.0
        %1744 = vmatpush2.msra.mxu0 0.0
        %1745 = vmatprep.subr.mxu0 0.0
        %1746 = vmatpush2.msra.mxu0 0.0
        %1747 = vmatprep.subr.mxu0 0.0
        %1748 = vmatpush2.msra.mxu0 0.0
        %1749 = vmatprep.subr.mxu0 0.0
        %1750 = vmatpush2.msra.mxu0 0.0
        %1751 = vmatprep.subr.mxu0 0.0
        %1752 = vmatpush2.msra.mxu0 0.0
        %1753 = vmatprep.subr.mxu0 0.0
        %1754 = vmatpush2.msra.mxu0 0.0
        %1755 = vmatprep.subr.mxu0 0.0
        %1756 = vmatpush2.msra.mxu0 0.0
        %1757 = vmatprep.subr.mxu0 0.0
        %1758 = vmatpush2.msra.mxu0 0.0
        %1759 = vmatprep.subr.mxu0 0.0
        %1760 = vmatpush2.msra.mxu0 0.0
        %1761 = vmatprep.subr.mxu0 0.0
        %1762 = vmatpush2.msra.mxu0 0.0
        %1763 = vmatprep.mubr.f32.mxu0 0.0
        %1764 = vmatmul.mubr.f32.gmra.mxu0 %v1675
        %v1765 = vpop.f32.mrf.mxu0
        %v1766 = vadd.f32 %v1697, %v1765
        %v1767 = vpop.f32.mrf.mxu0
        %1768 = vdwg.mxu0
        %v1769 = vmax.f32 %v1766, 0.0
        %v1770 = vld [vmem:[#allocation8] sm:$0xff]
        %v1771 = vld [vmem:[#allocation8 + $0x8] sm:$0xff]
        %v1772 = vld [vmem:[#allocation8 + $0x10] sm:$0xff]
        %v1773 = vld [vmem:[#allocation8 + $0x18] sm:$0xff]
        %v1774 = vld [vmem:[#allocation8 + $0x20] sm:$0xff]
        %v1775 = vld [vmem:[#allocation8 + $0x28] sm:$0xff]
        %v1776 = vld [vmem:[#allocation8 + $0x30] sm:$0xff]
        %v1777 = vld [vmem:[#allocation8 + $0x38] sm:$0xff]
        %v1778 = vld [vmem:[#allocation8 + $0x40] sm:$0xff]
        %v1779 = vld [vmem:[#allocation8 + $0x48] sm:$0xff]
        %v1780 = vld [vmem:[#allocation8 + $0x50] sm:$0xff]
        %v1781 = vld [vmem:[#allocation8 + $0x58] sm:$0xff]
        %v1782 = vld [vmem:[#allocation8 + $0x60] sm:$0xff]
        %v1783 = vld [vmem:[#allocation8 + $0x68] sm:$0xff]
        %v1784 = vld [vmem:[#allocation8 + $0x70] sm:$0xff]
        %v1785 = vld [vmem:[#allocation8 + $0x78] sm:$0xff]
        %v1786 = vld [vmem:[%s25] sm:$0x1]
        %v1788 = vlaneseq
        %v1789 = vshrl.u32 %v1788, 7
        %v1790 = vsub.s32 0, %v1789
        %v1791 = vrot.slane %v1786, %v1790
        %1793 = vmatprep.subr.mxu0 0.0
        %1794 = vmatpush1.msra.mxu0 %v1785
        %1795 = vmatprep.subr.mxu0 0.0
        %1796 = vmatpush1.msra.mxu0 %v1784
        %1797 = vmatprep.subr.mxu0 0.0
        %1798 = vmatpush1.msra.mxu0 %v1783
        %1799 = vmatprep.subr.mxu0 0.0
        %1800 = vmatpush1.msra.mxu0 %v1782
        %1801 = vmatprep.subr.mxu0 0.0
        %1802 = vmatpush1.msra.mxu0 %v1781
        %1803 = vmatprep.subr.mxu0 0.0
        %1804 = vmatpush1.msra.mxu0 %v1780
        %1805 = vmatprep.subr.mxu0 0.0
        %1806 = vmatpush1.msra.mxu0 %v1779
        %1807 = vmatprep.subr.mxu0 0.0
        %1808 = vmatpush1.msra.mxu0 %v1778
        %1809 = vmatprep.subr.mxu0 0.0
        %1810 = vmatpush1.msra.mxu0 %v1777
        %1811 = vmatprep.subr.mxu0 0.0
        %1812 = vmatpush1.msra.mxu0 %v1776
        %1813 = vmatprep.subr.mxu0 0.0
        %1814 = vmatpush1.msra.mxu0 %v1775
        %1815 = vmatprep.subr.mxu0 0.0
        %1816 = vmatpush1.msra.mxu0 %v1774
        %1817 = vmatprep.subr.mxu0 0.0
        %1818 = vmatpush1.msra.mxu0 %v1773
        %1819 = vmatprep.subr.mxu0 0.0
        %1820 = vmatpush1.msra.mxu0 %v1772
        %1821 = vmatprep.subr.mxu0 0.0
        %1822 = vmatpush1.msra.mxu0 %v1771
        %1823 = vmatprep.subr.mxu0 0.0
        %1824 = vmatpush1.msra.mxu0 %v1770
        %1825 = vmatprep.subr.mxu0 0.0
        %1826 = vmatpush2.msra.mxu0 0.0
        %1827 = vmatprep.subr.mxu0 0.0
        %1828 = vmatpush2.msra.mxu0 0.0
        %1829 = vmatprep.subr.mxu0 0.0
        %1830 = vmatpush2.msra.mxu0 0.0
        %1831 = vmatprep.subr.mxu0 0.0
        %1832 = vmatpush2.msra.mxu0 0.0
        %1833 = vmatprep.subr.mxu0 0.0
        %1834 = vmatpush2.msra.mxu0 0.0
        %1835 = vmatprep.subr.mxu0 0.0
        %1836 = vmatpush2.msra.mxu0 0.0
        %1837 = vmatprep.subr.mxu0 0.0
        %1838 = vmatpush2.msra.mxu0 0.0
        %1839 = vmatprep.subr.mxu0 0.0
        %1840 = vmatpush2.msra.mxu0 0.0
        %1841 = vmatprep.subr.mxu0 0.0
        %1842 = vmatpush2.msra.mxu0 0.0
        %1843 = vmatprep.subr.mxu0 0.0
        %1844 = vmatpush2.msra.mxu0 0.0
        %1845 = vmatprep.subr.mxu0 0.0
        %1846 = vmatpush2.msra.mxu0 0.0
        %1847 = vmatprep.subr.mxu0 0.0
        %1848 = vmatpush2.msra.mxu0 0.0
        %1849 = vmatprep.subr.mxu0 0.0
        %1850 = vmatpush2.msra.mxu0 0.0
        %1851 = vmatprep.subr.mxu0 0.0
        %1852 = vmatpush2.msra.mxu0 0.0
        %1853 = vmatprep.subr.mxu0 0.0
        %1854 = vmatpush2.msra.mxu0 0.0
        %1855 = vmatprep.subr.mxu0 0.0
        %1856 = vmatpush2.msra.mxu0 0.0
        %1857 = vmatprep.mubr.f32.mxu0 0.0
        %1858 = vmatmul.mubr.f32.gmra.mxu0 %v1769
        %v1859 = vpop.f32.mrf.mxu0
        %v1860 = vadd.f32 %v1791, %v1859
        %v1861 = vpop.f32.mrf.mxu0
        %1862 = vdwg.mxu0
        %v1863 = vadd.f32 %v1675, %v1860
        %v1864 = vlaneseq
        %v1865 = vshrl.u32 %v1864, 7
        %v1866 = vsub.s32 0, %v1865
        %v1867 = vrot.slane %v1863, %v1866
        %v1868 = vlaneseq
        %v1869 = vshrl.u32 %v1868, 7
        %v1870 = vsub.s32 7, %v1869
        %v1871 = vrot.slane %v1863, %v1870
        %v1872 = vrot.slane %v1863, 7
        %v1873 = vrot.slane %v1863, 1
        %v1874 = vsel %vm1668, %v1867, %v1872
        %v1875 = vadd.f32 %v1863, %v1874
        %v1876 = vsel %vm1671, %v1871, %v1873
        %v1877 = vadd.f32 %v1875, %v1876
        %v1878 = vmul.f32 %v1877, 0.33333334
        %v1879 = vsub.f32 %v1863, %v1878
        %v1880 = vlaneseq
        %v1881 = vshrl.u32 %v1880, 7
        %v1882 = vsub.s32 0, %v1881
        %v1883 = vrot.slane %v1114, %v1882
        %v1884 = vlaneseq
        %v1885 = vshrl.u32 %v1884, 7
        %v1886 = vsub.s32 7, %v1885
        %v1887 = vrot.slane %v1114, %v1886
        %v1888 = vrot.slane %v1114, 7
        %v1889 = vrot.slane %v1114, 1
        %v1890 = vsel %vm1668, %v1883, %v1888
        %v1891 = vadd.f32 %v1114, %v1890
        %v1892 = vsel %vm1671, %v1887, %v1889
        %v1893 = vadd.f32 %v1891, %v1892
        %v1894 = vmul.f32 %v1893, 0.33333334
        %v1895 = vsub.f32 %v1114, %v1894
        %v1896 = vsel %vm1102, %v1114, 0.0
        %v1897 = vrot.slane %v1896, 4
        %v1898 = vadd.f32 %v1896, %v1897
        %v1899 = vrot.slane %v1898, 2
        %v1900 = vadd.f32 %v1898, %v1899
        %v1901 = vrot.slane %v1900, 1
        %v1902 = vadd.f32 %v1900, %v1901
        %v1903 = vmul.f32 %v1902, %v1110
        %v1905 = vrot.slane %v1895, 4
        %v1907 = vsel %vm1126, %v1905, 0.0
        %v1909 = vrot.slane %v1894, 4
        %v1911 = vsel %vm1126, %v1909, %v1903
        %v1912 = vld [vmem:[%s7] sm:$0xf]
        %v1913 = vld [vmem:[%s9] sm:$0x1]
        %v1915 = vlaneseq
        %v1916 = vshrl.u32 %v1915, 7
        %v1917 = vsub.s32 0, %v1916
        %v1918 = vrot.slane %v1913, %v1917
        %v1921 = vsel %vm1102, %v1907, 0
        %v1924 = vsel %vm1126, %v1912, 0
        %1926 = vmatprep.subr.mxu0 0.0
        %1927 = vmatpush1.msra.mxu0 0.0
        %1928 = vmatprep.subr.mxu0 0.0
        %1929 = vmatpush1.msra.mxu0 0.0
        %1930 = vmatprep.subr.mxu0 0.0
        %1931 = vmatpush1.msra.mxu0 0.0
        %1932 = vmatprep.subr.mxu0 0.0
        %1933 = vmatpush1.msra.mxu0 0.0
        %1934 = vmatprep.subr.mxu0 0.0
        %1935 = vmatpush1.msra.mxu0 0.0
        %1936 = vmatprep.subr.mxu0 0.0
        %1937 = vmatpush1.msra.mxu0 0.0
        %1938 = vmatprep.subr.mxu0 0.0
        %1939 = vmatpush1.msra.mxu0 0.0
        %1940 = vmatprep.subr.mxu0 0.0
        %1941 = vmatpush1.msra.mxu0 0.0
        %1942 = vmatprep.subr.mxu0 0.0
        %1943 = vmatpush1.msra.mxu0 0.0
        %1944 = vmatprep.subr.mxu0 0.0
        %1945 = vmatpush1.msra.mxu0 0.0
        %1946 = vmatprep.subr.mxu0 0.0
        %1947 = vmatpush1.msra.mxu0 0.0
        %1948 = vmatprep.subr.mxu0 0.0
        %1949 = vmatpush1.msra.mxu0 0.0
        %1950 = vmatprep.subr.mxu0 0.0
        %1951 = vmatpush1.msra.mxu0 0.0
        %1952 = vmatprep.subr.mxu0 0.0
        %1953 = vmatpush1.msra.mxu0 0.0
        %1954 = vmatprep.subr.mxu0 0.0
        %1955 = vmatpush1.msra.mxu0 0.0
        %1956 = vmatprep.subr.mxu0 0.0
        %1957 = vmatpush1.msra.mxu0 %v1924
        %1958 = vmatprep.subr.mxu0 0.0
        %1959 = vmatpush2.msra.mxu0 0.0
        %1960 = vmatprep.subr.mxu0 0.0
        %1961 = vmatpush2.msra.mxu0 0.0
        %1962 = vmatprep.subr.mxu0 0.0
        %1963 = vmatpush2.msra.mxu0 0.0
        %1964 = vmatprep.subr.mxu0 0.0
        %1965 = vmatpush2.msra.mxu0 0.0
        %1966 = vmatprep.subr.mxu0 0.0
        %1967 = vmatpush2.msra.mxu0 0.0
        %1968 = vmatprep.subr.mxu0 0.0
        %1969 = vmatpush2.msra.mxu0 0.0
        %1970 = vmatprep.subr.mxu0 0.0
        %1971 = vmatpush2.msra.mxu0 0.0
        %1972 = vmatprep.subr.mxu0 0.0
        %1973 = vmatpush2.msra.mxu0 0.0
        %1974 = vmatprep.subr.mxu0 0.0
        %1975 = vmatpush2.msra.mxu0 0.0
        %1976 = vmatprep.subr.mxu0 0.0
        %1977 = vmatpush2.msra.mxu0 0.0
        %1978 = vmatprep.subr.mxu0 0.0
        %1979 = vmatpush2.msra.mxu0 0.0
        %1980 = vmatprep.subr.mxu0 0.0
        %1981 = vmatpush2.msra.mxu0 0.0
        %1982 = vmatprep.subr.mxu0 0.0
        %1983 = vmatpush2.msra.mxu0 0.0
        %1984 = vmatprep.subr.mxu0 0.0
        %1985 = vmatpush2.msra.mxu0 0.0
        %1986 = vmatprep.subr.mxu0 0.0
        %1987 = vmatpush2.msra.mxu0 0.0
        %1988 = vmatprep.subr.mxu0 0.0
        %1989 = vmatpush2.msra.mxu0 0.0
        %1990 = vmatprep.mubr.f32.mxu0 0.0
        %1991 = vmatmul.mubr.f32.gmra.mxu0 %v1921
        %v1992 = vpop.f32.mrf.mxu0
        %v1993 = vadd.f32 %v1918, %v1992
        %v1994 = vpop.f32.mrf.mxu0
        %1995 = vdwg.mxu0
        %v1996 = vld [vmem:[#allocation10] sm:$0xff]
        %v1997 = vld [vmem:[#allocation10 + $0x8] sm:$0xff]
        %v1998 = vld [vmem:[#allocation10 + $0x10] sm:$0xff]
        %v1999 = vld [vmem:[#allocation10 + $0x18] sm:$0xff]
        %v2000 = vld [vmem:[#allocation10 + $0x20] sm:$0xff]
        %v2001 = vld [vmem:[#allocation10 + $0x28] sm:$0xff]
        %v2002 = vld [vmem:[#allocation10 + $0x30] sm:$0xff]
        %v2003 = vld [vmem:[#allocation10 + $0x38] sm:$0xff]
        %v2004 = vld [vmem:[#allocation10 + $0x40] sm:$0xff]
        %v2005 = vld [vmem:[#allocation10 + $0x48] sm:$0xff]
        %v2006 = vld [vmem:[#allocation10 + $0x50] sm:$0xff]
        %v2007 = vld [vmem:[#allocation10 + $0x58] sm:$0xff]
        %v2008 = vld [vmem:[#allocation10 + $0x60] sm:$0xff]
        %v2009 = vld [vmem:[#allocation10 + $0x68] sm:$0xff]
        %v2010 = vld [vmem:[#allocation10 + $0x70] sm:$0xff]
        %v2011 = vld [vmem:[#allocation10 + $0x78] sm:$0xff]
        %v2012 = vld [vmem:[#allocation10 + $0x80] sm:$0xff]
        %v2013 = vld [vmem:[#allocation10 + $0x88] sm:$0xff]
        %v2014 = vld [vmem:[#allocation10 + $0x90] sm:$0xff]
        %v2015 = vld [vmem:[#allocation10 + $0x98] sm:$0xff]
        %v2016 = vld [vmem:[#allocation10 + $0xa0] sm:$0xff]
        %v2017 = vld [vmem:[#allocation10 + $0xa8] sm:$0xff]
        %v2018 = vld [vmem:[#allocation10 + $0xb0] sm:$0xff]
        %v2019 = vld [vmem:[#allocation10 + $0xb8] sm:$0xff]
        %v2020 = vld [vmem:[#allocation10 + $0xc0] sm:$0xff]
        %v2021 = vld [vmem:[#allocation10 + $0xc8] sm:$0xff]
        %v2022 = vld [vmem:[#allocation10 + $0xd0] sm:$0xff]
        %v2023 = vld [vmem:[#allocation10 + $0xd8] sm:$0xff]
        %v2024 = vld [vmem:[#allocation10 + $0xe0] sm:$0xff]
        %v2025 = vld [vmem:[#allocation10 + $0xe8] sm:$0xff]
        %v2026 = vld [vmem:[#allocation10 + $0xf0] sm:$0xff]
        %v2027 = vld [vmem:[#allocation10 + $0xf8] sm:$0xff]
        %v2028 = vld [vmem:[#allocation10 + $0x100] sm:$0xff]
        %v2029 = vld [vmem:[#allocation10 + $0x108] sm:$0xff]
        %v2030 = vld [vmem:[#allocation10 + $0x110] sm:$0xff]
        %v2031 = vld [vmem:[#allocation10 + $0x118] sm:$0xff]
        %v2032 = vld [vmem:[#allocation10 + $0x120] sm:$0xff]
        %v2033 = vld [vmem:[#allocation10 + $0x128] sm:$0xff]
        %v2034 = vld [vmem:[#allocation10 + $0x130] sm:$0xff]
        %v2035 = vld [vmem:[#allocation10 + $0x138] sm:$0xff]
        %v2036 = vld [vmem:[#allocation10 + $0x140] sm:$0xff]
        %v2037 = vld [vmem:[#allocation10 + $0x148] sm:$0xff]
        %v2038 = vld [vmem:[#allocation10 + $0x150] sm:$0xff]
        %v2039 = vld [vmem:[#allocation10 + $0x158] sm:$0xff]
        %v2040 = vld [vmem:[#allocation10 + $0x160] sm:$0xff]
        %v2041 = vld [vmem:[#allocation10 + $0x168] sm:$0xff]
        %v2042 = vld [vmem:[#allocation10 + $0x170] sm:$0xff]
        %v2043 = vld [vmem:[#allocation10 + $0x178] sm:$0xff]
        %v2044 = vld [vmem:[%s29] sm:$0x7]
        %v2046 = vlaneseq
        %v2047 = vshrl.u32 %v2046, 7
        %v2048 = vsub.s32 0, %v2047
        %v2049 = vrot.slane %v2044, %v2048
        %v2050 = vlaneseq
        %v2051 = vshrl.u32 %v2050, 7
        %v2052 = vsub.s32 1, %v2051
        %v2053 = vrot.slane %v2044, %v2052
        %v2054 = vlaneseq
        %v2055 = vshrl.u32 %v2054, 7
        %v2056 = vsub.s32 2, %v2055
        %v2057 = vrot.slane %v2044, %v2056
        %2061 = vmatprep.subr.mxu0 %v2042
        %2062 = vmatpush1.msra.mxu0 %v2041
        %2063 = vmatprep.subr.mxu0 %v2039
        %2064 = vmatpush1.msra.mxu0 %v2038
        %2065 = vmatprep.subr.mxu0 %v2036
        %2066 = vmatpush1.msra.mxu0 %v2035
        %2067 = vmatprep.subr.mxu0 %v2033
        %2068 = vmatpush1.msra.mxu0 %v2032
        %2069 = vmatprep.subr.mxu0 %v2030
        %2070 = vmatpush1.msra.mxu0 %v2029
        %2071 = vmatprep.subr.mxu0 %v2027
        %2072 = vmatpush1.msra.mxu0 %v2026
        %2073 = vmatprep.subr.mxu0 %v2024
        %2074 = vmatpush1.msra.mxu0 %v2023
        %2075 = vmatprep.subr.mxu0 %v2021
        %2076 = vmatpush1.msra.mxu0 %v2020
        %2077 = vmatprep.subr.mxu0 %v2018
        %2078 = vmatpush1.msra.mxu0 %v2017
        %2079 = vmatprep.subr.mxu0 %v2015
        %2080 = vmatpush1.msra.mxu0 %v2014
        %2081 = vmatprep.subr.mxu0 %v2012
        %2082 = vmatpush1.msra.mxu0 %v2011
        %2083 = vmatprep.subr.mxu0 %v2009
        %2084 = vmatpush1.msra.mxu0 %v2008
        %2085 = vmatprep.subr.mxu0 %v2006
        %2086 = vmatpush1.msra.mxu0 %v2005
        %2087 = vmatprep.subr.mxu0 %v2003
        %2088 = vmatpush1.msra.mxu0 %v2002
        %2089 = vmatprep.subr.mxu0 %v2000
        %2090 = vmatpush1.msra.mxu0 %v1999
        %2091 = vmatprep.subr.mxu0 %v1997
        %2092 = vmatpush1.msra.mxu0 %v1996
        %2093 = vmatprep.subr.mxu0 0.0
        %2094 = vmatpush2.msra.mxu0 0.0
        %2095 = vmatprep.subr.mxu0 0.0
        %2096 = vmatpush2.msra.mxu0 0.0
        %2097 = vmatprep.subr.mxu0 0.0
        %2098 = vmatpush2.msra.mxu0 0.0
        %2099 = vmatprep.subr.mxu0 0.0
        %2100 = vmatpush2.msra.mxu0 0.0
        %2101 = vmatprep.subr.mxu0 0.0
        %2102 = vmatpush2.msra.mxu0 0.0
        %2103 = vmatprep.subr.mxu0 0.0
        %2104 = vmatpush2.msra.mxu0 0.0
        %2105 = vmatprep.subr.mxu0 0.0
        %2106 = vmatpush2.msra.mxu0 0.0
        %2107 = vmatprep.subr.mxu0 0.0
        %2108 = vmatpush2.msra.mxu0 0.0
        %2109 = vmatprep.subr.mxu0 0.0
        %2110 = vmatpush2.msra.mxu0 0.0
        %2111 = vmatprep.subr.mxu0 0.0
        %2112 = vmatpush2.msra.mxu0 0.0
        %2113 = vmatprep.subr.mxu0 0.0
        %2114 = vmatpush2.msra.mxu0 0.0
        %2115 = vmatprep.subr.mxu0 0.0
        %2116 = vmatpush2.msra.mxu0 0.0
        %2117 = vmatprep.subr.mxu0 0.0
        %2118 = vmatpush2.msra.mxu0 0.0
        %2119 = vmatprep.subr.mxu0 0.0
        %2120 = vmatpush2.msra.mxu0 0.0
        %2121 = vmatprep.subr.mxu0 0.0
        %2122 = vmatpush2.msra.mxu0 0.0
        %2123 = vmatprep.subr.mxu0 0.0
        %2124 = vmatpush2.msra.mxu0 0.0
        %2125 = vmatprep.mubr.f32.mxu0 0.0
        %2126 = vmatmul.mubr.f32.gmra.mxu0 %v1993
        %v2127 = vpop.f32.mrf.mxu0
        %v2128 = vadd.f32 %v2049, %v2127
        %v2129 = vpop.f32.mrf.mxu0
        %v2130 = vadd.f32 %v2053, %v2129
        %2131 = vdwg.mxu0
        %2132 = vmatprep.subr.mxu0 0.0
        %2133 = vmatpush1.msra.mxu0 %v2043
        %2134 = vmatprep.subr.mxu0 0.0
        %2135 = vmatpush1.msra.mxu0 %v2040
        %2136 = vmatprep.subr.mxu0 0.0
        %2137 = vmatpush1.msra.mxu0 %v2037
        %2138 = vmatprep.subr.mxu0 0.0
        %2139 = vmatpush1.msra.mxu0 %v2034
        %2140 = vmatprep.subr.mxu0 0.0
        %2141 = vmatpush1.msra.mxu0 %v2031
        %2142 = vmatprep.subr.mxu0 0.0
        %2143 = vmatpush1.msra.mxu0 %v2028
        %2144 = vmatprep.subr.mxu0 0.0
        %2145 = vmatpush1.msra.mxu0 %v2025
        %2146 = vmatprep.subr.mxu0 0.0
        %2147 = vmatpush1.msra.mxu0 %v2022
        %2148 = vmatprep.subr.mxu0 0.0
        %2149 = vmatpush1.msra.mxu0 %v2019
        %2150 = vmatprep.subr.mxu0 0.0
        %2151 = vmatpush1.msra.mxu0 %v2016
        %2152 = vmatprep.subr.mxu0 0.0
        %2153 = vmatpush1.msra.mxu0 %v2013
        %2154 = vmatprep.subr.mxu0 0.0
        %2155 = vmatpush1.msra.mxu0 %v2010
        %2156 = vmatprep.subr.mxu0 0.0
        %2157 = vmatpush1.msra.mxu0 %v2007
        %2158 = vmatprep.subr.mxu0 0.0
        %2159 = vmatpush1.msra.mxu0 %v2004
        %2160 = vmatprep.subr.mxu0 0.0
        %2161 = vmatpush1.msra.mxu0 %v2001
        %2162 = vmatprep.subr.mxu0 0.0
        %2163 = vmatpush1.msra.mxu0 %v1998
        %2164 = vmatprep.subr.mxu0 0.0
        %2165 = vmatpush2.msra.mxu0 0.0
        %2166 = vmatprep.subr.mxu0 0.0
        %2167 = vmatpush2.msra.mxu0 0.0
        %2168 = vmatprep.subr.mxu0 0.0
        %2169 = vmatpush2.msra.mxu0 0.0
        %2170 = vmatprep.subr.mxu0 0.0
        %2171 = vmatpush2.msra.mxu0 0.0
        %2172 = vmatprep.subr.mxu0 0.0
        %2173 = vmatpush2.msra.mxu0 0.0
        %2174 = vmatprep.subr.mxu0 0.0
        %2175 = vmatpush2.msra.mxu0 0.0
        %2176 = vmatprep.subr.mxu0 0.0
        %2177 = vmatpush2.msra.mxu0 0.0
        %2178 = vmatprep.subr.mxu0 0.0
        %2179 = vmatpush2.msra.mxu0 0.0
        %2180 = vmatprep.subr.mxu0 0.0
        %2181 = vmatpush2.msra.mxu0 0.0
        %2182 = vmatprep.subr.mxu0 0.0
        %2183 = vmatpush2.msra.mxu0 0.0
        %2184 = vmatprep.subr.mxu0 0.0
        %2185 = vmatpush2.msra.mxu0 0.0
        %2186 = vmatprep.subr.mxu0 0.0
        %2187 = vmatpush2.msra.mxu0 0.0
        %2188 = vmatprep.subr.mxu0 0.0
        %2189 = vmatpush2.msra.mxu0 0.0
        %2190 = vmatprep.subr.mxu0 0.0
        %2191 = vmatpush2.msra.mxu0 0.0
        %2192 = vmatprep.subr.mxu0 0.0
        %2193 = vmatpush2.msra.mxu0 0.0
        %2194 = vmatprep.subr.mxu0 0.0
        %2195 = vmatpush2.msra.mxu0 0.0
        %2196 = vmatprep.mubr.f32.mxu0 0.0
        %2197 = vmatmul.mubr.f32.gmra.mxu0 %v1993
        %v2198 = vpop.f32.mrf.mxu0
        %v2199 = vadd.f32 %v2057, %v2198
        %v2200 = vpop.f32.mrf.mxu0
        %2201 = vdwg.mxu0
        %2202 = vmatprep.subr.mxu0 0.0
        %2203 = vmatpush1.xpose.msra.mxu0 0.0
        %2204 = vmatprep.subr.mxu0 0.0
        %2205 = vmatpush1.xpose.msra.mxu0 0.0
        %2206 = vmatprep.subr.mxu0 0.0
        %2207 = vmatpush1.xpose.msra.mxu0 0.0
        %2208 = vmatprep.subr.mxu0 0.0
        %2209 = vmatpush1.xpose.msra.mxu0 0.0
        %2210 = vmatprep.subr.mxu0 0.0
        %2211 = vmatpush1.xpose.msra.mxu0 0.0
        %2212 = vmatprep.subr.mxu0 0.0
        %2213 = vmatpush1.xpose.msra.mxu0 0.0
        %2214 = vmatprep.subr.mxu0 0.0
        %2215 = vmatpush1.xpose.msra.mxu0 0.0
        %2216 = vmatprep.subr.mxu0 0.0
        %2217 = vmatpush1.xpose.msra.mxu0 0.0
        %2218 = vmatprep.subr.mxu0 0.0
        %2219 = vmatpush1.xpose.msra.mxu0 0.0
        %2220 = vmatprep.subr.mxu0 0.0
        %2221 = vmatpush1.xpose.msra.mxu0 0.0
        %2222 = vmatprep.subr.mxu0 0.0
        %2223 = vmatpush1.xpose.msra.mxu0 0.0
        %2224 = vmatprep.subr.mxu0 0.0
        %2225 = vmatpush1.xpose.msra.mxu0 0.0
        %2226 = vmatprep.subr.mxu0 0.0
        %2227 = vmatpush1.xpose.msra.mxu0 0.0
        %2228 = vmatprep.subr.mxu0 0.0
        %2229 = vmatpush1.xpose.msra.mxu0 0.0
        %2230 = vmatprep.subr.mxu0 0.0
        %2231 = vmatpush1.xpose.msra.mxu0 0.0
        %2232 = vmatprep.subr.mxu0 0.0
        %2233 = vmatpush1.xpose.msra.mxu0 %v2130
        %2234 = vmatprep.subr.mxu0 0.0
        %2235 = vmatpush2.xpose.msra.mxu0 0.0
        %2236 = vmatprep.subr.mxu0 0.0
        %2237 = vmatpush2.xpose.msra.mxu0 0.0
        %2238 = vmatprep.subr.mxu0 0.0
        %2239 = vmatpush2.xpose.msra.mxu0 0.0
        %2240 = vmatprep.subr.mxu0 0.0
        %2241 = vmatpush2.xpose.msra.mxu0 0.0
        %2242 = vmatprep.subr.mxu0 0.0
        %2243 = vmatpush2.xpose.msra.mxu0 0.0
        %2244 = vmatprep.subr.mxu0 0.0
        %2245 = vmatpush2.xpose.msra.mxu0 0.0
        %2246 = vmatprep.subr.mxu0 0.0
        %2247 = vmatpush2.xpose.msra.mxu0 0.0
        %2248 = vmatprep.subr.mxu0 0.0
        %2249 = vmatpush2.xpose.msra.mxu0 0.0
        %2250 = vmatprep.subr.mxu0 0.0
        %2251 = vmatpush2.xpose.msra.mxu0 0.0
        %2252 = vmatprep.subr.mxu0 0.0
        %2253 = vmatpush2.xpose.msra.mxu0 0.0
        %2254 = vmatprep.subr.mxu0 0.0
        %2255 = vmatpush2.xpose.msra.mxu0 0.0
        %2256 = vmatprep.subr.mxu0 0.0
        %2257 = vmatpush2.xpose.msra.mxu0 0.0
        %2258 = vmatprep.subr.mxu0 0.0
        %2259 = vmatpush2.xpose.msra.mxu0 0.0
        %2260 = vmatprep.subr.mxu0 0.0
        %2261 = vmatpush2.xpose.msra.mxu0 0.0
        %2262 = vmatprep.subr.mxu0 0.0
        %2263 = vmatpush2.xpose.msra.mxu0 0.0
        %2264 = vmatprep.subr.mxu0 0.0
        %2265 = vmatpush2.xpose.msra.mxu0 0.0
        %2266 = vmatprep.mubr.f32.mxu0 0.0
        %2267 = vmatmul.mubr.f32.gmra.mxu0 %v2128
        %v2268 = vpop.f32.mrf.mxu0
        %v2269 = vadd.f32 0.0, %v2268
        %v2270 = vpop.f32.mrf.mxu0
        %2271 = vdwg.mxu0
        %v2272 = vmul.f32 %v2269, 0.088388346
        %v2273 = vsel %vm1477, %v2272, -inf
        %2274 = vmax.xlane.f32.xlu0 %v2273
        %v2275 = vpop.xlane.xlu0 %2274
        %v2276 = vsub.f32 %v2272, %v2275
        %v2277 = vmul.f32 %v2276, 1.442695
        %v2278 = vpow.pop %v2277
        %v2279 = vsel %vm1477, %v2278, 0.0
        %2280 = vadd.xlane.f32.xlu0 %v2279
        %v2281 = vpop.xlane.xlu0 %2280
        %v2282 = vrcp.pop %v2281
        %v2283 = vmul.f32 %v2278, %v2282
        %v2285 = vsel %vm1477, %v2283, 0
        %2287 = vmatprep.subr.mxu0 0.0
        %2288 = vmatpush1.msra.mxu0 0.0
        %2289 = vmatprep.subr.mxu0 0.0
        %2290 = vmatpush1.msra.mxu0 0.0
        %2291 = vmatprep.subr.mxu0 0.0
        %2292 = vmatpush1.msra.mxu0 0.0
        %2293 = vmatprep.subr.mxu0 0.0
        %2294 = vmatpush1.msra.mxu0 0.0
        %2295 = vmatprep.subr.mxu0 0.0
        %2296 = vmatpush1.msra.mxu0 0.0
        %2297 = vmatprep.subr.mxu0 0.0
        %2298 = vmatpush1.msra.mxu0 0.0
        %2299 = vmatprep.subr.mxu0 0.0
        %2300 = vmatpush1.msra.mxu0 0.0
        %2301 = vmatprep.subr.mxu0 0.0
        %2302 = vmatpush1.msra.mxu0 0.0
        %2303 = vmatprep.subr.mxu0 0.0
        %2304 = vmatpush1.msra.mxu0 0.0
        %2305 = vmatprep.subr.mxu0 0.0
        %2306 = vmatpush1.msra.mxu0 0.0
        %2307 = vmatprep.subr.mxu0 0.0
        %2308 = vmatpush1.msra.mxu0 0.0
        %2309 = vmatprep.subr.mxu0 0.0
        %2310 = vmatpush1.msra.mxu0 0.0
        %2311 = vmatprep.subr.mxu0 0.0
        %2312 = vmatpush1.msra.mxu0 0.0
        %2313 = vmatprep.subr.mxu0 0.0
        %2314 = vmatpush1.msra.mxu0 0.0
        %2315 = vmatprep.subr.mxu0 0.0
        %2316 = vmatpush1.msra.mxu0 0.0
        %2317 = vmatprep.subr.mxu0 0.0
        %2318 = vmatpush1.msra.mxu0 %v2199
        %2319 = vmatprep.subr.mxu0 0.0
        %2320 = vmatpush2.msra.mxu0 0.0
        %2321 = vmatprep.subr.mxu0 0.0
        %2322 = vmatpush2.msra.mxu0 0.0
        %2323 = vmatprep.subr.mxu0 0.0
        %2324 = vmatpush2.msra.mxu0 0.0
        %2325 = vmatprep.subr.mxu0 0.0
        %2326 = vmatpush2.msra.mxu0 0.0
        %2327 = vmatprep.subr.mxu0 0.0
        %2328 = vmatpush2.msra.mxu0 0.0
        %2329 = vmatprep.subr.mxu0 0.0
        %2330 = vmatpush2.msra.mxu0 0.0
        %2331 = vmatprep.subr.mxu0 0.0
        %2332 = vmatpush2.msra.mxu0 0.0
        %2333 = vmatprep.subr.mxu0 0.0
        %2334 = vmatpush2.msra.mxu0 0.0
        %2335 = vmatprep.subr.mxu0 0.0
        %2336 = vmatpush2.msra.mxu0 0.0
        %2337 = vmatprep.subr.mxu0 0.0
        %2338 = vmatpush2.msra.mxu0 0.0
        %2339 = vmatprep.subr.mxu0 0.0
        %2340 = vmatpush2.msra.mxu0 0.0
        %2341 = vmatprep.subr.mxu0 0.0
        %2342 = vmatpush2.msra.mxu0 0.0
        %2343 = vmatprep.subr.mxu0 0.0
        %2344 = vmatpush2.msra.mxu0 0.0
        %2345 = vmatprep.subr.mxu0 0.0
        %2346 = vmatpush2.msra.mxu0 0.0
        %2347 = vmatprep.subr.mxu0 0.0
        %2348 = vmatpush2.msra.mxu0 0.0
        %2349 = vmatprep.subr.mxu0 0.0
        %2350 = vmatpush2.msra.mxu0 0.0
        %2351 = vmatprep.mubr.f32.mxu0 0.0
        %2352 = vmatmul.mubr.f32.gmra.mxu0 %v2285
        %v2353 = vpop.f32.mrf.mxu0
        %v2354 = vadd.f32 0.0, %v2353
        %v2355 = vpop.f32.mrf.mxu0
        %2356 = vdwg.mxu0
        %v2357 = vld [vmem:[#allocation11] sm:$0xff]
        %v2358 = vld [vmem:[#allocation11 + $0x8] sm:$0xff]
        %v2359 = vld [vmem:[#allocation11 + $0x10] sm:$0xff]
        %v2360 = vld [vmem:[#allocation11 + $0x18] sm:$0xff]
        %v2361 = vld [vmem:[#allocation11 + $0x20] sm:$0xff]
        %v2362 = vld [vmem:[#allocation11 + $0x28] sm:$0xff]
        %v2363 = vld [vmem:[#allocation11 + $0x30] sm:$0xff]
        %v2364 = vld [vmem:[#allocation11 + $0x38] sm:$0xff]
        %v2365 = vld [vmem:[#allocation11 + $0x40] sm:$0xff]
        %v2366 = vld [vmem:[#allocation11 + $0x48] sm:$0xff]
        %v2367 = vld [vmem:[#allocation11 + $0x50] sm:$0xff]
        %v2368 = vld [vmem:[#allocation11 + $0x58] sm:$0xff]
        %v2369 = vld [vmem:[#allocation11 + $0x60] sm:$0xff]
        %v2370 = vld [vmem:[#allocation11 + $0x68] sm:$0xff]
        %v2371 = vld [vmem:[#allocation11 + $0x70] sm:$0xff]
        %v2372 = vld [vmem:[#allocation11 + $0x78] sm:$0xff]
        %v2373 = vld [vmem:[%s33] sm:$0x1]
        %v2375 = vlaneseq
        %v2376 = vshrl.u32 %v2375, 7
        %v2377 = vsub.s32 0, %v2376
        %v2378 = vrot.slane %v2373, %v2377
        %2380 = vmatprep.subr.mxu0 0.0
        %2381 = vmatpush1.msra.mxu0 %v2372
        %2382 = vmatprep.subr.mxu0 0.0
        %2383 = vmatpush1.msra.mxu0 %v2371
        %2384 = vmatprep.subr.mxu0 0.0
        %2385 = vmatpush1.msra.mxu0 %v2370
        %2386 = vmatprep.subr.mxu0 0.0
        %2387 = vmatpush1.msra.mxu0 %v2369
        %2388 = vmatprep.subr.mxu0 0.0
        %2389 = vmatpush1.msra.mxu0 %v2368
        %2390 = vmatprep.subr.mxu0 0.0
        %2391 = vmatpush1.msra.mxu0 %v2367
        %2392 = vmatprep.subr.mxu0 0.0
        %2393 = vmatpush1.msra.mxu0 %v2366
        %2394 = vmatprep.subr.mxu0 0.0
        %2395 = vmatpush1.msra.mxu0 %v2365
        %2396 = vmatprep.subr.mxu0 0.0
        %2397 = vmatpush1.msra.mxu0 %v2364
        %2398 = vmatprep.subr.mxu0 0.0
        %2399 = vmatpush1.msra.mxu0 %v2363
        %2400 = vmatprep.subr.mxu0 0.0
        %2401 = vmatpush1.msra.mxu0 %v2362
        %2402 = vmatprep.subr.mxu0 0.0
        %2403 = vmatpush1.msra.mxu0 %v2361
        %2404 = vmatprep.subr.mxu0 0.0
        %2405 = vmatpush1.msra.mxu0 %v2360
        %2406 = vmatprep.subr.mxu0 0.0
        %2407 = vmatpush1.msra.mxu0 %v2359
        %2408 = vmatprep.subr.mxu0 0.0
        %2409 = vmatpush1.msra.mxu0 %v2358
        %2410 = vmatprep.subr.mxu0 0.0
        %2411 = vmatpush1.msra.mxu0 %v2357
        %2412 = vmatprep.subr.mxu0 0.0
        %2413 = vmatpush2.msra.mxu0 0.0
        %2414 = vmatprep.subr.mxu0 0.0
        %2415 = vmatpush2.msra.mxu0 0.0
        %2416 = vmatprep.subr.mxu0 0.0
        %2417 = vmatpush2.msra.mxu0 0.0
        %2418 = vmatprep.subr.mxu0 0.0
        %2419 = vmatpush2.msra.mxu0 0.0
        %2420 = vmatprep.subr.mxu0 0.0
        %2421 = vmatpush2.msra.mxu0 0.0
        %2422 = vmatprep.subr.mxu0 0.0
        %2423 = vmatpush2.msra.mxu0 0.0
        %2424 = vmatprep.subr.mxu0 0.0
        %2425 = vmatpush2.msra.mxu0 0.0
        %2426 = vmatprep.subr.mxu0 0.0
        %2427 = vmatpush2.msra.mxu0 0.0
        %2428 = vmatprep.subr.mxu0 0.0
        %2429 = vmatpush2.msra.mxu0 0.0
        %2430 = vmatprep.subr.mxu0 0.0
        %2431 = vmatpush2.msra.mxu0 0.0
        %2432 = vmatprep.subr.mxu0 0.0
        %2433 = vmatpush2.msra.mxu0 0.0
        %2434 = vmatprep.subr.mxu0 0.0
        %2435 = vmatpush2.msra.mxu0 0.0
        %2436 = vmatprep.subr.mxu0 0.0
        %2437 = vmatpush2.msra.mxu0 0.0
        %2438 = vmatprep.subr.mxu0 0.0
        %2439 = vmatpush2.msra.mxu0 0.0
        %2440 = vmatprep.subr.mxu0 0.0
        %2441 = vmatpush2.msra.mxu0 0.0
        %2442 = vmatprep.subr.mxu0 0.0
        %2443 = vmatpush2.msra.mxu0 0.0
        %2444 = vmatprep.mubr.f32.mxu0 0.0
        %2445 = vmatmul.mubr.f32.gmra.mxu0 %v2354
        %v2446 = vpop.f32.mrf.mxu0
        %v2447 = vadd.f32 %v2378, %v2446
        %v2448 = vpop.f32.mrf.mxu0
        %2449 = vdwg.mxu0
        %v2450 = vadd.f32 %v1993, %v2447
        %v2451 = vlaneseq
        %v2452 = vshrl.u32 %v2451, 7
        %v2453 = vsub.s32 0, %v2452
        %v2454 = vrot.slane %v2450, %v2453
        %v2455 = vlaneseq
        %v2456 = vshrl.u32 %v2455, 7
        %v2457 = vsub.s32 7, %v2456
        %v2458 = vrot.slane %v2450, %v2457
        %v2459 = vrot.slane %v2450, 7
        %v2460 = vrot.slane %v2450, 1
        %v2461 = vsel %vm1668, %v2454, %v2459
        %v2462 = vadd.f32 %v2450, %v2461
        %v2463 = vsel %vm1671, %v2458, %v2460
        %v2464 = vadd.f32 %v2462, %v2463
        %v2465 = vmul.f32 %v2464, 0.33333334
        %v2466 = vsub.f32 %v2450, %v2465
        %v2467 = vld [vmem:[#allocation13] sm:$0xff]
        %v2468 = vld [vmem:[#allocation13 + $0x8] sm:$0xff]
        %v2469 = vld [vmem:[#allocation13 + $0x10] sm:$0xff]
        %v2470 = vld [vmem:[#allocation13 + $0x18] sm:$0xff]
        %v2471 = vld [vmem:[#allocation13 + $0x20] sm:$0xff]
        %v2472 = vld [vmem:[#allocation13 + $0x28] sm:$0xff]
        %v2473 = vld [vmem:[#allocation13 + $0x30] sm:$0xff]
        %v2474 = vld [vmem:[#allocation13 + $0x38] sm:$0xff]
        %v2475 = vld [vmem:[#allocation13 + $0x40] sm:$0xff]
        %v2476 = vld [vmem:[#allocation13 + $0x48] sm:$0xff]
        %v2477 = vld [vmem:[#allocation13 + $0x50] sm:$0xff]
        %v2478 = vld [vmem:[#allocation13 + $0x58] sm:$0xff]
        %v2479 = vld [vmem:[#allocation13 + $0x60] sm:$0xff]
        %v2480 = vld [vmem:[#allocation13 + $0x68] sm:$0xff]
        %v2481 = vld [vmem:[#allocation13 + $0x70] sm:$0xff]
        %v2482 = vld [vmem:[#allocation13 + $0x78] sm:$0xff]
        %v2483 = vld [vmem:[%s37] sm:$0x1]
        %v2485 = vlaneseq
        %v2486 = vshrl.u32 %v2485, 7
        %v2487 = vsub.s32 0, %v2486
        %v2488 = vrot.slane %v2483, %v2487
        %2490 = vmatprep.subr.mxu0 0.0
        %2491 = vmatpush1.msra.mxu0 %v2482
        %2492 = vmatprep.subr.mxu0 0.0
        %2493 = vmatpush1.msra.mxu0 %v2481
        %2494 = vmatprep.subr.mxu0 0.0
        %2495 = vmatpush1.msra.mxu0 %v2480
        %2496 = vmatprep.subr.mxu0 0.0
        %2497 = vmatpush1.msra.mxu0 %v2479
        %2498 = vmatprep.subr.mxu0 0.0
        %2499 = vmatpush1.msra.mxu0 %v2478
        %2500 = vmatprep.subr.mxu0 0.0
        %2501 = vmatpush1.msra.mxu0 %v2477
        %2502 = vmatprep.subr.mxu0 0.0
        %2503 = vmatpush1.msra.mxu0 %v2476
        %2504 = vmatprep.subr.mxu0 0.0
        %2505 = vmatpush1.msra.mxu0 %v2475
        %2506 = vmatprep.subr.mxu0 0.0
        %2507 = vmatpush1.msra.mxu0 %v2474
        %2508 = vmatprep.subr.mxu0 0.0
        %2509 = vmatpush1.msra.mxu0 %v2473
        %2510 = vmatprep.subr.mxu0 0.0
        %2511 = vmatpush1.msra.mxu0 %v2472
        %2512 = vmatprep.subr.mxu0 0.0
        %2513 = vmatpush1.msra.mxu0 %v2471
        %2514 = vmatprep.subr.mxu0 0.0
        %2515 = vmatpush1.msra.mxu0 %v2470
        %2516 = vmatprep.subr.mxu0 0.0
        %2517 = vmatpush1.msra.mxu0 %v2469
        %2518 = vmatprep.subr.mxu0 0.0
        %2519 = vmatpush1.msra.mxu0 %v2468
        %2520 = vmatprep.subr.mxu0 0.0
        %2521 = vmatpush1.msra.mxu0 %v2467
        %2522 = vmatprep.subr.mxu0 0.0
        %2523 = vmatpush2.msra.mxu0 0.0
        %2524 = vmatprep.subr.mxu0 0.0
        %2525 = vmatpush2.msra.mxu0 0.0
        %2526 = vmatprep.subr.mxu0 0.0
        %2527 = vmatpush2.msra.mxu0 0.0
        %2528 = vmatprep.subr.mxu0 0.0
        %2529 = vmatpush2.msra.mxu0 0.0
        %2530 = vmatprep.subr.mxu0 0.0
        %2531 = vmatpush2.msra.mxu0 0.0
        %2532 = vmatprep.subr.mxu0 0.0
        %2533 = vmatpush2.msra.mxu0 0.0
        %2534 = vmatprep.subr.mxu0 0.0
        %2535 = vmatpush2.msra.mxu0 0.0
        %2536 = vmatprep.subr.mxu0 0.0
        %2537 = vmatpush2.msra.mxu0 0.0
        %2538 = vmatprep.subr.mxu0 0.0
        %2539 = vmatpush2.msra.mxu0 0.0
        %2540 = vmatprep.subr.mxu0 0.0
        %2541 = vmatpush2.msra.mxu0 0.0
        %2542 = vmatprep.subr.mxu0 0.0
        %2543 = vmatpush2.msra.mxu0 0.0
        %2544 = vmatprep.subr.mxu0 0.0
        %2545 = vmatpush2.msra.mxu0 0.0
        %2546 = vmatprep.subr.mxu0 0.0
        %2547 = vmatpush2.msra.mxu0 0.0
        %2548 = vmatprep.subr.mxu0 0.0
        %2549 = vmatpush2.msra.mxu0 0.0
        %2550 = vmatprep.subr.mxu0 0.0
        %2551 = vmatpush2.msra.mxu0 0.0
        %2552 = vmatprep.subr.mxu0 0.0
        %2553 = vmatpush2.msra.mxu0 0.0
        %2554 = vmatprep.mubr.f32.mxu0 0.0
        %2555 = vmatmul.mubr.f32.gmra.mxu0 %v2466
        %v2556 = vpop.f32.mrf.mxu0
        %v2557 = vadd.f32 %v2488, %v2556
        %v2558 = vpop.f32.mrf.mxu0
        %2559 = vdwg.mxu0
        %v2560 = vld [vmem:[%s39] sm:$0xff]
        %v2561 = vld [vmem:[%s39 + $0x8] sm:$0xff]
        %v2562 = vld [vmem:[%s39 + $0x10] sm:$0xff]
        %v2563 = vld [vmem:[%s39 + $0x18] sm:$0xff]
        %v2564 = vld [vmem:[%s39 + $0x20] sm:$0xff]
        %v2565 = vld [vmem:[%s39 + $0x28] sm:$0xff]
        %v2566 = vld [vmem:[%s39 + $0x30] sm:$0xff]
        %v2567 = vld [vmem:[%s39 + $0x38] sm:$0xff]
        %v2568 = vld [vmem:[%s39 + $0x40] sm:$0xff]
        %v2569 = vld [vmem:[%s39 + $0x48] sm:$0xff]
        %v2570 = vld [vmem:[%s39 + $0x50] sm:$0xff]
        %v2571 = vld [vmem:[%s39 + $0x58] sm:$0xff]
        %v2572 = vld [vmem:[%s39 + $0x60] sm:$0xff]
        %v2573 = vld [vmem:[%s39 + $0x68] sm:$0xff]
        %v2574 = vld [vmem:[%s39 + $0x70] sm:$0xff]
        %v2575 = vld [vmem:[%s39 + $0x78] sm:$0xff]
        %v2576 = vld [vmem:[%s39 + $0x80] sm:$0xff]
        %v2577 = vld [vmem:[%s39 + $0x88] sm:$0xff]
        %v2578 = vld [vmem:[%s39 + $0x90] sm:$0xff]
        %v2579 = vld [vmem:[%s39 + $0x98] sm:$0xff]
        %v2580 = vld [vmem:[%s39 + $0xa0] sm:$0xff]
        %v2581 = vld [vmem:[%s39 + $0xa8] sm:$0xff]
        %v2582 = vld [vmem:[%s39 + $0xb0] sm:$0xff]
        %v2583 = vld [vmem:[%s39 + $0xb8] sm:$0xff]
        %v2584 = vld [vmem:[%s39 + $0xc0] sm:$0xff]
        %v2585 = vld [vmem:[%s39 + $0xc8] sm:$0xff]
        %v2586 = vld [vmem:[%s39 + $0xd0] sm:$0xff]
        %v2587 = vld [vmem:[%s39 + $0xd8] sm:$0xff]
        %v2588 = vld [vmem:[%s39 + $0xe0] sm:$0xff]
        %v2589 = vld [vmem:[%s39 + $0xe8] sm:$0xff]
        %v2590 = vld [vmem:[%s39 + $0xf0] sm:$0xff]
        %v2591 = vld [vmem:[%s39 + $0xf8] sm:$0xff]
        %v2592 = vld [vmem:[%s41] sm:$0x3]
        %v2594 = vlaneseq
        %v2595 = vshrl.u32 %v2594, 7
        %v2596 = vsub.s32 0, %v2595
        %v2597 = vrot.slane %v2592, %v2596
        %v2598 = vlaneseq
        %v2599 = vshrl.u32 %v2598, 7
        %v2600 = vsub.s32 1, %v2599
        %v2601 = vrot.slane %v2592, %v2600
        %2604 = vmatprep.subr.mxu0 %v2591
        %2605 = vmatpush1.msra.mxu0 %v2590
        %2606 = vmatprep.subr.mxu0 %v2589
        %2607 = vmatpush1.msra.mxu0 %v2588
        %2608 = vmatprep.subr.mxu0 %v2587
        %2609 = vmatpush1.msra.mxu0 %v2586
        %2610 = vmatprep.subr.mxu0 %v2585
        %2611 = vmatpush1.msra.mxu0 %v2584
        %2612 = vmatprep.subr.mxu0 %v2583
        %2613 = vmatpush1.msra.mxu0 %v2582
        %2614 = vmatprep.subr.mxu0 %v2581
        %2615 = vmatpush1.msra.mxu0 %v2580
        %2616 = vmatprep.subr.mxu0 %v2579
        %2617 = vmatpush1.msra.mxu0 %v2578
        %2618 = vmatprep.subr.mxu0 %v2577
        %2619 = vmatpush1.msra.mxu0 %v2576
        %2620 = vmatprep.subr.mxu0 %v2575
        %2621 = vmatpush1.msra.mxu0 %v2574
        %2622 = vmatprep.subr.mxu0 %v2573
        %2623 = vmatpush1.msra.mxu0 %v2572
        %2624 = vmatprep.subr.mxu0 %v2571
        %2625 = vmatpush1.msra.mxu0 %v2570
        %2626 = vmatprep.subr.mxu0 %v2569
        %2627 = vmatpush1.msra.mxu0 %v2568
        %2628 = vmatprep.subr.mxu0 %v2567
        %2629 = vmatpush1.msra.mxu0 %v2566
        %2630 = vmatprep.subr.mxu0 %v2565
        %2631 = vmatpush1.msra.mxu0 %v2564
        %2632 = vmatprep.subr.mxu0 %v2563
        %2633 = vmatpush1.msra.mxu0 %v2562
        %2634 = vmatprep.subr.mxu0 %v2561
        %2635 = vmatpush1.msra.mxu0 %v2560
        %2636 = vmatprep.subr.mxu0 0.0
        %2637 = vmatpush2.msra.mxu0 0.0
        %2638 = vmatprep.subr.mxu0 0.0
        %2639 = vmatpush2.msra.mxu0 0.0
        %2640 = vmatprep.subr.mxu0 0.0
        %2641 = vmatpush2.msra.mxu0 0.0
        %2642 = vmatprep.subr.mxu0 0.0
        %2643 = vmatpush2.msra.mxu0 0.0
        %2644 = vmatprep.subr.mxu0 0.0
        %2645 = vmatpush2.msra.mxu0 0.0
        %2646 = vmatprep.subr.mxu0 0.0
        %2647 = vmatpush2.msra.mxu0 0.0
        %2648 = vmatprep.subr.mxu0 0.0
        %2649 = vmatpush2.msra.mxu0 0.0
        %2650 = vmatprep.subr.mxu0 0.0
        %2651 = vmatpush2.msra.mxu0 0.0
        %2652 = vmatprep.subr.mxu0 0.0
        %2653 = vmatpush2.msra.mxu0 0.0
        %2654 = vmatprep.subr.mxu0 0.0
        %2655 = vmatpush2.msra.mxu0 0.0
        %2656 = vmatprep.subr.mxu0 0.0
        %2657 = vmatpush2.msra.mxu0 0.0
        %2658 = vmatprep.subr.mxu0 0.0
        %2659 = vmatpush2.msra.mxu0 0.0
        %2660 = vmatprep.subr.mxu0 0.0
        %2661 = vmatpush2.msra.mxu0 0.0
        %2662 = vmatprep.subr.mxu0 0.0
        %2663 = vmatpush2.msra.mxu0 0.0
        %2664 = vmatprep.subr.mxu0 0.0
        %2665 = vmatpush2.msra.mxu0 0.0
        %2666 = vmatprep.subr.mxu0 0.0
        %2667 = vmatpush2.msra.mxu0 0.0
        %2668 = vmatprep.mubr.f32.mxu0 0.0
        %2669 = vmatmul.mubr.f32.gmra.mxu0 %v1879
        %v2670 = vpop.f32.mrf.mxu0
        %v2671 = vadd.f32 %v2597, %v2670
        %v2672 = vpop.f32.mrf.mxu0
        %v2673 = vadd.f32 %v2601, %v2672
        %2674 = vdwg.mxu0
        %2675 = vmatprep.subr.mxu0 0.0
        %2676 = vmatpush1.xpose.msra.mxu0 0.0
        %2677 = vmatprep.subr.mxu0 0.0
        %2678 = vmatpush1.xpose.msra.mxu0 0.0
        %2679 = vmatprep.subr.mxu0 0.0
        %2680 = vmatpush1.xpose.msra.mxu0 0.0
        %2681 = vmatprep.subr.mxu0 0.0
        %2682 = vmatpush1.xpose.msra.mxu0 0.0
        %2683 = vmatprep.subr.mxu0 0.0
        %2684 = vmatpush1.xpose.msra.mxu0 0.0
        %2685 = vmatprep.subr.mxu0 0.0
        %2686 = vmatpush1.xpose.msra.mxu0 0.0
        %2687 = vmatprep.subr.mxu0 0.0
        %2688 = vmatpush1.xpose.msra.mxu0 0.0
        %2689 = vmatprep.subr.mxu0 0.0
        %2690 = vmatpush1.xpose.msra.mxu0 0.0
        %2691 = vmatprep.subr.mxu0 0.0
        %2692 = vmatpush1.xpose.msra.mxu0 0.0
        %2693 = vmatprep.subr.mxu0 0.0
        %2694 = vmatpush1.xpose.msra.mxu0 0.0
        %2695 = vmatprep.subr.mxu0 0.0
        %2696 = vmatpush1.xpose.msra.mxu0 0.0
        %2697 = vmatprep.subr.mxu0 0.0
        %2698 = vmatpush1.xpose.msra.mxu0 0.0
        %2699 = vmatprep.subr.mxu0 0.0
        %2700 = vmatpush1.xpose.msra.mxu0 0.0
        %2701 = vmatprep.subr.mxu0 0.0
        %2702 = vmatpush1.xpose.msra.mxu0 0.0
        %2703 = vmatprep.subr.mxu0 0.0
        %2704 = vmatpush1.xpose.msra.mxu0 0.0
        %2705 = vmatprep.subr.mxu0 0.0
        %2706 = vmatpush1.xpose.msra.mxu0 %v2671
        %2707 = vmatprep.subr.mxu0 0.0
        %2708 = vmatpush2.xpose.msra.mxu0 0.0
        %2709 = vmatprep.subr.mxu0 0.0
        %2710 = vmatpush2.xpose.msra.mxu0 0.0
        %2711 = vmatprep.subr.mxu0 0.0
        %2712 = vmatpush2.xpose.msra.mxu0 0.0
        %2713 = vmatprep.subr.mxu0 0.0
        %2714 = vmatpush2.xpose.msra.mxu0 0.0
        %2715 = vmatprep.subr.mxu0 0.0
        %2716 = vmatpush2.xpose.msra.mxu0 0.0
        %2717 = vmatprep.subr.mxu0 0.0
        %2718 = vmatpush2.xpose.msra.mxu0 0.0
        %2719 = vmatprep.subr.mxu0 0.0
        %2720 = vmatpush2.xpose.msra.mxu0 0.0
        %2721 = vmatprep.subr.mxu0 0.0
        %2722 = vmatpush2.xpose.msra.mxu0 0.0
        %2723 = vmatprep.subr.mxu0 0.0
        %2724 = vmatpush2.xpose.msra.mxu0 0.0
        %2725 = vmatprep.subr.mxu0 0.0
        %2726 = vmatpush2.xpose.msra.mxu0 0.0
        %2727 = vmatprep.subr.mxu0 0.0
        %2728 = vmatpush2.xpose.msra.mxu0 0.0
        %2729 = vmatprep.subr.mxu0 0.0
        %2730 = vmatpush2.xpose.msra.mxu0 0.0
        %2731 = vmatprep.subr.mxu0 0.0
        %2732 = vmatpush2.xpose.msra.mxu0 0.0
        %2733 = vmatprep.subr.mxu0 0.0
        %2734 = vmatpush2.xpose.msra.mxu0 0.0
        %2735 = vmatprep.subr.mxu0 0.0
        %2736 = vmatpush2.xpose.msra.mxu0 0.0
        %2737 = vmatprep.subr.mxu0 0.0
        %2738 = vmatpush2.xpose.msra.mxu0 0.0
        %2739 = vmatprep.mubr.f32.mxu0 0.0
        %2740 = vmatmul.mubr.f32.gmra.mxu0 %v2557
        %v2741 = vpop.f32.mrf.mxu0
        %v2742 = vadd.f32 0.0, %v2741
        %v2743 = vpop.f32.mrf.mxu0
        %2744 = vdwg.mxu0
        %v2745 = vmul.f32 %v2742, 0.088388346
        %v2746 = vsel %vm1477, %v2745, -inf
        %2747 = vmax.xlane.f32.xlu0 %v2746
        %v2748 = vpop.xlane.xlu0 %2747
        %v2749 = vsub.f32 %v2745, %v2748
        %v2750 = vmul.f32 %v2749, 1.442695
        %v2751 = vpow.pop %v2750
        %v2752 = vsel %vm1477, %v2751, 0.0
        %2753 = vadd.xlane.f32.xlu0 %v2752
        %v2754 = vpop.xlane.xlu0 %2753
        %v2755 = vrcp.pop %v2754
        %v2756 = vmul.f32 %v2751, %v2755
        %v2758 = vsel %vm1477, %v2756, 0
        %2760 = vmatprep.subr.mxu0 0.0
        %2761 = vmatpush1.msra.mxu0 0.0
        %2762 = vmatprep.subr.mxu0 0.0
        %2763 = vmatpush1.msra.mxu0 0.0
        %2764 = vmatprep.subr.mxu0 0.0
        %2765 = vmatpush1.msra.mxu0 0.0
        %2766 = vmatprep.subr.mxu0 0.0
        %2767 = vmatpush1.msra.mxu0 0.0
        %2768 = vmatprep.subr.mxu0 0.0
        %2769 = vmatpush1.msra.mxu0 0.0
        %2770 = vmatprep.subr.mxu0 0.0
        %2771 = vmatpush1.msra.mxu0 0.0
        %2772 = vmatprep.subr.mxu0 0.0
        %2773 = vmatpush1.msra.mxu0 0.0
        %2774 = vmatprep.subr.mxu0 0.0
        %2775 = vmatpush1.msra.mxu0 0.0
        %2776 = vmatprep.subr.mxu0 0.0
        %2777 = vmatpush1.msra.mxu0 0.0
        %2778 = vmatprep.subr.mxu0 0.0
        %2779 = vmatpush1.msra.mxu0 0.0
        %2780 = vmatprep.subr.mxu0 0.0
        %2781 = vmatpush1.msra.mxu0 0.0
        %2782 = vmatprep.subr.mxu0 0.0
        %2783 = vmatpush1.msra.mxu0 0.0
        %2784 = vmatprep.subr.mxu0 0.0
        %2785 = vmatpush1.msra.mxu0 0.0
        %2786 = vmatprep.subr.mxu0 0.0
        %2787 = vmatpush1.msra.mxu0 0.0
        %2788 = vmatprep.subr.mxu0 0.0
        %2789 = vmatpush1.msra.mxu0 0.0
        %2790 = vmatprep.subr.mxu0 0.0
        %2791 = vmatpush1.msra.mxu0 %v2673
        %2792 = vmatprep.subr.mxu0 0.0
        %2793 = vmatpush2.msra.mxu0 0.0
        %2794 = vmatprep.subr.mxu0 0.0
        %2795 = vmatpush2.msra.mxu0 0.0
        %2796 = vmatprep.subr.mxu0 0.0
        %2797 = vmatpush2.msra.mxu0 0.0
        %2798 = vmatprep.subr.mxu0 0.0
        %2799 = vmatpush2.msra.mxu0 0.0
        %2800 = vmatprep.subr.mxu0 0.0
        %2801 = vmatpush2.msra.mxu0 0.0
        %2802 = vmatprep.subr.mxu0 0.0
        %2803 = vmatpush2.msra.mxu0 0.0
        %2804 = vmatprep.subr.mxu0 0.0
        %2805 = vmatpush2.msra.mxu0 0.0
        %2806 = vmatprep.subr.mxu0 0.0
        %2807 = vmatpush2.msra.mxu0 0.0
        %2808 = vmatprep.subr.mxu0 0.0
        %2809 = vmatpush2.msra.mxu0 0.0
        %2810 = vmatprep.subr.mxu0 0.0
        %2811 = vmatpush2.msra.mxu0 0.0
        %2812 = vmatprep.subr.mxu0 0.0
        %2813 = vmatpush2.msra.mxu0 0.0
        %2814 = vmatprep.subr.mxu0 0.0
        %2815 = vmatpush2.msra.mxu0 0.0
        %2816 = vmatprep.subr.mxu0 0.0
        %2817 = vmatpush2.msra.mxu0 0.0
        %2818 = vmatprep.subr.mxu0 0.0
        %2819 = vmatpush2.msra.mxu0 0.0
        %2820 = vmatprep.subr.mxu0 0.0
        %2821 = vmatpush2.msra.mxu0 0.0
        %2822 = vmatprep.subr.mxu0 0.0
        %2823 = vmatpush2.msra.mxu0 0.0
        %2824 = vmatprep.mubr.f32.mxu0 0.0
        %2825 = vmatmul.mubr.f32.gmra.mxu0 %v2758
        %v2826 = vpop.f32.mrf.mxu0
        %v2827 = vadd.f32 0.0, %v2826
        %v2828 = vpop.f32.mrf.mxu0
        %2829 = vdwg.mxu0
        %v2830 = vld [vmem:[#allocation14] sm:$0xff]
        %v2831 = vld [vmem:[#allocation14 + $0x8] sm:$0xff]
        %v2832 = vld [vmem:[#allocation14 + $0x10] sm:$0xff]
        %v2833 = vld [vmem:[#allocation14 + $0x18] sm:$0xff]
        %v2834 = vld [vmem:[#allocation14 + $0x20] sm:$0xff]
        %v2835 = vld [vmem:[#allocation14 + $0x28] sm:$0xff]
        %v2836 = vld [vmem:[#allocation14 + $0x30] sm:$0xff]
        %v2837 = vld [vmem:[#allocation14 + $0x38] sm:$0xff]
        %v2838 = vld [vmem:[#allocation14 + $0x40] sm:$0xff]
        %v2839 = vld [vmem:[#allocation14 + $0x48] sm:$0xff]
        %v2840 = vld [vmem:[#allocation14 + $0x50] sm:$0xff]
        %v2841 = vld [vmem:[#allocation14 + $0x58] sm:$0xff]
        %v2842 = vld [vmem:[#allocation14 + $0x60] sm:$0xff]
        %v2843 = vld [vmem:[#allocation14 + $0x68] sm:$0xff]
        %v2844 = vld [vmem:[#allocation14 + $0x70] sm:$0xff]
        %v2845 = vld [vmem:[#allocation14 + $0x78] sm:$0xff]
        %v2846 = vld [vmem:[%s45] sm:$0x1]
        %v2848 = vlaneseq
        %v2849 = vshrl.u32 %v2848, 7
        %v2850 = vsub.s32 0, %v2849
        %v2851 = vrot.slane %v2846, %v2850
        %2853 = vmatprep.subr.mxu0 0.0
        %2854 = vmatpush1.msra.mxu0 %v2845
        %2855 = vmatprep.subr.mxu0 0.0
        %2856 = vmatpush1.msra.mxu0 %v2844
        %2857 = vmatprep.subr.mxu0 0.0
        %2858 = vmatpush1.msra.mxu0 %v2843
        %2859 = vmatprep.subr.mxu0 0.0
        %2860 = vmatpush1.msra.mxu0 %v2842
        %2861 = vmatprep.subr.mxu0 0.0
        %2862 = vmatpush1.msra.mxu0 %v2841
        %2863 = vmatprep.subr.mxu0 0.0
        %2864 = vmatpush1.msra.mxu0 %v2840
        %2865 = vmatprep.subr.mxu0 0.0
        %2866 = vmatpush1.msra.mxu0 %v2839
        %2867 = vmatprep.subr.mxu0 0.0
        %2868 = vmatpush1.msra.mxu0 %v2838
        %2869 = vmatprep.subr.mxu0 0.0
        %2870 = vmatpush1.msra.mxu0 %v2837
        %2871 = vmatprep.subr.mxu0 0.0
        %2872 = vmatpush1.msra.mxu0 %v2836
        %2873 = vmatprep.subr.mxu0 0.0
        %2874 = vmatpush1.msra.mxu0 %v2835
        %2875 = vmatprep.subr.mxu0 0.0
        %2876 = vmatpush1.msra.mxu0 %v2834
        %2877 = vmatprep.subr.mxu0 0.0
        %2878 = vmatpush1.msra.mxu0 %v2833
        %2879 = vmatprep.subr.mxu0 0.0
        %2880 = vmatpush1.msra.mxu0 %v2832
        %2881 = vmatprep.subr.mxu0 0.0
        %2882 = vmatpush1.msra.mxu0 %v2831
        %2883 = vmatprep.subr.mxu0 0.0
        %2884 = vmatpush1.msra.mxu0 %v2830
        %2885 = vmatprep.subr.mxu0 0.0
        %2886 = vmatpush2.msra.mxu0 0.0
        %2887 = vmatprep.subr.mxu0 0.0
        %2888 = vmatpush2.msra.mxu0 0.0
        %2889 = vmatprep.subr.mxu0 0.0
        %2890 = vmatpush2.msra.mxu0 0.0
        %2891 = vmatprep.subr.mxu0 0.0
        %2892 = vmatpush2.msra.mxu0 0.0
        %2893 = vmatprep.subr.mxu0 0.0
        %2894 = vmatpush2.msra.mxu0 0.0
        %2895 = vmatprep.subr.mxu0 0.0
        %2896 = vmatpush2.msra.mxu0 0.0
        %2897 = vmatprep.subr.mxu0 0.0
        %2898 = vmatpush2.msra.mxu0 0.0
        %2899 = vmatprep.subr.mxu0 0.0
        %2900 = vmatpush2.msra.mxu0 0.0
        %2901 = vmatprep.subr.mxu0 0.0
        %2902 = vmatpush2.msra.mxu0 0.0
        %2903 = vmatprep.subr.mxu0 0.0
        %2904 = vmatpush2.msra.mxu0 0.0
        %2905 = vmatprep.subr.mxu0 0.0
        %2906 = vmatpush2.msra.mxu0 0.0
        %2907 = vmatprep.subr.mxu0 0.0
        %2908 = vmatpush2.msra.mxu0 0.0
        %2909 = vmatprep.subr.mxu0 0.0
        %2910 = vmatpush2.msra.mxu0 0.0
        %2911 = vmatprep.subr.mxu0 0.0
        %2912 = vmatpush2.msra.mxu0 0.0
        %2913 = vmatprep.subr.mxu0 0.0
        %2914 = vmatpush2.msra.mxu0 0.0
        %2915 = vmatprep.subr.mxu0 0.0
        %2916 = vmatpush2.msra.mxu0 0.0
        %2917 = vmatprep.mubr.f32.mxu0 0.0
        %2918 = vmatmul.mubr.f32.gmra.mxu0 %v2827
        %v2919 = vpop.f32.mrf.mxu0
        %v2920 = vadd.f32 %v2851, %v2919
        %v2921 = vpop.f32.mrf.mxu0
        %2922 = vdwg.mxu0
        %v2923 = vadd.f32 %v2466, %v2920
        %v2924 = vlaneseq
        %v2925 = vshrl.u32 %v2924, 7
        %v2926 = vsub.s32 0, %v2925
        %v2927 = vrot.slane %v2923, %v2926
        %v2928 = vlaneseq
        %v2929 = vshrl.u32 %v2928, 7
        %v2930 = vsub.s32 7, %v2929
        %v2931 = vrot.slane %v2923, %v2930
        %v2932 = vrot.slane %v2923, 7
        %v2933 = vrot.slane %v2923, 1
        %v2934 = vsel %vm1668, %v2927, %v2932
        %v2935 = vadd.f32 %v2923, %v2934
        %v2936 = vsel %vm1671, %v2931, %v2933
        %v2937 = vadd.f32 %v2935, %v2936
        %v2938 = vmul.f32 %v2937, 0.33333334
        %v2939 = vsub.f32 %v2923, %v2938
        %v2940 = vld [vmem:[#allocation16] sm:$0xff]
        %v2941 = vld [vmem:[#allocation16 + $0x8] sm:$0xff]
        %v2942 = vld [vmem:[#allocation16 + $0x10] sm:$0xff]
        %v2943 = vld [vmem:[#allocation16 + $0x18] sm:$0xff]
        %v2944 = vld [vmem:[#allocation16 + $0x20] sm:$0xff]
        %v2945 = vld [vmem:[#allocation16 + $0x28] sm:$0xff]
        %v2946 = vld [vmem:[#allocation16 + $0x30] sm:$0xff]
        %v2947 = vld [vmem:[#allocation16 + $0x38] sm:$0xff]
        %v2948 = vld [vmem:[#allocation16 + $0x40] sm:$0xff]
        %v2949 = vld [vmem:[#allocation16 + $0x48] sm:$0xff]
        %v2950 = vld [vmem:[#allocation16 + $0x50] sm:$0xff]
        %v2951 = vld [vmem:[#allocation16 + $0x58] sm:$0xff]
        %v2952 = vld [vmem:[#allocation16 + $0x60] sm:$0xff]
        %v2953 = vld [vmem:[#allocation16 + $0x68] sm:$0xff]
        %v2954 = vld [vmem:[#allocation16 + $0x70] sm:$0xff]
        %v2955 = vld [vmem:[#allocation16 + $0x78] sm:$0xff]
        %v2956 = vld [vmem:[%s49] sm:$0x1]
        %v2958 = vlaneseq
        %v2959 = vshrl.u32 %v2958, 7
        %v2960 = vsub.s32 0, %v2959
        %v2961 = vrot.slane %v2956, %v2960
        %2963 = vmatprep.subr.mxu0 0.0
        %2964 = vmatpush1.msra.mxu0 %v2955
        %2965 = vmatprep.subr.mxu0 0.0
        %2966 = vmatpush1.msra.mxu0 %v2954
        %2967 = vmatprep.subr.mxu0 0.0
        %2968 = vmatpush1.msra.mxu0 %v2953
        %2969 = vmatprep.subr.mxu0 0.0
        %2970 = vmatpush1.msra.mxu0 %v2952
        %2971 = vmatprep.subr.mxu0 0.0
        %2972 = vmatpush1.msra.mxu0 %v2951
        %2973 = vmatprep.subr.mxu0 0.0
        %2974 = vmatpush1.msra.mxu0 %v2950
        %2975 = vmatprep.subr.mxu0 0.0
        %2976 = vmatpush1.msra.mxu0 %v2949
        %2977 = vmatprep.subr.mxu0 0.0
        %2978 = vmatpush1.msra.mxu0 %v2948
        %2979 = vmatprep.subr.mxu0 0.0
        %2980 = vmatpush1.msra.mxu0 %v2947
        %2981 = vmatprep.subr.mxu0 0.0
        %2982 = vmatpush1.msra.mxu0 %v2946
        %2983 = vmatprep.subr.mxu0 0.0
        %2984 = vmatpush1.msra.mxu0 %v2945
        %2985 = vmatprep.subr.mxu0 0.0
        %2986 = vmatpush1.msra.mxu0 %v2944
        %2987 = vmatprep.subr.mxu0 0.0
        %2988 = vmatpush1.msra.mxu0 %v2943
        %2989 = vmatprep.subr.mxu0 0.0
        %2990 = vmatpush1.msra.mxu0 %v2942
        %2991 = vmatprep.subr.mxu0 0.0
        %2992 = vmatpush1.msra.mxu0 %v2941
        %2993 = vmatprep.subr.mxu0 0.0
        %2994 = vmatpush1.msra.mxu0 %v2940
        %2995 = vmatprep.subr.mxu0 0.0
        %2996 = vmatpush2.msra.mxu0 0.0
        %2997 = vmatprep.subr.mxu0 0.0
        %2998 = vmatpush2.msra.mxu0 0.0
        %2999 = vmatprep.subr.mxu0 0.0
        %3000 = vmatpush2.msra.mxu0 0.0
        %3001 = vmatprep.subr.mxu0 0.0
        %3002 = vmatpush2.msra.mxu0 0.0
        %3003 = vmatprep.subr.mxu0 0.0
        %3004 = vmatpush2.msra.mxu0 0.0
        %3005 = vmatprep.subr.mxu0 0.0
        %3006 = vmatpush2.msra.mxu0 0.0
        %3007 = vmatprep.subr.mxu0 0.0
        %3008 = vmatpush2.msra.mxu0 0.0
        %3009 = vmatprep.subr.mxu0 0.0
        %3010 = vmatpush2.msra.mxu0 0.0
        %3011 = vmatprep.subr.mxu0 0.0
        %3012 = vmatpush2.msra.mxu0 0.0
        %3013 = vmatprep.subr.mxu0 0.0
        %3014 = vmatpush2.msra.mxu0 0.0
        %3015 = vmatprep.subr.mxu0 0.0
        %3016 = vmatpush2.msra.mxu0 0.0
        %3017 = vmatprep.subr.mxu0 0.0
        %3018 = vmatpush2.msra.mxu0 0.0
        %3019 = vmatprep.subr.mxu0 0.0
        %3020 = vmatpush2.msra.mxu0 0.0
        %3021 = vmatprep.subr.mxu0 0.0
        %3022 = vmatpush2.msra.mxu0 0.0
        %3023 = vmatprep.subr.mxu0 0.0
        %3024 = vmatpush2.msra.mxu0 0.0
        %3025 = vmatprep.subr.mxu0 0.0
        %3026 = vmatpush2.msra.mxu0 0.0
        %3027 = vmatprep.mubr.f32.mxu0 0.0
        %3028 = vmatmul.mubr.f32.gmra.mxu0 %v2939
        %v3029 = vpop.f32.mrf.mxu0
        %v3030 = vadd.f32 %v2961, %v3029
        %v3031 = vpop.f32.mrf.mxu0
        %3032 = vdwg.mxu0
        %v3033 = vmax.f32 %v3030, 0.0
        %v3034 = vld [vmem:[#allocation17] sm:$0xff]
        %v3035 = vld [vmem:[#allocation17 + $0x8] sm:$0xff]
        %v3036 = vld [vmem:[#allocation17 + $0x10] sm:$0xff]
        %v3037 = vld [vmem:[#allocation17 + $0x18] sm:$0xff]
        %v3038 = vld [vmem:[#allocation17 + $0x20] sm:$0xff]
        %v3039 = vld [vmem:[#allocation17 + $0x28] sm:$0xff]
        %v3040 = vld [vmem:[#allocation17 + $0x30] sm:$0xff]
        %v3041 = vld [vmem:[#allocation17 + $0x38] sm:$0xff]
        %v3042 = vld [vmem:[#allocation17 + $0x40] sm:$0xff]
        %v3043 = vld [vmem:[#allocation17 + $0x48] sm:$0xff]
        %v3044 = vld [vmem:[#allocation17 + $0x50] sm:$0xff]
        %v3045 = vld [vmem:[#allocation17 + $0x58] sm:$0xff]
        %v3046 = vld [vmem:[#allocation17 + $0x60] sm:$0xff]
        %v3047 = vld [vmem:[#allocation17 + $0x68] sm:$0xff]
        %v3048 = vld [vmem:[#allocation17 + $0x70] sm:$0xff]
        %v3049 = vld [vmem:[#allocation17 + $0x78] sm:$0xff]
        %v3050 = vld [vmem:[%s53] sm:$0x1]
        %v3052 = vlaneseq
        %v3053 = vshrl.u32 %v3052, 7
        %v3054 = vsub.s32 0, %v3053
        %v3055 = vrot.slane %v3050, %v3054
        %3057 = vmatprep.subr.mxu0 0.0
        %3058 = vmatpush1.msra.mxu0 %v3049
        %3059 = vmatprep.subr.mxu0 0.0
        %3060 = vmatpush1.msra.mxu0 %v3048
        %3061 = vmatprep.subr.mxu0 0.0
        %3062 = vmatpush1.msra.mxu0 %v3047
        %3063 = vmatprep.subr.mxu0 0.0
        %3064 = vmatpush1.msra.mxu0 %v3046
        %3065 = vmatprep.subr.mxu0 0.0
        %3066 = vmatpush1.msra.mxu0 %v3045
        %3067 = vmatprep.subr.mxu0 0.0
        %3068 = vmatpush1.msra.mxu0 %v3044
        %3069 = vmatprep.subr.mxu0 0.0
        %3070 = vmatpush1.msra.mxu0 %v3043
        %3071 = vmatprep.subr.mxu0 0.0
        %3072 = vmatpush1.msra.mxu0 %v3042
        %3073 = vmatprep.subr.mxu0 0.0
        %3074 = vmatpush1.msra.mxu0 %v3041
        %3075 = vmatprep.subr.mxu0 0.0
        %3076 = vmatpush1.msra.mxu0 %v3040
        %3077 = vmatprep.subr.mxu0 0.0
        %3078 = vmatpush1.msra.mxu0 %v3039
        %3079 = vmatprep.subr.mxu0 0.0
        %3080 = vmatpush1.msra.mxu0 %v3038
        %3081 = vmatprep.subr.mxu0 0.0
        %3082 = vmatpush1.msra.mxu0 %v3037
        %3083 = vmatprep.subr.mxu0 0.0
        %3084 = vmatpush1.msra.mxu0 %v3036
        %3085 = vmatprep.subr.mxu0 0.0
        %3086 = vmatpush1.msra.mxu0 %v3035
        %3087 = vmatprep.subr.mxu0 0.0
        %3088 = vmatpush1.msra.mxu0 %v3034
        %3089 = vmatprep.subr.mxu0 0.0
        %3090 = vmatpush2.msra.mxu0 0.0
        %3091 = vmatprep.subr.mxu0 0.0
        %3092 = vmatpush2.msra.mxu0 0.0
        %3093 = vmatprep.subr.mxu0 0.0
        %3094 = vmatpush2.msra.mxu0 0.0
        %3095 = vmatprep.subr.mxu0 0.0
        %3096 = vmatpush2.msra.mxu0 0.0
        %3097 = vmatprep.subr.mxu0 0.0
        %3098 = vmatpush2.msra.mxu0 0.0
        %3099 = vmatprep.subr.mxu0 0.0
        %3100 = vmatpush2.msra.mxu0 0.0
        %3101 = vmatprep.subr.mxu0 0.0
        %3102 = vmatpush2.msra.mxu0 0.0
        %3103 = vmatprep.subr.mxu0 0.0
        %3104 = vmatpush2.msra.mxu0 0.0
        %3105 = vmatprep.subr.mxu0 0.0
        %3106 = vmatpush2.msra.mxu0 0.0
        %3107 = vmatprep.subr.mxu0 0.0
        %3108 = vmatpush2.msra.mxu0 0.0
        %3109 = vmatprep.subr.mxu0 0.0
        %3110 = vmatpush2.msra.mxu0 0.0
        %3111 = vmatprep.subr.mxu0 0.0
        %3112 = vmatpush2.msra.mxu0 0.0
        %3113 = vmatprep.subr.mxu0 0.0
        %3114 = vmatpush2.msra.mxu0 0.0
        %3115 = vmatprep.subr.mxu0 0.0
        %3116 = vmatpush2.msra.mxu0 0.0
        %3117 = vmatprep.subr.mxu0 0.0
        %3118 = vmatpush2.msra.mxu0 0.0
        %3119 = vmatprep.subr.mxu0 0.0
        %3120 = vmatpush2.msra.mxu0 0.0
        %3121 = vmatprep.mubr.f32.mxu0 0.0
        %3122 = vmatmul.mubr.f32.gmra.mxu0 %v3033
        %v3123 = vpop.f32.mrf.mxu0
        %v3124 = vadd.f32 %v3055, %v3123
        %v3125 = vpop.f32.mrf.mxu0
        %3126 = vdwg.mxu0
        %v3127 = vadd.f32 %v2939, %v3124
        %v3128 = vlaneseq
        %v3129 = vshrl.u32 %v3128, 7
        %v3130 = vsub.s32 0, %v3129
        %v3131 = vrot.slane %v3127, %v3130
        %v3132 = vlaneseq
        %v3133 = vshrl.u32 %v3132, 7
        %v3134 = vsub.s32 7, %v3133
        %v3135 = vrot.slane %v3127, %v3134
        %v3136 = vrot.slane %v3127, 7
        %v3137 = vrot.slane %v3127, 1
        %v3138 = vsel %vm1668, %v3131, %v3136
        %v3139 = vadd.f32 %v3127, %v3138
        %v3140 = vsel %vm1671, %v3135, %v3137
        %v3141 = vadd.f32 %v3139, %v3140
        %v3142 = vmul.f32 %v3141, 0.33333334
        %v3143 = vsub.f32 %v3127, %v3142
        %v3144 = vadd.f32 %v2465, %v2938
        %v3145 = vadd.f32 %v3144, %v3142
        %v3146 = vld [vmem:[%s55] sm:$0xff]
        %v3147 = vld [vmem:[%s55 + $0x8] sm:$0xff]
        %v3148 = vld [vmem:[%s55 + $0x10] sm:$0xff]
        %v3149 = vld [vmem:[%s55 + $0x18] sm:$0xff]
        %v3150 = vld [vmem:[%s55 + $0x20] sm:$0xff]
        %v3151 = vld [vmem:[%s55 + $0x28] sm:$0xff]
        %v3152 = vld [vmem:[%s55 + $0x30] sm:$0xff]
        %v3153 = vld [vmem:[%s55 + $0x38] sm:$0xff]
        %v3154 = vld [vmem:[%s55 + $0x40] sm:$0xff]
        %v3155 = vld [vmem:[%s55 + $0x48] sm:$0xff]
        %v3156 = vld [vmem:[%s55 + $0x50] sm:$0xff]
        %v3157 = vld [vmem:[%s55 + $0x58] sm:$0xff]
        %v3158 = vld [vmem:[%s55 + $0x60] sm:$0xff]
        %v3159 = vld [vmem:[%s55 + $0x68] sm:$0xff]
        %v3160 = vld [vmem:[%s55 + $0x70] sm:$0xff]
        %v3161 = vld [vmem:[%s55 + $0x78] sm:$0xff]
        %v3162 = vld [vmem:[%s57] sm:$0x1]
        %v3164 = vlaneseq
        %v3165 = vshrl.u32 %v3164, 7
        %v3166 = vsub.s32 0, %v3165
        %v3167 = vrot.slane %v3162, %v3166
        %3169 = vmatprep.subr.mxu0 0.0
        %3170 = vmatpush1.msra.mxu0 %v3161
        %3171 = vmatprep.subr.mxu0 0.0
        %3172 = vmatpush1.msra.mxu0 %v3160
        %3173 = vmatprep.subr.mxu0 0.0
        %3174 = vmatpush1.msra.mxu0 %v3159
        %3175 = vmatprep.subr.mxu0 0.0
        %3176 = vmatpush1.msra.mxu0 %v3158
        %3177 = vmatprep.subr.mxu0 0.0
        %3178 = vmatpush1.msra.mxu0 %v3157
        %3179 = vmatprep.subr.mxu0 0.0
        %3180 = vmatpush1.msra.mxu0 %v3156
        %3181 = vmatprep.subr.mxu0 0.0
        %3182 = vmatpush1.msra.mxu0 %v3155
        %3183 = vmatprep.subr.mxu0 0.0
        %3184 = vmatpush1.msra.mxu0 %v3154
        %3185 = vmatprep.subr.mxu0 0.0
        %3186 = vmatpush1.msra.mxu0 %v3153
        %3187 = vmatprep.subr.mxu0 0.0
        %3188 = vmatpush1.msra.mxu0 %v3152
        %3189 = vmatprep.subr.mxu0 0.0
        %3190 = vmatpush1.msra.mxu0 %v3151
        %3191 = vmatprep.subr.mxu0 0.0
        %3192 = vmatpush1.msra.mxu0 %v3150
        %3193 = vmatprep.subr.mxu0 0.0
        %3194 = vmatpush1.msra.mxu0 %v3149
        %3195 = vmatprep.subr.mxu0 0.0
        %3196 = vmatpush1.msra.mxu0 %v3148
        %3197 = vmatprep.subr.mxu0 0.0
        %3198 = vmatpush1.msra.mxu0 %v3147
        %3199 = vmatprep.subr.mxu0 0.0
        %3200 = vmatpush1.msra.mxu0 %v3146
        %3201 = vmatprep.subr.mxu0 0.0
        %3202 = vmatpush2.msra.mxu0 0.0
        %3203 = vmatprep.subr.mxu0 0.0
        %3204 = vmatpush2.msra.mxu0 0.0
        %3205 = vmatprep.subr.mxu0 0.0
        %3206 = vmatpush2.msra.mxu0 0.0
        %3207 = vmatprep.subr.mxu0 0.0
        %3208 = vmatpush2.msra.mxu0 0.0
        %3209 = vmatprep.subr.mxu0 0.0
        %3210 = vmatpush2.msra.mxu0 0.0
        %3211 = vmatprep.subr.mxu0 0.0
        %3212 = vmatpush2.msra.mxu0 0.0
        %3213 = vmatprep.subr.mxu0 0.0
        %3214 = vmatpush2.msra.mxu0 0.0
        %3215 = vmatprep.subr.mxu0 0.0
        %3216 = vmatpush2.msra.mxu0 0.0
        %3217 = vmatprep.subr.mxu0 0.0
        %3218 = vmatpush2.msra.mxu0 0.0
        %3219 = vmatprep.subr.mxu0 0.0
        %3220 = vmatpush2.msra.mxu0 0.0
        %3221 = vmatprep.subr.mxu0 0.0
        %3222 = vmatpush2.msra.mxu0 0.0
        %3223 = vmatprep.subr.mxu0 0.0
        %3224 = vmatpush2.msra.mxu0 0.0
        %3225 = vmatprep.subr.mxu0 0.0
        %3226 = vmatpush2.msra.mxu0 0.0
        %3227 = vmatprep.subr.mxu0 0.0
        %3228 = vmatpush2.msra.mxu0 0.0
        %3229 = vmatprep.subr.mxu0 0.0
        %3230 = vmatpush2.msra.mxu0 0.0
        %3231 = vmatprep.subr.mxu0 0.0
        %3232 = vmatpush2.msra.mxu0 0.0
        %3233 = vmatprep.mubr.f32.mxu0 0.0
        %3234 = vmatmul.mubr.f32.gmra.mxu0 %v3145
        %v3235 = vpop.f32.mrf.mxu0
        %v3236 = vadd.f32 %v3167, %v3235
        %v3237 = vpop.f32.mrf.mxu0
        %3238 = vdwg.mxu0
        %v3239 = vadd.f32 %v1911, %v3236
        %v3240 = vld [vmem:[%s59] sm:$0xff]
        %v3241 = vld [vmem:[%s59 + $0x8] sm:$0xff]
        %v3242 = vld [vmem:[%s59 + $0x10] sm:$0xff]
        %v3243 = vld [vmem:[%s59 + $0x18] sm:$0xff]
        %v3244 = vld [vmem:[%s59 + $0x20] sm:$0xff]
        %v3245 = vld [vmem:[%s59 + $0x28] sm:$0xff]
        %v3246 = vld [vmem:[%s59 + $0x30] sm:$0xff]
        %v3247 = vld [vmem:[%s59 + $0x38] sm:$0xff]
        %v3248 = vld [vmem:[%s59 + $0x40] sm:$0xff]
        %v3249 = vld [vmem:[%s59 + $0x48] sm:$0xff]
        %v3250 = vld [vmem:[%s59 + $0x50] sm:$0xff]
        %v3251 = vld [vmem:[%s59 + $0x58] sm:$0xff]
        %v3252 = vld [vmem:[%s59 + $0x60] sm:$0xff]
        %v3253 = vld [vmem:[%s59 + $0x68] sm:$0xff]
        %v3254 = vld [vmem:[%s59 + $0x70] sm:$0xff]
        %v3255 = vld [vmem:[%s59 + $0x78] sm:$0xff]
        %v3256 = vld [vmem:[%s61] sm:$0x1]
        %v3258 = vlaneseq
        %v3259 = vshrl.u32 %v3258, 7
        %v3260 = vsub.s32 0, %v3259
        %v3261 = vrot.slane %v3256, %v3260
        %3263 = vmatprep.subr.mxu0 0.0
        %3264 = vmatpush1.msra.mxu0 %v3255
        %3265 = vmatprep.subr.mxu0 0.0
        %3266 = vmatpush1.msra.mxu0 %v3254
        %3267 = vmatprep.subr.mxu0 0.0
        %3268 = vmatpush1.msra.mxu0 %v3253
        %3269 = vmatprep.subr.mxu0 0.0
        %3270 = vmatpush1.msra.mxu0 %v3252
        %3271 = vmatprep.subr.mxu0 0.0
        %3272 = vmatpush1.msra.mxu0 %v3251
        %3273 = vmatprep.subr.mxu0 0.0
        %3274 = vmatpush1.msra.mxu0 %v3250
        %3275 = vmatprep.subr.mxu0 0.0
        %3276 = vmatpush1.msra.mxu0 %v3249
        %3277 = vmatprep.subr.mxu0 0.0
        %3278 = vmatpush1.msra.mxu0 %v3248
        %3279 = vmatprep.subr.mxu0 0.0
        %3280 = vmatpush1.msra.mxu0 %v3247
        %3281 = vmatprep.subr.mxu0 0.0
        %3282 = vmatpush1.msra.mxu0 %v3246
        %3283 = vmatprep.subr.mxu0 0.0
        %3284 = vmatpush1.msra.mxu0 %v3245
        %3285 = vmatprep.subr.mxu0 0.0
        %3286 = vmatpush1.msra.mxu0 %v3244
        %3287 = vmatprep.subr.mxu0 0.0
        %3288 = vmatpush1.msra.mxu0 %v3243
        %3289 = vmatprep.subr.mxu0 0.0
        %3290 = vmatpush1.msra.mxu0 %v3242
        %3291 = vmatprep.subr.mxu0 0.0
        %3292 = vmatpush1.msra.mxu0 %v3241
        %3293 = vmatprep.subr.mxu0 0.0
        %3294 = vmatpush1.msra.mxu0 %v3240
        %3295 = vmatprep.subr.mxu0 0.0
        %3296 = vmatpush2.msra.mxu0 0.0
        %3297 = vmatprep.subr.mxu0 0.0
        %3298 = vmatpush2.msra.mxu0 0.0
        %3299 = vmatprep.subr.mxu0 0.0
        %3300 = vmatpush2.msra.mxu0 0.0
        %3301 = vmatprep.subr.mxu0 0.0
        %3302 = vmatpush2.msra.mxu0 0.0
        %3303 = vmatprep.subr.mxu0 0.0
        %3304 = vmatpush2.msra.mxu0 0.0
        %3305 = vmatprep.subr.mxu0 0.0
        %3306 = vmatpush2.msra.mxu0 0.0
        %3307 = vmatprep.subr.mxu0 0.0
        %3308 = vmatpush2.msra.mxu0 0.0
        %3309 = vmatprep.subr.mxu0 0.0
        %3310 = vmatpush2.msra.mxu0 0.0
        %3311 = vmatprep.subr.mxu0 0.0
        %3312 = vmatpush2.msra.mxu0 0.0
        %3313 = vmatprep.subr.mxu0 0.0
        %3314 = vmatpush2.msra.mxu0 0.0
        %3315 = vmatprep.subr.mxu0 0.0
        %3316 = vmatpush2.msra.mxu0 0.0
        %3317 = vmatprep.subr.mxu0 0.0
        %3318 = vmatpush2.msra.mxu0 0.0
        %3319 = vmatprep.subr.mxu0 0.0
        %3320 = vmatpush2.msra.mxu0 0.0
        %3321 = vmatprep.subr.mxu0 0.0
        %3322 = vmatpush2.msra.mxu0 0.0
        %3323 = vmatprep.subr.mxu0 0.0
        %3324 = vmatpush2.msra.mxu0 0.0
        %3325 = vmatprep.subr.mxu0 0.0
        %3326 = vmatpush2.msra.mxu0 0.0
        %3327 = vmatprep.mubr.f32.mxu0 0.0
        %3328 = vmatmul.mubr.f32.gmra.mxu0 %v3143
        %v3329 = vpop.f32.mrf.mxu0
        %v3330 = vadd.f32 %v3261, %v3329
        %v3331 = vpop.f32.mrf.mxu0
        %3332 = vdwg.mxu0
        %v3333 = vadd.f32 %v3330, %v3239
        %v3334 = vmul.f32 %v3333, %v1112
        %vm3335 = vcmask 31748
        %3336 = vst.msk [vmem:[%s1095 - $0x4] sm:$0xf0] %vm3335, %v3334
        %s3337 = sand.u32 %s747, 1
        %s3338 = scalar_lea.sflag [#allocation4], %s3337
        %s3339 = sand.u32 %s747, 1
        %s3340 = smul.addr %s3339, 4
        %s3341 = scalar_lea.vmem [#allocation19], %s3340
        // Predicated region
        $region185: #{autoformer_forward.1} parent=143 // pred_check
          %p3342 = pneg %p757
        $region186: #{autoformer_forward.1} parent=143 // pred_check_branch
          %3344 = sbr.rel (%p3342) target = $region188
        $region187: #{autoformer_forward.1} parent=143 // pred_region
          %s3346 = ssub.s32 64, 64
          %3347 = vsyncadd %s3338, %s3346
          %s3348 = smul.addr %s83, 64
          %s3349 = scalar_lea.hbm %s63, %s3348
          %s3351 = sshll.u32 %s3341, 4
          %s3352 = int_to_ptr.vmem [resolvable:$true] %s3351
          %3354 = dma.vmem_to_hbm [thread:$0]  %s3352, 64, %s3349, %s3338
        $region188: #{autoformer_forward.1} parent=143 // pred_fallthru
          _
      $region144: #{autoformer_forward.1} parent=5 // pred_fallthru
        _
      %p3355 = scmp.le.s32.totalorder 2, %s78
      // Predicated region
      $region189: #{autoformer_forward.1} parent=5 // pred_check
        %p3356 = pneg %p3355
      $region190: #{autoformer_forward.1} parent=5 // pred_check_branch
        %3358 = sbr.rel (%p3356) target = $region192
      $region191: #{autoformer_forward.1} parent=5 // pred_region
        %s3359 = ssub.s32 %s78, 2
        // Predicated region
        $region193: #{autoformer_forward.1} parent=191 // pred_check
          %p3360 = pneg %p763
        $region194: #{autoformer_forward.1} parent=191 // pred_check_branch
          %3362 = sbr.rel (%p3360) target = $region196
        $region195: #{autoformer_forward.1} parent=191 // pred_region
          %s3363 = sand.u32 %s748, 1
          %s3364 = scalar_lea.sflag [#allocation4], %s3363
          %s3365 = sand.u32 %s748, 1
          %s3366 = smul.addr %s3365, 4
          %s3367 = scalar_lea.vmem [#allocation19], %s3366
          %3368 = dma.done %s3364, 64
        $region196: #{autoformer_forward.1} parent=191 // pred_fallthru
          _
      $region192: #{autoformer_forward.1} parent=5 // pred_fallthru
        _
    $region6: #{autoformer_forward.1} parent=1 // loop_footer
      %s82 = sadd.s32 1, %s78
    $region7: #{autoformer_forward.1} parent=1 // loop_footer_branch
      %77 = sbr.rel target = $region3
    $region8: #{autoformer_forward.1} parent=1 // loop_exit
      _
    %3369 = vsyncpa [#allocation3], 1
    %s3370 = scalar_lea.sflag [#allocation3], 1
    %3371 = vsyncpa %s3370, 1
    %3372 = vsyncpa [#allocation6], 1
    %3373 = vsyncpa [#allocation9], 1
    %3374 = vsyncpa [#allocation12], 1
    %3375 = vsyncpa [#allocation15], 1
    %3376 = vsyncpa [#allocation18], 1
    %3377 = vsyncpa [#allocation4], 1
    %s3378 = scalar_lea.sflag [#allocation4], 1
    %3379 = vsyncpa %s3378, 1

</llo_original>
